<compile_context>
chip_gen: v5e
topology: v5e:2x2
jax: 0.10.0
libtpu: 0.0.40
codegen_flags: <defaults>
</compile_context>

<pallas_src>
import numpy as np
import jax
import jax.numpy as jnp
from jax.experimental import pallas as pl
from jax.experimental.pallas import tpu as pltpu

_BN_EPS = 1e-5


def _bilinear_matrix(in_size: int, scale: int) -> np.ndarray:
    """F.interpolate(mode='bilinear', align_corners=False, scale_factor=scale) as a matrix."""
    out_size = in_size * scale
    o = np.arange(out_size)
    src = (o + 0.5) / float(scale) - 0.5
    src = np.maximum(src, 0.0)                        # PyTorch clamps negative src to 0
    i0 = np.minimum(np.floor(src).astype(np.int64), in_size - 1)
    i1 = np.minimum(i0 + 1, in_size - 1)
    w1 = (src - i0).astype(np.float32)
    w0 = (1.0 - w1).astype(np.float32)
    A = np.zeros((out_size, in_size), np.float32)
    A[o, i0] += w0
    A[o, i1] += w1
    return A


def _bilinear_taps(in_size: int, scale: int):
    """Same interpolation as _bilinear_matrix, as static 2-tap (index, weight) lists."""
    out_size = in_size * scale
    o = np.arange(out_size)
    src = np.maximum((o + 0.5) / float(scale) - 0.5, 0.0)
    i0 = np.minimum(np.floor(src).astype(np.int64), in_size - 1)
    i1 = np.minimum(i0 + 1, in_size - 1)
    w1 = (src - i0).astype(np.float32)
    w0 = (np.float32(1.0) - w1).astype(np.float32)
    return ([int(v) for v in i0], [int(v) for v in i1],
            [float(v) for v in w0], [float(v) for v in w1])


def _pick_batch_block(n: int, per_elem_bytes: int, budget_bytes: int = 2 << 20) -> int:
    """Largest divisor of n whose per-step byte footprint stays under the budget."""
    nb = 1
    for d in range(1, n + 1):
        if n % d == 0 and d * per_elem_bytes <= budget_bytes:
            nb = d
    return nb


def c_rb_forward(x, y_pre, y, delta, weight_x, weight_y_pre, weight_y, scale,
                 conv_w, conv_b, bn_gamma, bn_beta):
    # x: (N, Cin, H, W); y_pre, y: (N, Cout, Hup, Wup)  -- NCHW, exactly like PyTorch.
    N, Cin, H, W = x.shape
    Cout, _, KH, KW = conv_w.shape
    Hc, Wc = H - KH + 1, W - KW + 1                   # conv output (stride 1, pad 0)
    Hup, Wup = Hc * scale, Wc * scale
    HW, HWup, KK = H * W, Hup * Wup, KH * KW
    f32 = jnp.float32
    assert y.shape == (N, Cout, Hup, Wup) and y_pre.shape == y.shape

    delta = jnp.asarray(delta, f32)
    weight_x = jnp.asarray(weight_x, f32)
    weight_y_pre = jnp.asarray(weight_y_pre, f32)
    weight_y = jnp.asarray(weight_y, f32)
    two_delta = 2.0 * delta

    # ---- tiny wrapper-side constants ----------------------------------------------
    # weight_x folded into the conv weight (conv is linear in x); the nine 3x3 taps are
    # stacked as (KH*KW*Cout, Cin) so the kernel does ONE matmul against raw flat x.
    wall = (weight_x * conv_w.astype(f32)).transpose(2, 3, 0, 1).reshape(KK * Cout, Cin)
    bias = conv_b.reshape(Cout, 1).astype(f32)
    awt = jnp.asarray(np.ascontiguousarray(_bilinear_matrix(Wc, scale).T))   # (Wc, Wup)
    h_i0, h_i1, h_w0, h_w1 = _bilinear_taps(Hc, scale)                       # static

    # free row-major views: every big stream is handled lane-dense (.., Cout, HWup)
    x2 = x.reshape(N, Cin, HW).astype(f32)
    y2 = y.reshape(N, Cout, HWup).astype(f32)
    yp2 = y_pre.reshape(N, Cout, HWup).astype(f32)

    # ---- batch blocking: several batch elements per grid step ----------------------
    per_elem = 4 * max(Cin * HW + 2 * Cout * HWup, 4 * Cout * HWup)
    nb = _pick_batch_block(N, per_elem)
    nblk = N // nb

    cparams = pltpu.CompilerParams(
        dimension_semantics=("parallel",),            # batch grid axis -> megacore on v7x
        vmem_limit_bytes=32 * 1024 * 1024,
    )
    smem_spec = pl.BlockSpec(memory_space=pltpu.MemorySpace.SMEM)

    # ---- pass A: fused conv + separable upsample + ReLU + BN partial stats ---------
    def fused_kernel(wy_ref, x_ref, y_ref, wall_ref, bias_ref, awt_ref,
                     r_ref, s1_ref, s2_ref, hall_s, t_s, upf_s):
        wy = wy_ref[0, 0]
        wall_v = wall_ref[...]                        # (KK*Cout, Cin)
        bias_v = bias_ref[...]                        # (Cout, 1)
        awt_v = awt_ref[...]                          # (Wc, Wup)
        s1 = jnp.zeros((Cout, 1), f32)
        s2 = jnp.zeros((Cout, 1), f32)
        for b in range(nb):                           # static unroll over batch block
            # conv: all nine taps over the full frame in ONE MXU matmul (g stays on chip)
            hall_s[...] = jnp.dot(wall_v, x_ref[b], preferred_element_type=f32)
            # gather the Hc valid conv rows via static lane-offset slices of the scratch
            grows = []
            for i in range(Hc):
                row = None
                for kh in range(KH):
                    for kw in range(KW):
                        kk = kh * KW + kw
                        off = (i + kh) * W + kw
                        piece = hall_s[kk * Cout:(kk + 1) * Cout, off:off + Wc]
                        row = piece if row is None else row + piece
                grows.append(row + bias_v)            # (Cout, Wc)
            # height upsample: static 2-tap bilinear (pure VPU scaled adds)
            for u in range(Hup):
                t_u = h_w0[u] * grows[h_i0[u]] + h_w1[u] * grows[h_i1[u]]
                t_s[u * Cout:(u + 1) * Cout, :] = t_u
            # width upsample: one MXU matmul for all output rows of this element
            t_all = jnp.dot(t_s[...], awt_v, preferred_element_type=f32)  # (Hup*Cout, Wup)
            # assemble the lane-dense flat upsample (Cout, Hup*Wup) in VMEM
            for u in range(Hup):
                upf_s[:, u * Wup:(u + 1) * Wup] = t_all[u * Cout:(u + 1) * Cout, :]
            # lane-dense elementwise: z = wy*y + up ; r = ReLU(z) ; BN partials
            r_b = jnp.maximum(wy * y_ref[b] + upf_s[...], 0.0)            # (Cout, HWup)
            r_ref[b] = r_b
            s1 = s1 + jnp.sum(r_b, axis=-1, keepdims=True)
            s2 = s2 + jnp.sum(r_b * r_b, axis=-1, keepdims=True)
        s1_ref[0] = s1
        s2_ref[0] = s2

    # TODO(synk): for very large channel counts the unrolled row-gather loop should be
    # replaced by a VMEM im2col + single (Cout, Cin*KH*KW) matmul per element.
    r, psum, psumsq = pl.pallas_call(
        fused_kernel,
        grid=(nblk,),
        in_specs=[
            smem_spec,                                              # weight_y scalar
            pl.BlockSpec((nb, Cin, HW), lambda n: (n, 0, 0)),       # raw flat x
            pl.BlockSpec((nb, Cout, HWup), lambda n: (n, 0, 0)),    # flat y
            pl.BlockSpec((KK * Cout, Cin), lambda n: (0, 0)),       # stacked conv taps
            pl.BlockSpec((Cout, 1), lambda n: (0, 0)),              # conv bias
            pl.BlockSpec((Wc, Wup), lambda n: (0, 0)),              # width bilinear
        ],
        out_specs=(
            pl.BlockSpec((nb, Cout, HWup), lambda n: (n, 0, 0)),    # r (lane-dense)
            pl.BlockSpec((1, Cout, 1), lambda n: (n, 0, 0)),        # per-block sum
            pl.BlockSpec((1, Cout, 1), lambda n: (n, 0, 0)),        # per-block sum sq
        ),
        out_shape=(
            jax.ShapeDtypeStruct((N, Cout, HWup), f32),
            jax.ShapeDtypeStruct((nblk, Cout, 1), f32),
            jax.ShapeDtypeStruct((nblk, Cout, 1), f32),
        ),
        scratch_shapes=[
            pltpu.VMEM((KK * Cout, HW), f32),     # full-frame tap products
            pltpu.VMEM((Hup * Cout, Wc), f32),    # height-upsampled rows
            pltpu.VMEM((Cout, HWup), f32),        # flat upsample
        ],
        compiler_params=cparams,
        cost_estimate=pl.CostEstimate(
            flops=N * (2 * KK * Cout * Cin * HW + 2 * Hup * Cout * Wc * Wup
                       + (KK + 4) * Cout * Hc * Wc + 5 * Cout * HWup),
            transcendentals=0,
            bytes_accessed=4 * (N * (Cin * HW + 2 * Cout * HWup + 2 * Cout)
                                + KK * Cout * Cin + Cout + Wc * Wup)),
    )(weight_y.reshape(1, 1), x2, y2, wall, bias, awt)

    # ---- global BN statistics: tiny (nblk, Cout) reduction = wrapper glue ----------
    cnt = jnp.float32(N * HWup)                       # exact divisor (no padded rows)
    s1 = jnp.sum(psum, axis=(0, 2))                   # (Cout,)
    s2 = jnp.sum(psumsq, axis=(0, 2))                 # (Cout,)
    mean = s1 / cnt
    var = jnp.maximum(s2 / cnt - mean * mean, 0.0)    # biased var (PyTorch training BN)
    invstd = jax.lax.rsqrt(var + _BN_EPS)
    bn_scale = bn_gamma.astype(f32) * invstd
    bn_shift = bn_beta.astype(f32) - mean * bn_scale
    sc = (two_delta * bn_scale).reshape(Cout, 1)      # 2*delta*gamma/sqrt(var+eps)
    sh = (two_delta * bn_shift).reshape(Cout, 1)      # 2*delta*(beta - mean*gamma/std)
    combine_params = jnp.stack([weight_y_pre, two_delta * weight_y]).reshape(1, 2)

    # ---- pass B: BatchNorm normalize + final combine on lane-dense rows ------------
    def bn_combine_kernel(p_ref, r_ref, y_ref, yp_ref, sc_ref, sh_ref, o_ref):
        wyp = p_ref[0, 0]
        tdw = p_ref[0, 1]
        sc_v = sc_ref[...]
        sh_v = sh_ref[...]
        for b in range(nb):
            o_ref[b] = (wyp * yp_ref[b] + tdw * y_ref[b]
                        + r_ref[b] * sc_v + sh_v)     # 2*delta*BN(r) folded into sc/sh

    out2 = pl.pallas_call(
        bn_combine_kernel,
        grid=(nblk,),
        in_specs=[
            smem_spec,                                              # [wyp, 2*delta*wy]
            pl.BlockSpec((nb, Cout, HWup), lambda n: (n, 0, 0)),
            pl.BlockSpec((nb, Cout, HWup), lambda n: (n, 0, 0)),
            pl.BlockSpec((nb, Cout, HWup), lambda n: (n, 0, 0)),
            pl.BlockSpec((Cout, 1), lambda n: (0, 0)),
            pl.BlockSpec((Cout, 1), lambda n: (0, 0)),
        ],
        out_specs=pl.BlockSpec((nb, Cout, HWup), lambda n: (n, 0, 0)),
        out_shape=jax.ShapeDtypeStruct((N, Cout, HWup), f32),
        compiler_params=cparams,
        cost_estimate=pl.CostEstimate(
            flops=6 * N * Cout * HWup, transcendentals=0,
            bytes_accessed=4 * 4 * N * Cout * HWup),
    )(combine_params, r, y2, yp2, sc, sh)

    # TODO(synk): BatchNorm2d running_mean/running_var buffer updates (stateful module
    # bookkeeping) are not part of the returned tensor and are not reproduced here.
    return out2.reshape(N, Cout, Hup, Wup)


if __name__ == "__main__":
    key = jax.random.PRNGKey(0)
    N, Cin, Cout = 2, 4, 8
    H = W = 16
    KH = KW = 3
    scale = 2
    Hc, Wc = H - KH + 1, W - KW + 1
    Hup, Wup = Hc * scale, Wc * scale

    ks = jax.random.split(key, 5)
    x = jax.random.normal(ks[0], (N, Cin, H, W), jnp.float32)
    y = jax.random.normal(ks[1], (N, Cout, Hup, Wup), jnp.float32)
    y_pre = jax.random.normal(ks[2], (N, Cout, Hup, Wup), jnp.float32)

    # deterministic synthetic Conv2d parameters (PyTorch-style uniform fan-in bound)
    fan_in = Cin * KH * KW
    bound = 1.0 / np.sqrt(fan_in)
    conv_w = jax.random.uniform(ks[3], (Cout, Cin, KH, KW), jnp.float32, -bound, bound)
    conv_b = jax.random.uniform(ks[4], (Cout,), jnp.float32, -bound, bound)
    bn_gamma = jnp.ones((Cout,), jnp.float32)     # BatchNorm2d default init
    bn_beta = jnp.zeros((Cout,), jnp.float32)

    fwd = jax.jit(c_rb_forward, static_argnames=("scale",))
    out = fwd(x, y_pre, y,
              delta=0.1, weight_x=0.5, weight_y_pre=0.9, weight_y=1.1, scale=scale,
              conv_w=conv_w, conv_b=conv_b, bn_gamma=bn_gamma, bn_beta=bn_beta)
    jax.block_until_ready(out)
    assert out.shape == (N, Cout, Hup, Wup)

    # silent pure-JAX reference self-check (same math, layout-naive)
    def reference(x, y_pre, y, delta, wx, wyp, wy, cw, cb, gamma, beta):
        g = jax.lax.conv_general_dilated(wx * x, cw, (1, 1), 'VALID',
                                         dimension_numbers=('NCHW', 'OIHW', 'NCHW'))
        g = g + cb.reshape(1, Cout, 1, 1)
        ah = jnp.asarray(_bilinear_matrix(Hc, scale))
        aw = jnp.asarray(_bilinear_matrix(Wc, scale))
        up = jnp.einsum('uh,nchw,vw->ncuv', ah, g, aw)
        r = jnp.maximum(wy * y + up, 0.0)
        mean = jnp.mean(r, axis=(0, 2, 3), keepdims=True)
        var = jnp.mean((r - mean) ** 2, axis=(0, 2, 3), keepdims=True)
        s = (r - mean) * jax.lax.rsqrt(var + _BN_EPS)
        s = s * gamma.reshape(1, Cout, 1, 1) + beta.reshape(1, Cout, 1, 1)
        return wyp * y_pre + 2 * delta * wy * y + 2 * delta * s

    ref = reference(x, y_pre, y, 0.1, 0.5, 0.9, 1.1, conv_w, conv_b, bn_gamma, bn_beta)
    err = float(jnp.max(jnp.abs(out - ref)))
    assert err < 2e-4, err

    print("KERNEL_OK")
</pallas_src>

<mosaic_0001>
module attributes {stable_mosaic.version = 11 : i64} {
  func.func @bn_combine_kernel(%arg0: i32, %arg1: memref<1x2xf32, #tpu.memory_space<smem>>, %arg2: memref<2x8x784xf32, #tpu.memory_space<vmem>>, %arg3: memref<2x8x784xf32, #tpu.memory_space<vmem>>, %arg4: memref<2x8x784xf32, #tpu.memory_space<vmem>>, %arg5: memref<8x1xf32, #tpu.memory_space<vmem>>, %arg6: memref<8x1xf32, #tpu.memory_space<vmem>>, %arg7: memref<2x8x784xf32, #tpu.memory_space<vmem>>) attributes {dimension_semantics = [#tpu.dimension_semantics<parallel>], iteration_bounds = array<i64: 1>, scalar_prefetch = 0 : i64, scratch_operands = 0 : i64, tpu.core_type = #tpu.core_type<tc>, window_params = [{transform_indices = @transform_0, window_bounds = array<i64: 1, 2>}, {transform_indices = @transform_1, window_bounds = array<i64: 2, 8, 784>}, {transform_indices = @transform_2, window_bounds = array<i64: 2, 8, 784>}, {transform_indices = @transform_3, window_bounds = array<i64: 2, 8, 784>}, {pipeline_mode = #tpu.pipeline_mode<synchronous>, transform_indices = @transform_4, window_bounds = array<i64: 8, 1>}, {pipeline_mode = #tpu.pipeline_mode<synchronous>, transform_indices = @transform_5, window_bounds = array<i64: 8, 1>}, {transform_indices = @transform_6, window_bounds = array<i64: 2, 8, 784>}]} {
    %c0 = arith.constant 0 : index
    %c0_0 = arith.constant 0 : index
    %0 = memref.load %arg1[%c0, %c0_0] : memref<1x2xf32, #tpu.memory_space<smem>>
    %c0_1 = arith.constant 0 : index
    %c1 = arith.constant 1 : index
    %1 = memref.load %arg1[%c0_1, %c1] : memref<1x2xf32, #tpu.memory_space<smem>>
    %c0_2 = arith.constant 0 : index
    %c0_3 = arith.constant 0 : index
    %2 = vector.load %arg5[%c0_2, %c0_3] : memref<8x1xf32, #tpu.memory_space<vmem>>, vector<8x1xf32>
    %c0_4 = arith.constant 0 : index
    %c0_5 = arith.constant 0 : index
    %3 = vector.load %arg6[%c0_4, %c0_5] : memref<8x1xf32, #tpu.memory_space<vmem>>, vector<8x1xf32>
    %c0_6 = arith.constant 0 : index
    %c0_7 = arith.constant 0 : index
    %c0_8 = arith.constant 0 : index
    %4 = vector.load %arg4[%c0_6, %c0_7, %c0_8] : memref<2x8x784xf32, #tpu.memory_space<vmem>>, vector<1x8x784xf32>
    %5 = vector.shape_cast %4 : vector<1x8x784xf32> to vector<8x784xf32>
    %6 = vector.broadcast %0 : f32 to vector<8x784xf32>
    %7 = arith.mulf %6, %5 : vector<8x784xf32>
    %c0_9 = arith.constant 0 : index
    %c0_10 = arith.constant 0 : index
    %c0_11 = arith.constant 0 : index
    %8 = vector.load %arg3[%c0_9, %c0_10, %c0_11] : memref<2x8x784xf32, #tpu.memory_space<vmem>>, vector<1x8x784xf32>
    %9 = vector.shape_cast %8 : vector<1x8x784xf32> to vector<8x784xf32>
    %10 = vector.broadcast %1 : f32 to vector<8x784xf32>
    %11 = arith.mulf %10, %9 : vector<8x784xf32>
    %12 = arith.addf %7, %11 : vector<8x784xf32>
    %c0_12 = arith.constant 0 : index
    %c0_13 = arith.constant 0 : index
    %c0_14 = arith.constant 0 : index
    %13 = vector.load %arg2[%c0_12, %c0_13, %c0_14] : memref<2x8x784xf32, #tpu.memory_space<vmem>>, vector<1x8x784xf32>
    %14 = vector.shape_cast %13 : vector<1x8x784xf32> to vector<8x784xf32>
    %15 = vector.broadcast %2 : vector<8x1xf32> to vector<8x784xf32>
    %16 = arith.mulf %14, %15 : vector<8x784xf32>
    %17 = arith.addf %12, %16 : vector<8x784xf32>
    %18 = vector.broadcast %3 : vector<8x1xf32> to vector<8x784xf32>
    %19 = arith.addf %17, %18 : vector<8x784xf32>
    %c0_15 = arith.constant 0 : index
    %c0_16 = arith.constant 0 : index
    %c0_17 = arith.constant 0 : index
    %20 = vector.load %arg7[%c0_15, %c0_16, %c0_17] : memref<2x8x784xf32, #tpu.memory_space<vmem>>, vector<1x8x784xf32>
    %21 = vector.shape_cast %20 : vector<1x8x784xf32> to vector<8x784xf32>
    %22 = vector.shape_cast %19 : vector<8x784xf32> to vector<1x8x784xf32>
    tpu.vector_store %arg7[%c0_15, %c0_16, %c0_17], %22 {strides = array<i32>} : memref<2x8x784xf32, #tpu.memory_space<vmem>>, vector<1x8x784xf32>,
    %c1_18 = arith.constant 1 : index
    %c0_19 = arith.constant 0 : index
    %c0_20 = arith.constant 0 : index
    %23 = vector.load %arg4[%c1_18, %c0_19, %c0_20] : memref<2x8x784xf32, #tpu.memory_space<vmem>>, vector<1x8x784xf32>
    %24 = vector.shape_cast %23 : vector<1x8x784xf32> to vector<8x784xf32>
    %25 = vector.broadcast %0 : f32 to vector<8x784xf32>
    %26 = arith.mulf %25, %24 : vector<8x784xf32>
    %c1_21 = arith.constant 1 : index
    %c0_22 = arith.constant 0 : index
    %c0_23 = arith.constant 0 : index
    %27 = vector.load %arg3[%c1_21, %c0_22, %c0_23] : memref<2x8x784xf32, #tpu.memory_space<vmem>>, vector<1x8x784xf32>
    %28 = vector.shape_cast %27 : vector<1x8x784xf32> to vector<8x784xf32>
    %29 = vector.broadcast %1 : f32 to vector<8x784xf32>
    %30 = arith.mulf %29, %28 : vector<8x784xf32>
    %31 = arith.addf %26, %30 : vector<8x784xf32>
    %c1_24 = arith.constant 1 : index
    %c0_25 = arith.constant 0 : index
    %c0_26 = arith.constant 0 : index
    %32 = vector.load %arg2[%c1_24, %c0_25, %c0_26] : memref<2x8x784xf32, #tpu.memory_space<vmem>>, vector<1x8x784xf32>
    %33 = vector.shape_cast %32 : vector<1x8x784xf32> to vector<8x784xf32>
    %34 = vector.broadcast %2 : vector<8x1xf32> to vector<8x784xf32>
    %35 = arith.mulf %33, %34 : vector<8x784xf32>
    %36 = arith.addf %31, %35 : vector<8x784xf32>
    %37 = vector.broadcast %3 : vector<8x1xf32> to vector<8x784xf32>
    %38 = arith.addf %36, %37 : vector<8x784xf32>
    %c1_27 = arith.constant 1 : index
    %c0_28 = arith.constant 0 : index
    %c0_29 = arith.constant 0 : index
    %39 = vector.load %arg7[%c1_27, %c0_28, %c0_29] : memref<2x8x784xf32, #tpu.memory_space<vmem>>, vector<1x8x784xf32>
    %40 = vector.shape_cast %39 : vector<1x8x784xf32> to vector<8x784xf32>
    %41 = vector.shape_cast %38 : vector<8x784xf32> to vector<1x8x784xf32>
    tpu.vector_store %arg7[%c1_27, %c0_28, %c0_29], %41 {strides = array<i32>} : memref<2x8x784xf32, #tpu.memory_space<vmem>>, vector<1x8x784xf32>,
    return
  }
  func.func @transform_0(%arg0: i32) -> (i32, i32) {
    %c0_i32 = arith.constant 0 : i32
    %c0_i32_0 = arith.constant 0 : i32
    %c0_i32_1 = arith.constant 0 : i32
    return %c0_i32, %c0_i32_0 : i32, i32
  }
  func.func @transform_1(%arg0: i32) -> (i32, i32, i32) {
    %c0_i32 = arith.constant 0 : i32
    %c0_i32_0 = arith.constant 0 : i32
    %c0_i32_1 = arith.constant 0 : i32
    return %arg0, %c0_i32, %c0_i32_0 : i32, i32, i32
  }
  func.func @transform_2(%arg0: i32) -> (i32, i32, i32) {
    %c0_i32 = arith.constant 0 : i32
    %c0_i32_0 = arith.constant 0 : i32
    %c0_i32_1 = arith.constant 0 : i32
    return %arg0, %c0_i32, %c0_i32_0 : i32, i32, i32
  }
  func.func @transform_3(%arg0: i32) -> (i32, i32, i32) {
    %c0_i32 = arith.constant 0 : i32
    %c0_i32_0 = arith.constant 0 : i32
    %c0_i32_1 = arith.constant 0 : i32
    return %arg0, %c0_i32, %c0_i32_0 : i32, i32, i32
  }
  func.func @transform_4(%arg0: i32) -> (i32, i32) {
    %c0_i32 = arith.constant 0 : i32
    %c0_i32_0 = arith.constant 0 : i32
    %c0_i32_1 = arith.constant 0 : i32
    return %c0_i32, %c0_i32_0 : i32, i32
  }
  func.func @transform_5(%arg0: i32) -> (i32, i32) {
    %c0_i32 = arith.constant 0 : i32
    %c0_i32_0 = arith.constant 0 : i32
    %c0_i32_1 = arith.constant 0 : i32
    return %c0_i32, %c0_i32_0 : i32, i32
  }
  func.func @transform_6(%arg0: i32) -> (i32, i32, i32) {
    %c0_i32 = arith.constant 0 : i32
    %c0_i32_0 = arith.constant 0 : i32
    %c0_i32_1 = arith.constant 0 : i32
    return %arg0, %c0_i32, %c0_i32_0 : i32, i32, i32
  }
}

module attributes {stable_mosaic.version = 11 : i64} {
  func.func @fused_kernel(%arg0: i32, %arg1: memref<1x1xf32, #tpu.memory_space<smem>>, %arg2: memref<2x4x256xf32, #tpu.memory_space<vmem>>, %arg3: memref<2x8x784xf32, #tpu.memory_space<vmem>>, %arg4: memref<72x4xf32, #tpu.memory_space<vmem>>, %arg5: memref<8x1xf32, #tpu.memory_space<vmem>>, %arg6: memref<14x28xf32, #tpu.memory_space<vmem>>, %arg7: memref<2x8x784xf32, #tpu.memory_space<vmem>>, %arg8: memref<1x8x1xf32, #tpu.memory_space<vmem>>, %arg9: memref<1x8x1xf32, #tpu.memory_space<vmem>>, %arg10: memref<72x256xf32, #tpu.memory_space<vmem>>, %arg11: memref<224x14xf32, #tpu.memory_space<vmem>>, %arg12: memref<8x784xf32, #tpu.memory_space<vmem>>) attributes {dimension_semantics = [#tpu.dimension_semantics<parallel>], iteration_bounds = array<i64: 1>, scalar_prefetch = 0 : i64, scratch_operands = 3 : i64, tpu.core_type = #tpu.core_type<tc>, window_params = [{transform_indices = @transform_0, window_bounds = array<i64: 1, 1>}, {transform_indices = @transform_1, window_bounds = array<i64: 2, 4, 256>}, {transform_indices = @transform_2, window_bounds = array<i64: 2, 8, 784>}, {pipeline_mode = #tpu.pipeline_mode<synchronous>, transform_indices = @transform_3, window_bounds = array<i64: 72, 4>}, {pipeline_mode = #tpu.pipeline_mode<synchronous>, transform_indices = @transform_4, window_bounds = array<i64: 8, 1>}, {pipeline_mode = #tpu.pipeline_mode<synchronous>, transform_indices = @transform_5, window_bounds = array<i64: 14, 28>}, {transform_indices = @transform_6, window_bounds = array<i64: 2, 8, 784>}, {transform_indices = @transform_7, window_bounds = array<i64: 1, 8, 1>}, {transform_indices = @transform_8, window_bounds = array<i64: 1, 8, 1>}]} {
    %c0 = arith.constant 0 : index
    %c0_0 = arith.constant 0 : index
    %0 = memref.load %arg1[%c0, %c0_0] : memref<1x1xf32, #tpu.memory_space<smem>>
    %c0_1 = arith.constant 0 : index
    %c0_2 = arith.constant 0 : index
    %1 = vector.load %arg4[%c0_1, %c0_2] : memref<72x4xf32, #tpu.memory_space<vmem>>, vector<72x4xf32>
    %c0_3 = arith.constant 0 : index
    %c0_4 = arith.constant 0 : index
    %2 = vector.load %arg5[%c0_3, %c0_4] : memref<8x1xf32, #tpu.memory_space<vmem>>, vector<8x1xf32>
    %c0_5 = arith.constant 0 : index
    %c0_6 = arith.constant 0 : index
    %3 = vector.load %arg6[%c0_5, %c0_6] : memref<14x28xf32, #tpu.memory_space<vmem>>, vector<14x28xf32>
    %cst = arith.constant 0.000000e+00 : f32
    %4 = vector.broadcast %cst : f32 to vector<8x1xf32>
    %cst_7 = arith.constant 0.000000e+00 : f32
    %5 = vector.broadcast %cst_7 : f32 to vector<8x1xf32>
    %c0_8 = arith.constant 0 : index
    %c0_9 = arith.constant 0 : index
    %c0_10 = arith.constant 0 : index
    %6 = vector.load %arg2[%c0_8, %c0_9, %c0_10] : memref<2x4x256xf32, #tpu.memory_space<vmem>>, vector<1x4x256xf32>
    %7 = vector.shape_cast %6 : vector<1x4x256xf32> to vector<4x256xf32>
    %cst_11 = arith.constant dense<0.000000e+00> : vector<72x256xf32>
    %8 = tpu.matmul %1, %7, %cst_11 {dimension_numbers = #tpu.dot_dimension_numbers<[1], [0], [0], [1], [0, 0, 1, 1], [], []>} : vector<72x4xf32>, vector<4x256xf32>, vector<72x256xf32> -> vector<72x256xf32>
    %c0_12 = arith.constant 0 : index
    %c0_13 = arith.constant 0 : index
    %9 = vector.load %arg10[%c0_12, %c0_13] : memref<72x256xf32, #tpu.memory_space<vmem>>, vector<72x256xf32>
    tpu.vector_store %arg10[%c0_12, %c0_13], %8 {strides = array<i32>} : memref<72x256xf32, #tpu.memory_space<vmem>>, vector<72x256xf32>,
    %c0_14 = arith.constant 0 : index
    %c0_15 = arith.constant 0 : index
    %10 = vector.load %arg10[%c0_14, %c0_15] : memref<72x256xf32, #tpu.memory_space<vmem>>, vector<8x14xf32>
    %c8 = arith.constant 8 : index
    %c1 = arith.constant 1 : index
    %11 = vector.load %arg10[%c8, %c1] : memref<72x256xf32, #tpu.memory_space<vmem>>, vector<8x14xf32>
    %12 = arith.addf %10, %11 : vector<8x14xf32>
    %c16 = arith.constant 16 : index
    %c2 = arith.constant 2 : index
    %13 = vector.load %arg10[%c16, %c2] : memref<72x256xf32, #tpu.memory_space<vmem>>, vector<8x14xf32>
    %14 = arith.addf %12, %13 : vector<8x14xf32>
    %c24 = arith.constant 24 : index
    %c16_16 = arith.constant 16 : index
    %15 = vector.load %arg10[%c24, %c16_16] : memref<72x256xf32, #tpu.memory_space<vmem>>, vector<8x14xf32>
    %16 = arith.addf %14, %15 : vector<8x14xf32>
    %c32 = arith.constant 32 : index
    %c17 = arith.constant 17 : index
    %17 = vector.load %arg10[%c32, %c17] : memref<72x256xf32, #tpu.memory_space<vmem>>, vector<8x14xf32>
    %18 = arith.addf %16, %17 : vector<8x14xf32>
    %c40 = arith.constant 40 : index
    %c18 = arith.constant 18 : index
    %19 = vector.load %arg10[%c40, %c18] : memref<72x256xf32, #tpu.memory_space<vmem>>, vector<8x14xf32>
    %20 = arith.addf %18, %19 : vector<8x14xf32>
    %c48 = arith.constant 48 : index
    %c32_17 = arith.constant 32 : index
    %21 = vector.load %arg10[%c48, %c32_17] : memref<72x256xf32, #tpu.memory_space<vmem>>, vector<8x14xf32>
    %22 = arith.addf %20, %21 : vector<8x14xf32>
    %c56 = arith.constant 56 : index
    %c33 = arith.constant 33 : index
    %23 = vector.load %arg10[%c56, %c33] : memref<72x256xf32, #tpu.memory_space<vmem>>, vector<8x14xf32>
    %24 = arith.addf %22, %23 : vector<8x14xf32>
    %c64 = arith.constant 64 : index
    %c34 = arith.constant 34 : index
    %25 = vector.load %arg10[%c64, %c34] : memref<72x256xf32, #tpu.memory_space<vmem>>, vector<8x14xf32>
    %26 = arith.addf %24, %25 : vector<8x14xf32>
    %27 = vector.broadcast %2 : vector<8x1xf32> to vector<8x14xf32>
    %28 = arith.addf %26, %27 : vector<8x14xf32>
    %c0_18 = arith.constant 0 : index
    %c16_19 = arith.constant 16 : index
    %29 = vector.load %arg10[%c0_18, %c16_19] : memref<72x256xf32, #tpu.memory_space<vmem>>, vector<8x14xf32>
    %c8_20 = arith.constant 8 : index
    %c17_21 = arith.constant 17 : index
    %30 = vector.load %arg10[%c8_20, %c17_21] : memref<72x256xf32, #tpu.memory_space<vmem>>, vector<8x14xf32>
    %31 = arith.addf %29, %30 : vector<8x14xf32>
    %c16_22 = arith.constant 16 : index
    %c18_23 = arith.constant 18 : index
    %32 = vector.load %arg10[%c16_22, %c18_23] : memref<72x256xf32, #tpu.memory_space<vmem>>, vector<8x14xf32>
    %33 = arith.addf %31, %32 : vector<8x14xf32>
    %c24_24 = arith.constant 24 : index
    %c32_25 = arith.constant 32 : index
    %34 = vector.load %arg10[%c24_24, %c32_25] : memref<72x256xf32, #tpu.memory_space<vmem>>, vector<8x14xf32>
    %35 = arith.addf %33, %34 : vector<8x14xf32>
    %c32_26 = arith.constant 32 : index
    %c33_27 = arith.constant 33 : index
    %36 = vector.load %arg10[%c32_26, %c33_27] : memref<72x256xf32, #tpu.memory_space<vmem>>, vector<8x14xf32>
    %37 = arith.addf %35, %36 : vector<8x14xf32>
    %c40_28 = arith.constant 40 : index
    %c34_29 = arith.constant 34 : index
    %38 = vector.load %arg10[%c40_28, %c34_29] : memref<72x256xf32, #tpu.memory_space<vmem>>, vector<8x14xf32>
    %39 = arith.addf %37, %38 : vector<8x14xf32>
    %c48_30 = arith.constant 48 : index
    %c48_31 = arith.constant 48 : index
    %40 = vector.load %arg10[%c48_30, %c48_31] : memref<72x256xf32, #tpu.memory_space<vmem>>, vector<8x14xf32>
    %41 = arith.addf %39, %40 : vector<8x14xf32>
    %c56_32 = arith.constant 56 : index
    %c49 = arith.constant 49 : index
    %42 = vector.load %arg10[%c56_32, %c49] : memref<72x256xf32, #tpu.memory_space<vmem>>, vector<8x14xf32>
    %43 = arith.addf %41, %42 : vector<8x14xf32>
    %c64_33 = arith.constant 64 : index
    %c50 = arith.constant 50 : index
    %44 = vector.load %arg10[%c64_33, %c50] : memref<72x256xf32, #tpu.memory_space<vmem>>, vector<8x14xf32>
    %45 = arith.addf %43, %44 : vector<8x14xf32>
    %46 = vector.broadcast %2 : vector<8x1xf32> to vector<8x14xf32>
    %47 = arith.addf %45, %46 : vector<8x14xf32>
    %c0_34 = arith.constant 0 : index
    %c32_35 = arith.constant 32 : index
    %48 = vector.load %arg10[%c0_34, %c32_35] : memref<72x256xf32, #tpu.memory_space<vmem>>, vector<8x14xf32>
    %c8_36 = arith.constant 8 : index
    %c33_37 = arith.constant 33 : index
    %49 = vector.load %arg10[%c8_36, %c33_37] : memref<72x256xf32, #tpu.memory_space<vmem>>, vector<8x14xf32>
    %50 = arith.addf %48, %49 : vector<8x14xf32>
    %c16_38 = arith.constant 16 : index
    %c34_39 = arith.constant 34 : index
    %51 = vector.load %arg10[%c16_38, %c34_39] : memref<72x256xf32, #tpu.memory_space<vmem>>, vector<8x14xf32>
    %52 = arith.addf %50, %51 : vector<8x14xf32>
    %c24_40 = arith.constant 24 : index
    %c48_41 = arith.constant 48 : index
    %53 = vector.load %arg10[%c24_40, %c48_41] : memref<72x256xf32, #tpu.memory_space<vmem>>, vector<8x14xf32>
    %54 = arith.addf %52, %53 : vector<8x14xf32>
    %c32_42 = arith.constant 32 : index
    %c49_43 = arith.constant 49 : index
    %55 = vector.load %arg10[%c32_42, %c49_43] : memref<72x256xf32, #tpu.memory_space<vmem>>, vector<8x14xf32>
    %56 = arith.addf %54, %55 : vector<8x14xf32>
    %c40_44 = arith.constant 40 : index
    %c50_45 = arith.constant 50 : index
    %57 = vector.load %arg10[%c40_44, %c50_45] : memref<72x256xf32, #tpu.memory_space<vmem>>, vector<8x14xf32>
    %58 = arith.addf %56, %57 : vector<8x14xf32>
    %c48_46 = arith.constant 48 : index
    %c64_47 = arith.constant 64 : index
    %59 = vector.load %arg10[%c48_46, %c64_47] : memref<72x256xf32, #tpu.memory_space<vmem>>, vector<8x14xf32>
    %60 = arith.addf %58, %59 : vector<8x14xf32>
    %c56_48 = arith.constant 56 : index
    %c65 = arith.constant 65 : index
    %61 = vector.load %arg10[%c56_48, %c65] : memref<72x256xf32, #tpu.memory_space<vmem>>, vector<8x14xf32>
    %62 = arith.addf %60, %61 : vector<8x14xf32>
    %c64_49 = arith.constant 64 : index
    %c66 = arith.constant 66 : index
    %63 = vector.load %arg10[%c64_49, %c66] : memref<72x256xf32, #tpu.memory_space<vmem>>, vector<8x14xf32>
    %64 = arith.addf %62, %63 : vector<8x14xf32>
    %65 = vector.broadcast %2 : vector<8x1xf32> to vector<8x14xf32>
    %66 = arith.addf %64, %65 : vector<8x14xf32>
    %c0_50 = arith.constant 0 : index
    %c48_51 = arith.constant 48 : index
    %67 = vector.load %arg10[%c0_50, %c48_51] : memref<72x256xf32, #tpu.memory_space<vmem>>, vector<8x14xf32>
    %c8_52 = arith.constant 8 : index
    %c49_53 = arith.constant 49 : index
    %68 = vector.load %arg10[%c8_52, %c49_53] : memref<72x256xf32, #tpu.memory_space<vmem>>, vector<8x14xf32>
    %69 = arith.addf %67, %68 : vector<8x14xf32>
    %c16_54 = arith.constant 16 : index
    %c50_55 = arith.constant 50 : index
    %70 = vector.load %arg10[%c16_54, %c50_55] : memref<72x256xf32, #tpu.memory_space<vmem>>, vector<8x14xf32>
    %71 = arith.addf %69, %70 : vector<8x14xf32>
    %c24_56 = arith.constant 24 : index
    %c64_57 = arith.constant 64 : index
    %72 = vector.load %arg10[%c24_56, %c64_57] : memref<72x256xf32, #tpu.memory_space<vmem>>, vector<8x14xf32>
    %73 = arith.addf %71, %72 : vector<8x14xf32>
    %c32_58 = arith.constant 32 : index
    %c65_59 = arith.constant 65 : index
    %74 = vector.load %arg10[%c32_58, %c65_59] : memref<72x256xf32, #tpu.memory_space<vmem>>, vector<8x14xf32>
    %75 = arith.addf %73, %74 : vector<8x14xf32>
    %c40_60 = arith.constant 40 : index
    %c66_61 = arith.constant 66 : index
    %76 = vector.load %arg10[%c40_60, %c66_61] : memref<72x256xf32, #tpu.memory_space<vmem>>, vector<8x14xf32>
    %77 = arith.addf %75, %76 : vector<8x14xf32>
    %c48_62 = arith.constant 48 : index
    %c80 = arith.constant 80 : index
    %78 = vector.load %arg10[%c48_62, %c80] : memref<72x256xf32, #tpu.memory_space<vmem>>, vector<8x14xf32>
    %79 = arith.addf %77, %78 : vector<8x14xf32>
    %c56_63 = arith.constant 56 : index
    %c81 = arith.constant 81 : index
    %80 = vector.load %arg10[%c56_63, %c81] : memref<72x256xf32, #tpu.memory_space<vmem>>, vector<8x14xf32>
    %81 = arith.addf %79, %80 : vector<8x14xf32>
    %c64_64 = arith.constant 64 : index
    %c82 = arith.constant 82 : index
    %82 = vector.load %arg10[%c64_64, %c82] : memref<72x256xf32, #tpu.memory_space<vmem>>, vector<8x14xf32>
    %83 = arith.addf %81, %82 : vector<8x14xf32>
    %84 = vector.broadcast %2 : vector<8x1xf32> to vector<8x14xf32>
    %85 = arith.addf %83, %84 : vector<8x14xf32>
    %c0_65 = arith.constant 0 : index
    %c64_66 = arith.constant 64 : index
    %86 = vector.load %arg10[%c0_65, %c64_66] : memref<72x256xf32, #tpu.memory_space<vmem>>, vector<8x14xf32>
    %c8_67 = arith.constant 8 : index
    %c65_68 = arith.constant 65 : index
    %87 = vector.load %arg10[%c8_67, %c65_68] : memref<72x256xf32, #tpu.memory_space<vmem>>, vector<8x14xf32>
    %88 = arith.addf %86, %87 : vector<8x14xf32>
    %c16_69 = arith.constant 16 : index
    %c66_70 = arith.constant 66 : index
    %89 = vector.load %arg10[%c16_69, %c66_70] : memref<72x256xf32, #tpu.memory_space<vmem>>, vector<8x14xf32>
    %90 = arith.addf %88, %89 : vector<8x14xf32>
    %c24_71 = arith.constant 24 : index
    %c80_72 = arith.constant 80 : index
    %91 = vector.load %arg10[%c24_71, %c80_72] : memref<72x256xf32, #tpu.memory_space<vmem>>, vector<8x14xf32>
    %92 = arith.addf %90, %91 : vector<8x14xf32>
    %c32_73 = arith.constant 32 : index
    %c81_74 = arith.constant 81 : index
    %93 = vector.load %arg10[%c32_73, %c81_74] : memref<72x256xf32, #tpu.memory_space<vmem>>, vector<8x14xf32>
    %94 = arith.addf %92, %93 : vector<8x14xf32>
    %c40_75 = arith.constant 40 : index
    %c82_76 = arith.constant 82 : index
    %95 = vector.load %arg10[%c40_75, %c82_76] : memref<72x256xf32, #tpu.memory_space<vmem>>, vector<8x14xf32>
    %96 = arith.addf %94, %95 : vector<8x14xf32>
    %c48_77 = arith.constant 48 : index
    %c96 = arith.constant 96 : index
    %97 = vector.load %arg10[%c48_77, %c96] : memref<72x256xf32, #tpu.memory_space<vmem>>, vector<8x14xf32>
    %98 = arith.addf %96, %97 : vector<8x14xf32>
    %c56_78 = arith.constant 56 : index
    %c97 = arith.constant 97 : index
    %99 = vector.load %arg10[%c56_78, %c97] : memref<72x256xf32, #tpu.memory_space<vmem>>, vector<8x14xf32>
    %100 = arith.addf %98, %99 : vector<8x14xf32>
    %c64_79 = arith.constant 64 : index
    %c98 = arith.constant 98 : index
    %101 = vector.load %arg10[%c64_79, %c98] : memref<72x256xf32, #tpu.memory_space<vmem>>, vector<8x14xf32>
    %102 = arith.addf %100, %101 : vector<8x14xf32>
    %103 = vector.broadcast %2 : vector<8x1xf32> to vector<8x14xf32>
    %104 = arith.addf %102, %103 : vector<8x14xf32>
    %c0_80 = arith.constant 0 : index
    %c80_81 = arith.constant 80 : index
    %105 = vector.load %arg10[%c0_80, %c80_81] : memref<72x256xf32, #tpu.memory_space<vmem>>, vector<8x14xf32>
    %c8_82 = arith.constant 8 : index
    %c81_83 = arith.constant 81 : index
    %106 = vector.load %arg10[%c8_82, %c81_83] : memref<72x256xf32, #tpu.memory_space<vmem>>, vector<8x14xf32>
    %107 = arith.addf %105, %106 : vector<8x14xf32>
    %c16_84 = arith.constant 16 : index
    %c82_85 = arith.constant 82 : index
    %108 = vector.load %arg10[%c16_84, %c82_85] : memref<72x256xf32, #tpu.memory_space<vmem>>, vector<8x14xf32>
    %109 = arith.addf %107, %108 : vector<8x14xf32>
    %c24_86 = arith.constant 24 : index
    %c96_87 = arith.constant 96 : index
    %110 = vector.load %arg10[%c24_86, %c96_87] : memref<72x256xf32, #tpu.memory_space<vmem>>, vector<8x14xf32>
    %111 = arith.addf %109, %110 : vector<8x14xf32>
    %c32_88 = arith.constant 32 : index
    %c97_89 = arith.constant 97 : index
    %112 = vector.load %arg10[%c32_88, %c97_89] : memref<72x256xf32, #tpu.memory_space<vmem>>, vector<8x14xf32>
    %113 = arith.addf %111, %112 : vector<8x14xf32>
    %c40_90 = arith.constant 40 : index
    %c98_91 = arith.constant 98 : index
    %114 = vector.load %arg10[%c40_90, %c98_91] : memref<72x256xf32, #tpu.memory_space<vmem>>, vector<8x14xf32>
    %115 = arith.addf %113, %114 : vector<8x14xf32>
    %c48_92 = arith.constant 48 : index
    %c112 = arith.constant 112 : index
    %116 = vector.load %arg10[%c48_92, %c112] : memref<72x256xf32, #tpu.memory_space<vmem>>, vector<8x14xf32>
    %117 = arith.addf %115, %116 : vector<8x14xf32>
    %c56_93 = arith.constant 56 : index
    %c113 = arith.constant 113 : index
    %118 = vector.load %arg10[%c56_93, %c113] : memref<72x256xf32, #tpu.memory_space<vmem>>, vector<8x14xf32>
    %119 = arith.addf %117, %118 : vector<8x14xf32>
    %c64_94 = arith.constant 64 : index
    %c114 = arith.constant 114 : index
    %120 = vector.load %arg10[%c64_94, %c114] : memref<72x256xf32, #tpu.memory_space<vmem>>, vector<8x14xf32>
    %121 = arith.addf %119, %120 : vector<8x14xf32>
    %122 = vector.broadcast %2 : vector<8x1xf32> to vector<8x14xf32>
    %123 = arith.addf %121, %122 : vector<8x14xf32>
    %c0_95 = arith.constant 0 : index
    %c96_96 = arith.constant 96 : index
    %124 = vector.load %arg10[%c0_95, %c96_96] : memref<72x256xf32, #tpu.memory_space<vmem>>, vector<8x14xf32>
    %c8_97 = arith.constant 8 : index
    %c97_98 = arith.constant 97 : index
    %125 = vector.load %arg10[%c8_97, %c97_98] : memref<72x256xf32, #tpu.memory_space<vmem>>, vector<8x14xf32>
    %126 = arith.addf %124, %125 : vector<8x14xf32>
    %c16_99 = arith.constant 16 : index
    %c98_100 = arith.constant 98 : index
    %127 = vector.load %arg10[%c16_99, %c98_100] : memref<72x256xf32, #tpu.memory_space<vmem>>, vector<8x14xf32>
    %128 = arith.addf %126, %127 : vector<8x14xf32>
    %c24_101 = arith.constant 24 : index
    %c112_102 = arith.constant 112 : index
    %129 = vector.load %arg10[%c24_101, %c112_102] : memref<72x256xf32, #tpu.memory_space<vmem>>, vector<8x14xf32>
    %130 = arith.addf %128, %129 : vector<8x14xf32>
    %c32_103 = arith.constant 32 : index
    %c113_104 = arith.constant 113 : index
    %131 = vector.load %arg10[%c32_103, %c113_104] : memref<72x256xf32, #tpu.memory_space<vmem>>, vector<8x14xf32>
    %132 = arith.addf %130, %131 : vector<8x14xf32>
    %c40_105 = arith.constant 40 : index
    %c114_106 = arith.constant 114 : index
    %133 = vector.load %arg10[%c40_105, %c114_106] : memref<72x256xf32, #tpu.memory_space<vmem>>, vector<8x14xf32>
    %134 = arith.addf %132, %133 : vector<8x14xf32>
    %c48_107 = arith.constant 48 : index
    %c128 = arith.constant 128 : index
    %135 = vector.load %arg10[%c48_107, %c128] : memref<72x256xf32, #tpu.memory_space<vmem>>, vector<8x14xf32>
    %136 = arith.addf %134, %135 : vector<8x14xf32>
    %c56_108 = arith.constant 56 : index
    %c129 = arith.constant 129 : index
    %137 = vector.load %arg10[%c56_108, %c129] : memref<72x256xf32, #tpu.memory_space<vmem>>, vector<8x14xf32>
    %138 = arith.addf %136, %137 : vector<8x14xf32>
    %c64_109 = arith.constant 64 : index
    %c130 = arith.constant 130 : index
    %139 = vector.load %arg10[%c64_109, %c130] : memref<72x256xf32, #tpu.memory_space<vmem>>, vector<8x14xf32>
    %140 = arith.addf %138, %139 : vector<8x14xf32>
    %141 = vector.broadcast %2 : vector<8x1xf32> to vector<8x14xf32>
    %142 = arith.addf %140, %141 : vector<8x14xf32>
    %c0_110 = arith.constant 0 : index
    %c112_111 = arith.constant 112 : index
    %143 = vector.load %arg10[%c0_110, %c112_111] : memref<72x256xf32, #tpu.memory_space<vmem>>, vector<8x14xf32>
    %c8_112 = arith.constant 8 : index
    %c113_113 = arith.constant 113 : index
    %144 = vector.load %arg10[%c8_112, %c113_113] : memref<72x256xf32, #tpu.memory_space<vmem>>, vector<8x14xf32>
    %145 = arith.addf %143, %144 : vector<8x14xf32>
    %c16_114 = arith.constant 16 : index
    %c114_115 = arith.constant 114 : index
    %146 = vector.load %arg10[%c16_114, %c114_115] : memref<72x256xf32, #tpu.memory_space<vmem>>, vector<8x14xf32>
    %147 = arith.addf %145, %146 : vector<8x14xf32>
    %c24_116 = arith.constant 24 : index
    %c128_117 = arith.constant 128 : index
    %148 = vector.load %arg10[%c24_116, %c128_117] : memref<72x256xf32, #tpu.memory_space<vmem>>, vector<8x14xf32>
    %149 = arith.addf %147, %148 : vector<8x14xf32>
    %c32_118 = arith.constant 32 : index
    %c129_119 = arith.constant 129 : index
    %150 = vector.load %arg10[%c32_118, %c129_119] : memref<72x256xf32, #tpu.memory_space<vmem>>, vector<8x14xf32>
    %151 = arith.addf %149, %150 : vector<8x14xf32>
    %c40_120 = arith.constant 40 : index
    %c130_121 = arith.constant 130 : index
    %152 = vector.load %arg10[%c40_120, %c130_121] : memref<72x256xf32, #tpu.memory_space<vmem>>, vector<8x14xf32>
    %153 = arith.addf %151, %152 : vector<8x14xf32>
    %c48_122 = arith.constant 48 : index
    %c144 = arith.constant 144 : index
    %154 = vector.load %arg10[%c48_122, %c144] : memref<72x256xf32, #tpu.memory_space<vmem>>, vector<8x14xf32>
    %155 = arith.addf %153, %154 : vector<8x14xf32>
    %c56_123 = arith.constant 56 : index
    %c145 = arith.constant 145 : index
    %156 = vector.load %arg10[%c56_123, %c145] : memref<72x256xf32, #tpu.memory_space<vmem>>, vector<8x14xf32>
    %157 = arith.addf %155, %156 : vector<8x14xf32>
    %c64_124 = arith.constant 64 : index
    %c146 = arith.constant 146 : index
    %158 = vector.load %arg10[%c64_124, %c146] : memref<72x256xf32, #tpu.memory_space<vmem>>, vector<8x14xf32>
    %159 = arith.addf %157, %158 : vector<8x14xf32>
    %160 = vector.broadcast %2 : vector<8x1xf32> to vector<8x14xf32>
    %161 = arith.addf %159, %160 : vector<8x14xf32>
    %c0_125 = arith.constant 0 : index
    %c128_126 = arith.constant 128 : index
    %162 = vector.load %arg10[%c0_125, %c128_126] : memref<72x256xf32, #tpu.memory_space<vmem>>, vector<8x14xf32>
    %c8_127 = arith.constant 8 : index
    %c129_128 = arith.constant 129 : index
    %163 = vector.load %arg10[%c8_127, %c129_128] : memref<72x256xf32, #tpu.memory_space<vmem>>, vector<8x14xf32>
    %164 = arith.addf %162, %163 : vector<8x14xf32>
    %c16_129 = arith.constant 16 : index
    %c130_130 = arith.constant 130 : index
    %165 = vector.load %arg10[%c16_129, %c130_130] : memref<72x256xf32, #tpu.memory_space<vmem>>, vector<8x14xf32>
    %166 = arith.addf %164, %165 : vector<8x14xf32>
    %c24_131 = arith.constant 24 : index
    %c144_132 = arith.constant 144 : index
    %167 = vector.load %arg10[%c24_131, %c144_132] : memref<72x256xf32, #tpu.memory_space<vmem>>, vector<8x14xf32>
    %168 = arith.addf %166, %167 : vector<8x14xf32>
    %c32_133 = arith.constant 32 : index
    %c145_134 = arith.constant 145 : index
    %169 = vector.load %arg10[%c32_133, %c145_134] : memref<72x256xf32, #tpu.memory_space<vmem>>, vector<8x14xf32>
    %170 = arith.addf %168, %169 : vector<8x14xf32>
    %c40_135 = arith.constant 40 : index
    %c146_136 = arith.constant 146 : index
    %171 = vector.load %arg10[%c40_135, %c146_136] : memref<72x256xf32, #tpu.memory_space<vmem>>, vector<8x14xf32>
    %172 = arith.addf %170, %171 : vector<8x14xf32>
    %c48_137 = arith.constant 48 : index
    %c160 = arith.constant 160 : index
    %173 = vector.load %arg10[%c48_137, %c160] : memref<72x256xf32, #tpu.memory_space<vmem>>, vector<8x14xf32>
    %174 = arith.addf %172, %173 : vector<8x14xf32>
    %c56_138 = arith.constant 56 : index
    %c161 = arith.constant 161 : index
    %175 = vector.load %arg10[%c56_138, %c161] : memref<72x256xf32, #tpu.memory_space<vmem>>, vector<8x14xf32>
    %176 = arith.addf %174, %175 : vector<8x14xf32>
    %c64_139 = arith.constant 64 : index
    %c162 = arith.constant 162 : index
    %177 = vector.load %arg10[%c64_139, %c162] : memref<72x256xf32, #tpu.memory_space<vmem>>, vector<8x14xf32>
    %178 = arith.addf %176, %177 : vector<8x14xf32>
    %179 = vector.broadcast %2 : vector<8x1xf32> to vector<8x14xf32>
    %180 = arith.addf %178, %179 : vector<8x14xf32>
    %c0_140 = arith.constant 0 : index
    %c144_141 = arith.constant 144 : index
    %181 = vector.load %arg10[%c0_140, %c144_141] : memref<72x256xf32, #tpu.memory_space<vmem>>, vector<8x14xf32>
    %c8_142 = arith.constant 8 : index
    %c145_143 = arith.constant 145 : index
    %182 = vector.load %arg10[%c8_142, %c145_143] : memref<72x256xf32, #tpu.memory_space<vmem>>, vector<8x14xf32>
    %183 = arith.addf %181, %182 : vector<8x14xf32>
    %c16_144 = arith.constant 16 : index
    %c146_145 = arith.constant 146 : index
    %184 = vector.load %arg10[%c16_144, %c146_145] : memref<72x256xf32, #tpu.memory_space<vmem>>, vector<8x14xf32>
    %185 = arith.addf %183, %184 : vector<8x14xf32>
    %c24_146 = arith.constant 24 : index
    %c160_147 = arith.constant 160 : index
    %186 = vector.load %arg10[%c24_146, %c160_147] : memref<72x256xf32, #tpu.memory_space<vmem>>, vector<8x14xf32>
    %187 = arith.addf %185, %186 : vector<8x14xf32>
    %c32_148 = arith.constant 32 : index
    %c161_149 = arith.constant 161 : index
    %188 = vector.load %arg10[%c32_148, %c161_149] : memref<72x256xf32, #tpu.memory_space<vmem>>, vector<8x14xf32>
    %189 = arith.addf %187, %188 : vector<8x14xf32>
    %c40_150 = arith.constant 40 : index
    %c162_151 = arith.constant 162 : index
    %190 = vector.load %arg10[%c40_150, %c162_151] : memref<72x256xf32, #tpu.memory_space<vmem>>, vector<8x14xf32>
    %191 = arith.addf %189, %190 : vector<8x14xf32>
    %c48_152 = arith.constant 48 : index
    %c176 = arith.constant 176 : index
    %192 = vector.load %arg10[%c48_152, %c176] : memref<72x256xf32, #tpu.memory_space<vmem>>, vector<8x14xf32>
    %193 = arith.addf %191, %192 : vector<8x14xf32>
    %c56_153 = arith.constant 56 : index
    %c177 = arith.constant 177 : index
    %194 = vector.load %arg10[%c56_153, %c177] : memref<72x256xf32, #tpu.memory_space<vmem>>, vector<8x14xf32>
    %195 = arith.addf %193, %194 : vector<8x14xf32>
    %c64_154 = arith.constant 64 : index
    %c178 = arith.constant 178 : index
    %196 = vector.load %arg10[%c64_154, %c178] : memref<72x256xf32, #tpu.memory_space<vmem>>, vector<8x14xf32>
    %197 = arith.addf %195, %196 : vector<8x14xf32>
    %198 = vector.broadcast %2 : vector<8x1xf32> to vector<8x14xf32>
    %199 = arith.addf %197, %198 : vector<8x14xf32>
    %c0_155 = arith.constant 0 : index
    %c160_156 = arith.constant 160 : index
    %200 = vector.load %arg10[%c0_155, %c160_156] : memref<72x256xf32, #tpu.memory_space<vmem>>, vector<8x14xf32>
    %c8_157 = arith.constant 8 : index
    %c161_158 = arith.constant 161 : index
    %201 = vector.load %arg10[%c8_157, %c161_158] : memref<72x256xf32, #tpu.memory_space<vmem>>, vector<8x14xf32>
    %202 = arith.addf %200, %201 : vector<8x14xf32>
    %c16_159 = arith.constant 16 : index
    %c162_160 = arith.constant 162 : index
    %203 = vector.load %arg10[%c16_159, %c162_160] : memref<72x256xf32, #tpu.memory_space<vmem>>, vector<8x14xf32>
    %204 = arith.addf %202, %203 : vector<8x14xf32>
    %c24_161 = arith.constant 24 : index
    %c176_162 = arith.constant 176 : index
    %205 = vector.load %arg10[%c24_161, %c176_162] : memref<72x256xf32, #tpu.memory_space<vmem>>, vector<8x14xf32>
    %206 = arith.addf %204, %205 : vector<8x14xf32>
    %c32_163 = arith.constant 32 : index
    %c177_164 = arith.constant 177 : index
    %207 = vector.load %arg10[%c32_163, %c177_164] : memref<72x256xf32, #tpu.memory_space<vmem>>, vector<8x14xf32>
    %208 = arith.addf %206, %207 : vector<8x14xf32>
    %c40_165 = arith.constant 40 : index
    %c178_166 = arith.constant 178 : index
    %209 = vector.load %arg10[%c40_165, %c178_166] : memref<72x256xf32, #tpu.memory_space<vmem>>, vector<8x14xf32>
    %210 = arith.addf %208, %209 : vector<8x14xf32>
    %c48_167 = arith.constant 48 : index
    %c192 = arith.constant 192 : index
    %211 = vector.load %arg10[%c48_167, %c192] : memref<72x256xf32, #tpu.memory_space<vmem>>, vector<8x14xf32>
    %212 = arith.addf %210, %211 : vector<8x14xf32>
    %c56_168 = arith.constant 56 : index
    %c193 = arith.constant 193 : index
    %213 = vector.load %arg10[%c56_168, %c193] : memref<72x256xf32, #tpu.memory_space<vmem>>, vector<8x14xf32>
    %214 = arith.addf %212, %213 : vector<8x14xf32>
    %c64_169 = arith.constant 64 : index
    %c194 = arith.constant 194 : index
    %215 = vector.load %arg10[%c64_169, %c194] : memref<72x256xf32, #tpu.memory_space<vmem>>, vector<8x14xf32>
    %216 = arith.addf %214, %215 : vector<8x14xf32>
    %217 = vector.broadcast %2 : vector<8x1xf32> to vector<8x14xf32>
    %218 = arith.addf %216, %217 : vector<8x14xf32>
    %c0_170 = arith.constant 0 : index
    %c176_171 = arith.constant 176 : index
    %219 = vector.load %arg10[%c0_170, %c176_171] : memref<72x256xf32, #tpu.memory_space<vmem>>, vector<8x14xf32>
    %c8_172 = arith.constant 8 : index
    %c177_173 = arith.constant 177 : index
    %220 = vector.load %arg10[%c8_172, %c177_173] : memref<72x256xf32, #tpu.memory_space<vmem>>, vector<8x14xf32>
    %221 = arith.addf %219, %220 : vector<8x14xf32>
    %c16_174 = arith.constant 16 : index
    %c178_175 = arith.constant 178 : index
    %222 = vector.load %arg10[%c16_174, %c178_175] : memref<72x256xf32, #tpu.memory_space<vmem>>, vector<8x14xf32>
    %223 = arith.addf %221, %222 : vector<8x14xf32>
    %c24_176 = arith.constant 24 : index
    %c192_177 = arith.constant 192 : index
    %224 = vector.load %arg10[%c24_176, %c192_177] : memref<72x256xf32, #tpu.memory_space<vmem>>, vector<8x14xf32>
    %225 = arith.addf %223, %224 : vector<8x14xf32>
    %c32_178 = arith.constant 32 : index
    %c193_179 = arith.constant 193 : index
    %226 = vector.load %arg10[%c32_178, %c193_179] : memref<72x256xf32, #tpu.memory_space<vmem>>, vector<8x14xf32>
    %227 = arith.addf %225, %226 : vector<8x14xf32>
    %c40_180 = arith.constant 40 : index
    %c194_181 = arith.constant 194 : index
    %228 = vector.load %arg10[%c40_180, %c194_181] : memref<72x256xf32, #tpu.memory_space<vmem>>, vector<8x14xf32>
    %229 = arith.addf %227, %228 : vector<8x14xf32>
    %c48_182 = arith.constant 48 : index
    %c208 = arith.constant 208 : index
    %230 = vector.load %arg10[%c48_182, %c208] : memref<72x256xf32, #tpu.memory_space<vmem>>, vector<8x14xf32>
    %231 = arith.addf %229, %230 : vector<8x14xf32>
    %c56_183 = arith.constant 56 : index
    %c209 = arith.constant 209 : index
    %232 = vector.load %arg10[%c56_183, %c209] : memref<72x256xf32, #tpu.memory_space<vmem>>, vector<8x14xf32>
    %233 = arith.addf %231, %232 : vector<8x14xf32>
    %c64_184 = arith.constant 64 : index
    %c210 = arith.constant 210 : index
    %234 = vector.load %arg10[%c64_184, %c210] : memref<72x256xf32, #tpu.memory_space<vmem>>, vector<8x14xf32>
    %235 = arith.addf %233, %234 : vector<8x14xf32>
    %236 = vector.broadcast %2 : vector<8x1xf32> to vector<8x14xf32>
    %237 = arith.addf %235, %236 : vector<8x14xf32>
    %c0_185 = arith.constant 0 : index
    %c192_186 = arith.constant 192 : index
    %238 = vector.load %arg10[%c0_185, %c192_186] : memref<72x256xf32, #tpu.memory_space<vmem>>, vector<8x14xf32>
    %c8_187 = arith.constant 8 : index
    %c193_188 = arith.constant 193 : index
    %239 = vector.load %arg10[%c8_187, %c193_188] : memref<72x256xf32, #tpu.memory_space<vmem>>, vector<8x14xf32>
    %240 = arith.addf %238, %239 : vector<8x14xf32>
    %c16_189 = arith.constant 16 : index
    %c194_190 = arith.constant 194 : index
    %241 = vector.load %arg10[%c16_189, %c194_190] : memref<72x256xf32, #tpu.memory_space<vmem>>, vector<8x14xf32>
    %242 = arith.addf %240, %241 : vector<8x14xf32>
    %c24_191 = arith.constant 24 : index
    %c208_192 = arith.constant 208 : index
    %243 = vector.load %arg10[%c24_191, %c208_192] : memref<72x256xf32, #tpu.memory_space<vmem>>, vector<8x14xf32>
    %244 = arith.addf %242, %243 : vector<8x14xf32>
    %c32_193 = arith.constant 32 : index
    %c209_194 = arith.constant 209 : index
    %245 = vector.load %arg10[%c32_193, %c209_194] : memref<72x256xf32, #tpu.memory_space<vmem>>, vector<8x14xf32>
    %246 = arith.addf %244, %245 : vector<8x14xf32>
    %c40_195 = arith.constant 40 : index
    %c210_196 = arith.constant 210 : index
    %247 = vector.load %arg10[%c40_195, %c210_196] : memref<72x256xf32, #tpu.memory_space<vmem>>, vector<8x14xf32>
    %248 = arith.addf %246, %247 : vector<8x14xf32>
    %c48_197 = arith.constant 48 : index
    %c224 = arith.constant 224 : index
    %249 = vector.load %arg10[%c48_197, %c224] : memref<72x256xf32, #tpu.memory_space<vmem>>, vector<8x14xf32>
    %250 = arith.addf %248, %249 : vector<8x14xf32>
    %c56_198 = arith.constant 56 : index
    %c225 = arith.constant 225 : index
    %251 = vector.load %arg10[%c56_198, %c225] : memref<72x256xf32, #tpu.memory_space<vmem>>, vector<8x14xf32>
    %252 = arith.addf %250, %251 : vector<8x14xf32>
    %c64_199 = arith.constant 64 : index
    %c226 = arith.constant 226 : index
    %253 = vector.load %arg10[%c64_199, %c226] : memref<72x256xf32, #tpu.memory_space<vmem>>, vector<8x14xf32>
    %254 = arith.addf %252, %253 : vector<8x14xf32>
    %255 = vector.broadcast %2 : vector<8x1xf32> to vector<8x14xf32>
    %256 = arith.addf %254, %255 : vector<8x14xf32>
    %c0_200 = arith.constant 0 : index
    %c208_201 = arith.constant 208 : index
    %257 = vector.load %arg10[%c0_200, %c208_201] : memref<72x256xf32, #tpu.memory_space<vmem>>, vector<8x14xf32>
    %c8_202 = arith.constant 8 : index
    %c209_203 = arith.constant 209 : index
    %258 = vector.load %arg10[%c8_202, %c209_203] : memref<72x256xf32, #tpu.memory_space<vmem>>, vector<8x14xf32>
    %259 = arith.addf %257, %258 : vector<8x14xf32>
    %c16_204 = arith.constant 16 : index
    %c210_205 = arith.constant 210 : index
    %260 = vector.load %arg10[%c16_204, %c210_205] : memref<72x256xf32, #tpu.memory_space<vmem>>, vector<8x14xf32>
    %261 = arith.addf %259, %260 : vector<8x14xf32>
    %c24_206 = arith.constant 24 : index
    %c224_207 = arith.constant 224 : index
    %262 = vector.load %arg10[%c24_206, %c224_207] : memref<72x256xf32, #tpu.memory_space<vmem>>, vector<8x14xf32>
    %263 = arith.addf %261, %262 : vector<8x14xf32>
    %c32_208 = arith.constant 32 : index
    %c225_209 = arith.constant 225 : index
    %264 = vector.load %arg10[%c32_208, %c225_209] : memref<72x256xf32, #tpu.memory_space<vmem>>, vector<8x14xf32>
    %265 = arith.addf %263, %264 : vector<8x14xf32>
    %c40_210 = arith.constant 40 : index
    %c226_211 = arith.constant 226 : index
    %266 = vector.load %arg10[%c40_210, %c226_211] : memref<72x256xf32, #tpu.memory_space<vmem>>, vector<8x14xf32>
    %267 = arith.addf %265, %266 : vector<8x14xf32>
    %c48_212 = arith.constant 48 : index
    %c240 = arith.constant 240 : index
    %268 = vector.load %arg10[%c48_212, %c240] : memref<72x256xf32, #tpu.memory_space<vmem>>, vector<8x14xf32>
    %269 = arith.addf %267, %268 : vector<8x14xf32>
    %c56_213 = arith.constant 56 : index
    %c241 = arith.constant 241 : index
    %270 = vector.load %arg10[%c56_213, %c241] : memref<72x256xf32, #tpu.memory_space<vmem>>, vector<8x14xf32>
    %271 = arith.addf %269, %270 : vector<8x14xf32>
    %c64_214 = arith.constant 64 : index
    %c242 = arith.constant 242 : index
    %272 = vector.load %arg10[%c64_214, %c242] : memref<72x256xf32, #tpu.memory_space<vmem>>, vector<8x14xf32>
    %273 = arith.addf %271, %272 : vector<8x14xf32>
    %274 = vector.broadcast %2 : vector<8x1xf32> to vector<8x14xf32>
    %275 = arith.addf %273, %274 : vector<8x14xf32>
    %cst_215 = arith.constant 1.000000e+00 : f32
    %276 = vector.broadcast %cst_215 : f32 to vector<8x14xf32>
    %277 = arith.mulf %276, %28 : vector<8x14xf32>
    %cst_216 = arith.constant 0.000000e+00 : f32
    %278 = vector.broadcast %cst_216 : f32 to vector<8x14xf32>
    %279 = arith.mulf %278, %47 : vector<8x14xf32>
    %280 = arith.addf %277, %279 : vector<8x14xf32>
    %c0_217 = arith.constant 0 : index
    %c0_218 = arith.constant 0 : index
    %281 = vector.load %arg11[%c0_217, %c0_218] : memref<224x14xf32, #tpu.memory_space<vmem>>, vector<8x14xf32>
    tpu.vector_store %arg11[%c0_217, %c0_218], %280 {strides = array<i32>} : memref<224x14xf32, #tpu.memory_space<vmem>>, vector<8x14xf32>,
    %cst_219 = arith.constant 7.500000e-01 : f32
    %282 = vector.broadcast %cst_219 : f32 to vector<8x14xf32>
    %283 = arith.mulf %282, %28 : vector<8x14xf32>
    %cst_220 = arith.constant 2.500000e-01 : f32
    %284 = vector.broadcast %cst_220 : f32 to vector<8x14xf32>
    %285 = arith.mulf %284, %47 : vector<8x14xf32>
    %286 = arith.addf %283, %285 : vector<8x14xf32>
    %c8_221 = arith.constant 8 : index
    %c0_222 = arith.constant 0 : index
    %287 = vector.load %arg11[%c8_221, %c0_222] : memref<224x14xf32, #tpu.memory_space<vmem>>, vector<8x14xf32>
    tpu.vector_store %arg11[%c8_221, %c0_222], %286 {strides = array<i32>} : memref<224x14xf32, #tpu.memory_space<vmem>>, vector<8x14xf32>,
    %cst_223 = arith.constant 2.500000e-01 : f32
    %288 = vector.broadcast %cst_223 : f32 to vector<8x14xf32>
    %289 = arith.mulf %288, %28 : vector<8x14xf32>
    %cst_224 = arith.constant 7.500000e-01 : f32
    %290 = vector.broadcast %cst_224 : f32 to vector<8x14xf32>
    %291 = arith.mulf %290, %47 : vector<8x14xf32>
    %292 = arith.addf %289, %291 : vector<8x14xf32>
    %c16_225 = arith.constant 16 : index
    %c0_226 = arith.constant 0 : index
    %293 = vector.load %arg11[%c16_225, %c0_226] : memref<224x14xf32, #tpu.memory_space<vmem>>, vector<8x14xf32>
    tpu.vector_store %arg11[%c16_225, %c0_226], %292 {strides = array<i32>} : memref<224x14xf32, #tpu.memory_space<vmem>>, vector<8x14xf32>,
    %cst_227 = arith.constant 7.500000e-01 : f32
    %294 = vector.broadcast %cst_227 : f32 to vector<8x14xf32>
    %295 = arith.mulf %294, %47 : vector<8x14xf32>
    %cst_228 = arith.constant 2.500000e-01 : f32
    %296 = vector.broadcast %cst_228 : f32 to vector<8x14xf32>
    %297 = arith.mulf %296, %66 : vector<8x14xf32>
    %298 = arith.addf %295, %297 : vector<8x14xf32>
    %c24_229 = arith.constant 24 : index
    %c0_230 = arith.constant 0 : index
    %299 = vector.load %arg11[%c24_229, %c0_230] : memref<224x14xf32, #tpu.memory_space<vmem>>, vector<8x14xf32>
    tpu.vector_store %arg11[%c24_229, %c0_230], %298 {strides = array<i32>} : memref<224x14xf32, #tpu.memory_space<vmem>>, vector<8x14xf32>,
    %cst_231 = arith.constant 2.500000e-01 : f32
    %300 = vector.broadcast %cst_231 : f32 to vector<8x14xf32>
    %301 = arith.mulf %300, %47 : vector<8x14xf32>
    %cst_232 = arith.constant 7.500000e-01 : f32
    %302 = vector.broadcast %cst_232 : f32 to vector<8x14xf32>
    %303 = arith.mulf %302, %66 : vector<8x14xf32>
    %304 = arith.addf %301, %303 : vector<8x14xf32>
    %c32_233 = arith.constant 32 : index
    %c0_234 = arith.constant 0 : index
    %305 = vector.load %arg11[%c32_233, %c0_234] : memref<224x14xf32, #tpu.memory_space<vmem>>, vector<8x14xf32>
    tpu.vector_store %arg11[%c32_233, %c0_234], %304 {strides = array<i32>} : memref<224x14xf32, #tpu.memory_space<vmem>>, vector<8x14xf32>,
    %cst_235 = arith.constant 7.500000e-01 : f32
    %306 = vector.broadcast %cst_235 : f32 to vector<8x14xf32>
    %307 = arith.mulf %306, %66 : vector<8x14xf32>
    %cst_236 = arith.constant 2.500000e-01 : f32
    %308 = vector.broadcast %cst_236 : f32 to vector<8x14xf32>
    %309 = arith.mulf %308, %85 : vector<8x14xf32>
    %310 = arith.addf %307, %309 : vector<8x14xf32>
    %c40_237 = arith.constant 40 : index
    %c0_238 = arith.constant 0 : index
    %311 = vector.load %arg11[%c40_237, %c0_238] : memref<224x14xf32, #tpu.memory_space<vmem>>, vector<8x14xf32>
    tpu.vector_store %arg11[%c40_237, %c0_238], %310 {strides = array<i32>} : memref<224x14xf32, #tpu.memory_space<vmem>>, vector<8x14xf32>,
    %cst_239 = arith.constant 2.500000e-01 : f32
    %312 = vector.broadcast %cst_239 : f32 to vector<8x14xf32>
    %313 = arith.mulf %312, %66 : vector<8x14xf32>
    %cst_240 = arith.constant 7.500000e-01 : f32
    %314 = vector.broadcast %cst_240 : f32 to vector<8x14xf32>
    %315 = arith.mulf %314, %85 : vector<8x14xf32>
    %316 = arith.addf %313, %315 : vector<8x14xf32>
    %c48_241 = arith.constant 48 : index
    %c0_242 = arith.constant 0 : index
    %317 = vector.load %arg11[%c48_241, %c0_242] : memref<224x14xf32, #tpu.memory_space<vmem>>, vector<8x14xf32>
    tpu.vector_store %arg11[%c48_241, %c0_242], %316 {strides = array<i32>} : memref<224x14xf32, #tpu.memory_space<vmem>>, vector<8x14xf32>,
    %cst_243 = arith.constant 7.500000e-01 : f32
    %318 = vector.broadcast %cst_243 : f32 to vector<8x14xf32>
    %319 = arith.mulf %318, %85 : vector<8x14xf32>
    %cst_244 = arith.constant 2.500000e-01 : f32
    %320 = vector.broadcast %cst_244 : f32 to vector<8x14xf32>
    %321 = arith.mulf %320, %104 : vector<8x14xf32>
    %322 = arith.addf %319, %321 : vector<8x14xf32>
    %c56_245 = arith.constant 56 : index
    %c0_246 = arith.constant 0 : index
    %323 = vector.load %arg11[%c56_245, %c0_246] : memref<224x14xf32, #tpu.memory_space<vmem>>, vector<8x14xf32>
    tpu.vector_store %arg11[%c56_245, %c0_246], %322 {strides = array<i32>} : memref<224x14xf32, #tpu.memory_space<vmem>>, vector<8x14xf32>,
    %cst_247 = arith.constant 2.500000e-01 : f32
    %324 = vector.broadcast %cst_247 : f32 to vector<8x14xf32>
    %325 = arith.mulf %324, %85 : vector<8x14xf32>
    %cst_248 = arith.constant 7.500000e-01 : f32
    %326 = vector.broadcast %cst_248 : f32 to vector<8x14xf32>
    %327 = arith.mulf %326, %104 : vector<8x14xf32>
    %328 = arith.addf %325, %327 : vector<8x14xf32>
    %c64_249 = arith.constant 64 : index
    %c0_250 = arith.constant 0 : index
    %329 = vector.load %arg11[%c64_249, %c0_250] : memref<224x14xf32, #tpu.memory_space<vmem>>, vector<8x14xf32>
    tpu.vector_store %arg11[%c64_249, %c0_250], %328 {strides = array<i32>} : memref<224x14xf32, #tpu.memory_space<vmem>>, vector<8x14xf32>,
    %cst_251 = arith.constant 7.500000e-01 : f32
    %330 = vector.broadcast %cst_251 : f32 to vector<8x14xf32>
    %331 = arith.mulf %330, %104 : vector<8x14xf32>
    %cst_252 = arith.constant 2.500000e-01 : f32
    %332 = vector.broadcast %cst_252 : f32 to vector<8x14xf32>
    %333 = arith.mulf %332, %123 : vector<8x14xf32>
    %334 = arith.addf %331, %333 : vector<8x14xf32>
    %c72 = arith.constant 72 : index
    %c0_253 = arith.constant 0 : index
    %335 = vector.load %arg11[%c72, %c0_253] : memref<224x14xf32, #tpu.memory_space<vmem>>, vector<8x14xf32>
    tpu.vector_store %arg11[%c72, %c0_253], %334 {strides = array<i32>} : memref<224x14xf32, #tpu.memory_space<vmem>>, vector<8x14xf32>,
    %cst_254 = arith.constant 2.500000e-01 : f32
    %336 = vector.broadcast %cst_254 : f32 to vector<8x14xf32>
    %337 = arith.mulf %336, %104 : vector<8x14xf32>
    %cst_255 = arith.constant 7.500000e-01 : f32
    %338 = vector.broadcast %cst_255 : f32 to vector<8x14xf32>
    %339 = arith.mulf %338, %123 : vector<8x14xf32>
    %340 = arith.addf %337, %339 : vector<8x14xf32>
    %c80_256 = arith.constant 80 : index
    %c0_257 = arith.constant 0 : index
    %341 = vector.load %arg11[%c80_256, %c0_257] : memref<224x14xf32, #tpu.memory_space<vmem>>, vector<8x14xf32>
    tpu.vector_store %arg11[%c80_256, %c0_257], %340 {strides = array<i32>} : memref<224x14xf32, #tpu.memory_space<vmem>>, vector<8x14xf32>,
    %cst_258 = arith.constant 7.500000e-01 : f32
    %342 = vector.broadcast %cst_258 : f32 to vector<8x14xf32>
    %343 = arith.mulf %342, %123 : vector<8x14xf32>
    %cst_259 = arith.constant 2.500000e-01 : f32
    %344 = vector.broadcast %cst_259 : f32 to vector<8x14xf32>
    %345 = arith.mulf %344, %142 : vector<8x14xf32>
    %346 = arith.addf %343, %345 : vector<8x14xf32>
    %c88 = arith.constant 88 : index
    %c0_260 = arith.constant 0 : index
    %347 = vector.load %arg11[%c88, %c0_260] : memref<224x14xf32, #tpu.memory_space<vmem>>, vector<8x14xf32>
    tpu.vector_store %arg11[%c88, %c0_260], %346 {strides = array<i32>} : memref<224x14xf32, #tpu.memory_space<vmem>>, vector<8x14xf32>,
    %cst_261 = arith.constant 2.500000e-01 : f32
    %348 = vector.broadcast %cst_261 : f32 to vector<8x14xf32>
    %349 = arith.mulf %348, %123 : vector<8x14xf32>
    %cst_262 = arith.constant 7.500000e-01 : f32
    %350 = vector.broadcast %cst_262 : f32 to vector<8x14xf32>
    %351 = arith.mulf %350, %142 : vector<8x14xf32>
    %352 = arith.addf %349, %351 : vector<8x14xf32>
    %c96_263 = arith.constant 96 : index
    %c0_264 = arith.constant 0 : index
    %353 = vector.load %arg11[%c96_263, %c0_264] : memref<224x14xf32, #tpu.memory_space<vmem>>, vector<8x14xf32>
    tpu.vector_store %arg11[%c96_263, %c0_264], %352 {strides = array<i32>} : memref<224x14xf32, #tpu.memory_space<vmem>>, vector<8x14xf32>,
    %cst_265 = arith.constant 7.500000e-01 : f32
    %354 = vector.broadcast %cst_265 : f32 to vector<8x14xf32>
    %355 = arith.mulf %354, %142 : vector<8x14xf32>
    %cst_266 = arith.constant 2.500000e-01 : f32
    %356 = vector.broadcast %cst_266 : f32 to vector<8x14xf32>
    %357 = arith.mulf %356, %161 : vector<8x14xf32>
    %358 = arith.addf %355, %357 : vector<8x14xf32>
    %c104 = arith.constant 104 : index
    %c0_267 = arith.constant 0 : index
    %359 = vector.load %arg11[%c104, %c0_267] : memref<224x14xf32, #tpu.memory_space<vmem>>, vector<8x14xf32>
    tpu.vector_store %arg11[%c104, %c0_267], %358 {strides = array<i32>} : memref<224x14xf32, #tpu.memory_space<vmem>>, vector<8x14xf32>,
    %cst_268 = arith.constant 2.500000e-01 : f32
    %360 = vector.broadcast %cst_268 : f32 to vector<8x14xf32>
    %361 = arith.mulf %360, %142 : vector<8x14xf32>
    %cst_269 = arith.constant 7.500000e-01 : f32
    %362 = vector.broadcast %cst_269 : f32 to vector<8x14xf32>
    %363 = arith.mulf %362, %161 : vector<8x14xf32>
    %364 = arith.addf %361, %363 : vector<8x14xf32>
    %c112_270 = arith.constant 112 : index
    %c0_271 = arith.constant 0 : index
    %365 = vector.load %arg11[%c112_270, %c0_271] : memref<224x14xf32, #tpu.memory_space<vmem>>, vector<8x14xf32>
    tpu.vector_store %arg11[%c112_270, %c0_271], %364 {strides = array<i32>} : memref<224x14xf32, #tpu.memory_space<vmem>>, vector<8x14xf32>,
    %cst_272 = arith.constant 7.500000e-01 : f32
    %366 = vector.broadcast %cst_272 : f32 to vector<8x14xf32>
    %367 = arith.mulf %366, %161 : vector<8x14xf32>
    %cst_273 = arith.constant 2.500000e-01 : f32
    %368 = vector.broadcast %cst_273 : f32 to vector<8x14xf32>
    %369 = arith.mulf %368, %180 : vector<8x14xf32>
    %370 = arith.addf %367, %369 : vector<8x14xf32>
    %c120 = arith.constant 120 : index
    %c0_274 = arith.constant 0 : index
    %371 = vector.load %arg11[%c120, %c0_274] : memref<224x14xf32, #tpu.memory_space<vmem>>, vector<8x14xf32>
    tpu.vector_store %arg11[%c120, %c0_274], %370 {strides = array<i32>} : memref<224x14xf32, #tpu.memory_space<vmem>>, vector<8x14xf32>,
    %cst_275 = arith.constant 2.500000e-01 : f32
    %372 = vector.broadcast %cst_275 : f32 to vector<8x14xf32>
    %373 = arith.mulf %372, %161 : vector<8x14xf32>
    %cst_276 = arith.constant 7.500000e-01 : f32
    %374 = vector.broadcast %cst_276 : f32 to vector<8x14xf32>
    %375 = arith.mulf %374, %180 : vector<8x14xf32>
    %376 = arith.addf %373, %375 : vector<8x14xf32>
    %c128_277 = arith.constant 128 : index
    %c0_278 = arith.constant 0 : index
    %377 = vector.load %arg11[%c128_277, %c0_278] : memref<224x14xf32, #tpu.memory_space<vmem>>, vector<8x14xf32>
    tpu.vector_store %arg11[%c128_277, %c0_278], %376 {strides = array<i32>} : memref<224x14xf32, #tpu.memory_space<vmem>>, vector<8x14xf32>,
    %cst_279 = arith.constant 7.500000e-01 : f32
    %378 = vector.broadcast %cst_279 : f32 to vector<8x14xf32>
    %379 = arith.mulf %378, %180 : vector<8x14xf32>
    %cst_280 = arith.constant 2.500000e-01 : f32
    %380 = vector.broadcast %cst_280 : f32 to vector<8x14xf32>
    %381 = arith.mulf %380, %199 : vector<8x14xf32>
    %382 = arith.addf %379, %381 : vector<8x14xf32>
    %c136 = arith.constant 136 : index
    %c0_281 = arith.constant 0 : index
    %383 = vector.load %arg11[%c136, %c0_281] : memref<224x14xf32, #tpu.memory_space<vmem>>, vector<8x14xf32>
    tpu.vector_store %arg11[%c136, %c0_281], %382 {strides = array<i32>} : memref<224x14xf32, #tpu.memory_space<vmem>>, vector<8x14xf32>,
    %cst_282 = arith.constant 2.500000e-01 : f32
    %384 = vector.broadcast %cst_282 : f32 to vector<8x14xf32>
    %385 = arith.mulf %384, %180 : vector<8x14xf32>
    %cst_283 = arith.constant 7.500000e-01 : f32
    %386 = vector.broadcast %cst_283 : f32 to vector<8x14xf32>
    %387 = arith.mulf %386, %199 : vector<8x14xf32>
    %388 = arith.addf %385, %387 : vector<8x14xf32>
    %c144_284 = arith.constant 144 : index
    %c0_285 = arith.constant 0 : index
    %389 = vector.load %arg11[%c144_284, %c0_285] : memref<224x14xf32, #tpu.memory_space<vmem>>, vector<8x14xf32>
    tpu.vector_store %arg11[%c144_284, %c0_285], %388 {strides = array<i32>} : memref<224x14xf32, #tpu.memory_space<vmem>>, vector<8x14xf32>,
    %cst_286 = arith.constant 7.500000e-01 : f32
    %390 = vector.broadcast %cst_286 : f32 to vector<8x14xf32>
    %391 = arith.mulf %390, %199 : vector<8x14xf32>
    %cst_287 = arith.constant 2.500000e-01 : f32
    %392 = vector.broadcast %cst_287 : f32 to vector<8x14xf32>
    %393 = arith.mulf %392, %218 : vector<8x14xf32>
    %394 = arith.addf %391, %393 : vector<8x14xf32>
    %c152 = arith.constant 152 : index
    %c0_288 = arith.constant 0 : index
    %395 = vector.load %arg11[%c152, %c0_288] : memref<224x14xf32, #tpu.memory_space<vmem>>, vector<8x14xf32>
    tpu.vector_store %arg11[%c152, %c0_288], %394 {strides = array<i32>} : memref<224x14xf32, #tpu.memory_space<vmem>>, vector<8x14xf32>,
    %cst_289 = arith.constant 2.500000e-01 : f32
    %396 = vector.broadcast %cst_289 : f32 to vector<8x14xf32>
    %397 = arith.mulf %396, %199 : vector<8x14xf32>
    %cst_290 = arith.constant 7.500000e-01 : f32
    %398 = vector.broadcast %cst_290 : f32 to vector<8x14xf32>
    %399 = arith.mulf %398, %218 : vector<8x14xf32>
    %400 = arith.addf %397, %399 : vector<8x14xf32>
    %c160_291 = arith.constant 160 : index
    %c0_292 = arith.constant 0 : index
    %401 = vector.load %arg11[%c160_291, %c0_292] : memref<224x14xf32, #tpu.memory_space<vmem>>, vector<8x14xf32>
    tpu.vector_store %arg11[%c160_291, %c0_292], %400 {strides = array<i32>} : memref<224x14xf32, #tpu.memory_space<vmem>>, vector<8x14xf32>,
    %cst_293 = arith.constant 7.500000e-01 : f32
    %402 = vector.broadcast %cst_293 : f32 to vector<8x14xf32>
    %403 = arith.mulf %402, %218 : vector<8x14xf32>
    %cst_294 = arith.constant 2.500000e-01 : f32
    %404 = vector.broadcast %cst_294 : f32 to vector<8x14xf32>
    %405 = arith.mulf %404, %237 : vector<8x14xf32>
    %406 = arith.addf %403, %405 : vector<8x14xf32>
    %c168 = arith.constant 168 : index
    %c0_295 = arith.constant 0 : index
    %407 = vector.load %arg11[%c168, %c0_295] : memref<224x14xf32, #tpu.memory_space<vmem>>, vector<8x14xf32>
    tpu.vector_store %arg11[%c168, %c0_295], %406 {strides = array<i32>} : memref<224x14xf32, #tpu.memory_space<vmem>>, vector<8x14xf32>,
    %cst_296 = arith.constant 2.500000e-01 : f32
    %408 = vector.broadcast %cst_296 : f32 to vector<8x14xf32>
    %409 = arith.mulf %408, %218 : vector<8x14xf32>
    %cst_297 = arith.constant 7.500000e-01 : f32
    %410 = vector.broadcast %cst_297 : f32 to vector<8x14xf32>
    %411 = arith.mulf %410, %237 : vector<8x14xf32>
    %412 = arith.addf %409, %411 : vector<8x14xf32>
    %c176_298 = arith.constant 176 : index
    %c0_299 = arith.constant 0 : index
    %413 = vector.load %arg11[%c176_298, %c0_299] : memref<224x14xf32, #tpu.memory_space<vmem>>, vector<8x14xf32>
    tpu.vector_store %arg11[%c176_298, %c0_299], %412 {strides = array<i32>} : memref<224x14xf32, #tpu.memory_space<vmem>>, vector<8x14xf32>,
    %cst_300 = arith.constant 7.500000e-01 : f32
    %414 = vector.broadcast %cst_300 : f32 to vector<8x14xf32>
    %415 = arith.mulf %414, %237 : vector<8x14xf32>
    %cst_301 = arith.constant 2.500000e-01 : f32
    %416 = vector.broadcast %cst_301 : f32 to vector<8x14xf32>
    %417 = arith.mulf %416, %256 : vector<8x14xf32>
    %418 = arith.addf %415, %417 : vector<8x14xf32>
    %c184 = arith.constant 184 : index
    %c0_302 = arith.constant 0 : index
    %419 = vector.load %arg11[%c184, %c0_302] : memref<224x14xf32, #tpu.memory_space<vmem>>, vector<8x14xf32>
    tpu.vector_store %arg11[%c184, %c0_302], %418 {strides = array<i32>} : memref<224x14xf32, #tpu.memory_space<vmem>>, vector<8x14xf32>,
    %cst_303 = arith.constant 2.500000e-01 : f32
    %420 = vector.broadcast %cst_303 : f32 to vector<8x14xf32>
    %421 = arith.mulf %420, %237 : vector<8x14xf32>
    %cst_304 = arith.constant 7.500000e-01 : f32
    %422 = vector.broadcast %cst_304 : f32 to vector<8x14xf32>
    %423 = arith.mulf %422, %256 : vector<8x14xf32>
    %424 = arith.addf %421, %423 : vector<8x14xf32>
    %c192_305 = arith.constant 192 : index
    %c0_306 = arith.constant 0 : index
    %425 = vector.load %arg11[%c192_305, %c0_306] : memref<224x14xf32, #tpu.memory_space<vmem>>, vector<8x14xf32>
    tpu.vector_store %arg11[%c192_305, %c0_306], %424 {strides = array<i32>} : memref<224x14xf32, #tpu.memory_space<vmem>>, vector<8x14xf32>,
    %cst_307 = arith.constant 7.500000e-01 : f32
    %426 = vector.broadcast %cst_307 : f32 to vector<8x14xf32>
    %427 = arith.mulf %426, %256 : vector<8x14xf32>
    %cst_308 = arith.constant 2.500000e-01 : f32
    %428 = vector.broadcast %cst_308 : f32 to vector<8x14xf32>
    %429 = arith.mulf %428, %275 : vector<8x14xf32>
    %430 = arith.addf %427, %429 : vector<8x14xf32>
    %c200 = arith.constant 200 : index
    %c0_309 = arith.constant 0 : index
    %431 = vector.load %arg11[%c200, %c0_309] : memref<224x14xf32, #tpu.memory_space<vmem>>, vector<8x14xf32>
    tpu.vector_store %arg11[%c200, %c0_309], %430 {strides = array<i32>} : memref<224x14xf32, #tpu.memory_space<vmem>>, vector<8x14xf32>,
    %cst_310 = arith.constant 2.500000e-01 : f32
    %432 = vector.broadcast %cst_310 : f32 to vector<8x14xf32>
    %433 = arith.mulf %432, %256 : vector<8x14xf32>
    %cst_311 = arith.constant 7.500000e-01 : f32
    %434 = vector.broadcast %cst_311 : f32 to vector<8x14xf32>
    %435 = arith.mulf %434, %275 : vector<8x14xf32>
    %436 = arith.addf %433, %435 : vector<8x14xf32>
    %c208_312 = arith.constant 208 : index
    %c0_313 = arith.constant 0 : index
    %437 = vector.load %arg11[%c208_312, %c0_313] : memref<224x14xf32, #tpu.memory_space<vmem>>, vector<8x14xf32>
    tpu.vector_store %arg11[%c208_312, %c0_313], %436 {strides = array<i32>} : memref<224x14xf32, #tpu.memory_space<vmem>>, vector<8x14xf32>,
    %cst_314 = arith.constant 7.500000e-01 : f32
    %438 = vector.broadcast %cst_314 : f32 to vector<8x14xf32>
    %439 = arith.mulf %438, %275 : vector<8x14xf32>
    %cst_315 = arith.constant 2.500000e-01 : f32
    %440 = vector.broadcast %cst_315 : f32 to vector<8x14xf32>
    %441 = arith.mulf %440, %275 : vector<8x14xf32>
    %442 = arith.addf %439, %441 : vector<8x14xf32>
    %c216 = arith.constant 216 : index
    %c0_316 = arith.constant 0 : index
    %443 = vector.load %arg11[%c216, %c0_316] : memref<224x14xf32, #tpu.memory_space<vmem>>, vector<8x14xf32>
    tpu.vector_store %arg11[%c216, %c0_316], %442 {strides = array<i32>} : memref<224x14xf32, #tpu.memory_space<vmem>>, vector<8x14xf32>,
    %c0_317 = arith.constant 0 : index
    %c0_318 = arith.constant 0 : index
    %444 = vector.load %arg11[%c0_317, %c0_318] : memref<224x14xf32, #tpu.memory_space<vmem>>, vector<224x14xf32>
    %cst_319 = arith.constant dense<0.000000e+00> : vector<224x28xf32>
    %445 = tpu.matmul %444, %3, %cst_319 {dimension_numbers = #tpu.dot_dimension_numbers<[1], [0], [0], [1], [0, 0, 1, 1], [], []>} : vector<224x14xf32>, vector<14x28xf32>, vector<224x28xf32> -> vector<224x28xf32>
    %446 = vector.extract_strided_slice %445 {offsets = [0, 0], sizes = [8, 28], strides = [1, 1]} : vector<224x28xf32> to vector<8x28xf32>
    %c0_320 = arith.constant 0 : index
    %c0_321 = arith.constant 0 : index
    %447 = vector.load %arg12[%c0_320, %c0_321] : memref<8x784xf32, #tpu.memory_space<vmem>>, vector<8x28xf32>
    tpu.vector_store %arg12[%c0_320, %c0_321], %446 {strides = array<i32>} : memref<8x784xf32, #tpu.memory_space<vmem>>, vector<8x28xf32>,
    %448 = vector.extract_strided_slice %445 {offsets = [8, 0], sizes = [8, 28], strides = [1, 1]} : vector<224x28xf32> to vector<8x28xf32>
    %c0_322 = arith.constant 0 : index
    %c28 = arith.constant 28 : index
    %449 = vector.load %arg12[%c0_322, %c28] : memref<8x784xf32, #tpu.memory_space<vmem>>, vector<8x28xf32>
    tpu.vector_store %arg12[%c0_322, %c28], %448 {strides = array<i32>} : memref<8x784xf32, #tpu.memory_space<vmem>>, vector<8x28xf32>,
    %450 = vector.extract_strided_slice %445 {offsets = [16, 0], sizes = [8, 28], strides = [1, 1]} : vector<224x28xf32> to vector<8x28xf32>
    %c0_323 = arith.constant 0 : index
    %c56_324 = arith.constant 56 : index
    %451 = vector.load %arg12[%c0_323, %c56_324] : memref<8x784xf32, #tpu.memory_space<vmem>>, vector<8x28xf32>
    tpu.vector_store %arg12[%c0_323, %c56_324], %450 {strides = array<i32>} : memref<8x784xf32, #tpu.memory_space<vmem>>, vector<8x28xf32>,
    %452 = vector.extract_strided_slice %445 {offsets = [24, 0], sizes = [8, 28], strides = [1, 1]} : vector<224x28xf32> to vector<8x28xf32>
    %c0_325 = arith.constant 0 : index
    %c84 = arith.constant 84 : index
    %453 = vector.load %arg12[%c0_325, %c84] : memref<8x784xf32, #tpu.memory_space<vmem>>, vector<8x28xf32>
    tpu.vector_store %arg12[%c0_325, %c84], %452 {strides = array<i32>} : memref<8x784xf32, #tpu.memory_space<vmem>>, vector<8x28xf32>,
    %454 = vector.extract_strided_slice %445 {offsets = [32, 0], sizes = [8, 28], strides = [1, 1]} : vector<224x28xf32> to vector<8x28xf32>
    %c0_326 = arith.constant 0 : index
    %c112_327 = arith.constant 112 : index
    %455 = vector.load %arg12[%c0_326, %c112_327] : memref<8x784xf32, #tpu.memory_space<vmem>>, vector<8x28xf32>
    tpu.vector_store %arg12[%c0_326, %c112_327], %454 {strides = array<i32>} : memref<8x784xf32, #tpu.memory_space<vmem>>, vector<8x28xf32>,
    %456 = vector.extract_strided_slice %445 {offsets = [40, 0], sizes = [8, 28], strides = [1, 1]} : vector<224x28xf32> to vector<8x28xf32>
    %c0_328 = arith.constant 0 : index
    %c140 = arith.constant 140 : index
    %457 = vector.load %arg12[%c0_328, %c140] : memref<8x784xf32, #tpu.memory_space<vmem>>, vector<8x28xf32>
    tpu.vector_store %arg12[%c0_328, %c140], %456 {strides = array<i32>} : memref<8x784xf32, #tpu.memory_space<vmem>>, vector<8x28xf32>,
    %458 = vector.extract_strided_slice %445 {offsets = [48, 0], sizes = [8, 28], strides = [1, 1]} : vector<224x28xf32> to vector<8x28xf32>
    %c0_329 = arith.constant 0 : index
    %c168_330 = arith.constant 168 : index
    %459 = vector.load %arg12[%c0_329, %c168_330] : memref<8x784xf32, #tpu.memory_space<vmem>>, vector<8x28xf32>
    tpu.vector_store %arg12[%c0_329, %c168_330], %458 {strides = array<i32>} : memref<8x784xf32, #tpu.memory_space<vmem>>, vector<8x28xf32>,
    %460 = vector.extract_strided_slice %445 {offsets = [56, 0], sizes = [8, 28], strides = [1, 1]} : vector<224x28xf32> to vector<8x28xf32>
    %c0_331 = arith.constant 0 : index
    %c196 = arith.constant 196 : index
    %461 = vector.load %arg12[%c0_331, %c196] : memref<8x784xf32, #tpu.memory_space<vmem>>, vector<8x28xf32>
    tpu.vector_store %arg12[%c0_331, %c196], %460 {strides = array<i32>} : memref<8x784xf32, #tpu.memory_space<vmem>>, vector<8x28xf32>,
    %462 = vector.extract_strided_slice %445 {offsets = [64, 0], sizes = [8, 28], strides = [1, 1]} : vector<224x28xf32> to vector<8x28xf32>
    %c0_332 = arith.constant 0 : index
    %c224_333 = arith.constant 224 : index
    %463 = vector.load %arg12[%c0_332, %c224_333] : memref<8x784xf32, #tpu.memory_space<vmem>>, vector<8x28xf32>
    tpu.vector_store %arg12[%c0_332, %c224_333], %462 {strides = array<i32>} : memref<8x784xf32, #tpu.memory_space<vmem>>, vector<8x28xf32>,
    %464 = vector.extract_strided_slice %445 {offsets = [72, 0], sizes = [8, 28], strides = [1, 1]} : vector<224x28xf32> to vector<8x28xf32>
    %c0_334 = arith.constant 0 : index
    %c252 = arith.constant 252 : index
    %465 = vector.load %arg12[%c0_334, %c252] : memref<8x784xf32, #tpu.memory_space<vmem>>, vector<8x28xf32>
    tpu.vector_store %arg12[%c0_334, %c252], %464 {strides = array<i32>} : memref<8x784xf32, #tpu.memory_space<vmem>>, vector<8x28xf32>,
    %466 = vector.extract_strided_slice %445 {offsets = [80, 0], sizes = [8, 28], strides = [1, 1]} : vector<224x28xf32> to vector<8x28xf32>
    %c0_335 = arith.constant 0 : index
    %c280 = arith.constant 280 : index
    %467 = vector.load %arg12[%c0_335, %c280] : memref<8x784xf32, #tpu.memory_space<vmem>>, vector<8x28xf32>
    tpu.vector_store %arg12[%c0_335, %c280], %466 {strides = array<i32>} : memref<8x784xf32, #tpu.memory_space<vmem>>, vector<8x28xf32>,
    %468 = vector.extract_strided_slice %445 {offsets = [88, 0], sizes = [8, 28], strides = [1, 1]} : vector<224x28xf32> to vector<8x28xf32>
    %c0_336 = arith.constant 0 : index
    %c308 = arith.constant 308 : index
    %469 = vector.load %arg12[%c0_336, %c308] : memref<8x784xf32, #tpu.memory_space<vmem>>, vector<8x28xf32>
    tpu.vector_store %arg12[%c0_336, %c308], %468 {strides = array<i32>} : memref<8x784xf32, #tpu.memory_space<vmem>>, vector<8x28xf32>,
    %470 = vector.extract_strided_slice %445 {offsets = [96, 0], sizes = [8, 28], strides = [1, 1]} : vector<224x28xf32> to vector<8x28xf32>
    %c0_337 = arith.constant 0 : index
    %c336 = arith.constant 336 : index
    %471 = vector.load %arg12[%c0_337, %c336] : memref<8x784xf32, #tpu.memory_space<vmem>>, vector<8x28xf32>
    tpu.vector_store %arg12[%c0_337, %c336], %470 {strides = array<i32>} : memref<8x784xf32, #tpu.memory_space<vmem>>, vector<8x28xf32>,
    %472 = vector.extract_strided_slice %445 {offsets = [104, 0], sizes = [8, 28], strides = [1, 1]} : vector<224x28xf32> to vector<8x28xf32>
    %c0_338 = arith.constant 0 : index
    %c364 = arith.constant 364 : index
    %473 = vector.load %arg12[%c0_338, %c364] : memref<8x784xf32, #tpu.memory_space<vmem>>, vector<8x28xf32>
    tpu.vector_store %arg12[%c0_338, %c364], %472 {strides = array<i32>} : memref<8x784xf32, #tpu.memory_space<vmem>>, vector<8x28xf32>,
    %474 = vector.extract_strided_slice %445 {offsets = [112, 0], sizes = [8, 28], strides = [1, 1]} : vector<224x28xf32> to vector<8x28xf32>
    %c0_339 = arith.constant 0 : index
    %c392 = arith.constant 392 : index
    %475 = vector.load %arg12[%c0_339, %c392] : memref<8x784xf32, #tpu.memory_space<vmem>>, vector<8x28xf32>
    tpu.vector_store %arg12[%c0_339, %c392], %474 {strides = array<i32>} : memref<8x784xf32, #tpu.memory_space<vmem>>, vector<8x28xf32>,
    %476 = vector.extract_strided_slice %445 {offsets = [120, 0], sizes = [8, 28], strides = [1, 1]} : vector<224x28xf32> to vector<8x28xf32>
    %c0_340 = arith.constant 0 : index
    %c420 = arith.constant 420 : index
    %477 = vector.load %arg12[%c0_340, %c420] : memref<8x784xf32, #tpu.memory_space<vmem>>, vector<8x28xf32>
    tpu.vector_store %arg12[%c0_340, %c420], %476 {strides = array<i32>} : memref<8x784xf32, #tpu.memory_space<vmem>>, vector<8x28xf32>,
    %478 = vector.extract_strided_slice %445 {offsets = [128, 0], sizes = [8, 28], strides = [1, 1]} : vector<224x28xf32> to vector<8x28xf32>
    %c0_341 = arith.constant 0 : index
    %c448 = arith.constant 448 : index
    %479 = vector.load %arg12[%c0_341, %c448] : memref<8x784xf32, #tpu.memory_space<vmem>>, vector<8x28xf32>
    tpu.vector_store %arg12[%c0_341, %c448], %478 {strides = array<i32>} : memref<8x784xf32, #tpu.memory_space<vmem>>, vector<8x28xf32>,
    %480 = vector.extract_strided_slice %445 {offsets = [136, 0], sizes = [8, 28], strides = [1, 1]} : vector<224x28xf32> to vector<8x28xf32>
    %c0_342 = arith.constant 0 : index
    %c476 = arith.constant 476 : index
    %481 = vector.load %arg12[%c0_342, %c476] : memref<8x784xf32, #tpu.memory_space<vmem>>, vector<8x28xf32>
    tpu.vector_store %arg12[%c0_342, %c476], %480 {strides = array<i32>} : memref<8x784xf32, #tpu.memory_space<vmem>>, vector<8x28xf32>,
    %482 = vector.extract_strided_slice %445 {offsets = [144, 0], sizes = [8, 28], strides = [1, 1]} : vector<224x28xf32> to vector<8x28xf32>
    %c0_343 = arith.constant 0 : index
    %c504 = arith.constant 504 : index
    %483 = vector.load %arg12[%c0_343, %c504] : memref<8x784xf32, #tpu.memory_space<vmem>>, vector<8x28xf32>
    tpu.vector_store %arg12[%c0_343, %c504], %482 {strides = array<i32>} : memref<8x784xf32, #tpu.memory_space<vmem>>, vector<8x28xf32>,
    %484 = vector.extract_strided_slice %445 {offsets = [152, 0], sizes = [8, 28], strides = [1, 1]} : vector<224x28xf32> to vector<8x28xf32>
    %c0_344 = arith.constant 0 : index
    %c532 = arith.constant 532 : index
    %485 = vector.load %arg12[%c0_344, %c532] : memref<8x784xf32, #tpu.memory_space<vmem>>, vector<8x28xf32>
    tpu.vector_store %arg12[%c0_344, %c532], %484 {strides = array<i32>} : memref<8x784xf32, #tpu.memory_space<vmem>>, vector<8x28xf32>,
    %486 = vector.extract_strided_slice %445 {offsets = [160, 0], sizes = [8, 28], strides = [1, 1]} : vector<224x28xf32> to vector<8x28xf32>
    %c0_345 = arith.constant 0 : index
    %c560 = arith.constant 560 : index
    %487 = vector.load %arg12[%c0_345, %c560] : memref<8x784xf32, #tpu.memory_space<vmem>>, vector<8x28xf32>
    tpu.vector_store %arg12[%c0_345, %c560], %486 {strides = array<i32>} : memref<8x784xf32, #tpu.memory_space<vmem>>, vector<8x28xf32>,
    %488 = vector.extract_strided_slice %445 {offsets = [168, 0], sizes = [8, 28], strides = [1, 1]} : vector<224x28xf32> to vector<8x28xf32>
    %c0_346 = arith.constant 0 : index
    %c588 = arith.constant 588 : index
    %489 = vector.load %arg12[%c0_346, %c588] : memref<8x784xf32, #tpu.memory_space<vmem>>, vector<8x28xf32>
    tpu.vector_store %arg12[%c0_346, %c588], %488 {strides = array<i32>} : memref<8x784xf32, #tpu.memory_space<vmem>>, vector<8x28xf32>,
    %490 = vector.extract_strided_slice %445 {offsets = [176, 0], sizes = [8, 28], strides = [1, 1]} : vector<224x28xf32> to vector<8x28xf32>
    %c0_347 = arith.constant 0 : index
    %c616 = arith.constant 616 : index
    %491 = vector.load %arg12[%c0_347, %c616] : memref<8x784xf32, #tpu.memory_space<vmem>>, vector<8x28xf32>
    tpu.vector_store %arg12[%c0_347, %c616], %490 {strides = array<i32>} : memref<8x784xf32, #tpu.memory_space<vmem>>, vector<8x28xf32>,
    %492 = vector.extract_strided_slice %445 {offsets = [184, 0], sizes = [8, 28], strides = [1, 1]} : vector<224x28xf32> to vector<8x28xf32>
    %c0_348 = arith.constant 0 : index
    %c644 = arith.constant 644 : index
    %493 = vector.load %arg12[%c0_348, %c644] : memref<8x784xf32, #tpu.memory_space<vmem>>, vector<8x28xf32>
    tpu.vector_store %arg12[%c0_348, %c644], %492 {strides = array<i32>} : memref<8x784xf32, #tpu.memory_space<vmem>>, vector<8x28xf32>,
    %494 = vector.extract_strided_slice %445 {offsets = [192, 0], sizes = [8, 28], strides = [1, 1]} : vector<224x28xf32> to vector<8x28xf32>
    %c0_349 = arith.constant 0 : index
    %c672 = arith.constant 672 : index
    %495 = vector.load %arg12[%c0_349, %c672] : memref<8x784xf32, #tpu.memory_space<vmem>>, vector<8x28xf32>
    tpu.vector_store %arg12[%c0_349, %c672], %494 {strides = array<i32>} : memref<8x784xf32, #tpu.memory_space<vmem>>, vector<8x28xf32>,
    %496 = vector.extract_strided_slice %445 {offsets = [200, 0], sizes = [8, 28], strides = [1, 1]} : vector<224x28xf32> to vector<8x28xf32>
    %c0_350 = arith.constant 0 : index
    %c700 = arith.constant 700 : index
    %497 = vector.load %arg12[%c0_350, %c700] : memref<8x784xf32, #tpu.memory_space<vmem>>, vector<8x28xf32>
    tpu.vector_store %arg12[%c0_350, %c700], %496 {strides = array<i32>} : memref<8x784xf32, #tpu.memory_space<vmem>>, vector<8x28xf32>,
    %498 = vector.extract_strided_slice %445 {offsets = [208, 0], sizes = [8, 28], strides = [1, 1]} : vector<224x28xf32> to vector<8x28xf32>
    %c0_351 = arith.constant 0 : index
    %c728 = arith.constant 728 : index
    %499 = vector.load %arg12[%c0_351, %c728] : memref<8x784xf32, #tpu.memory_space<vmem>>, vector<8x28xf32>
    tpu.vector_store %arg12[%c0_351, %c728], %498 {strides = array<i32>} : memref<8x784xf32, #tpu.memory_space<vmem>>, vector<8x28xf32>,
    %500 = vector.extract_strided_slice %445 {offsets = [216, 0], sizes = [8, 28], strides = [1, 1]} : vector<224x28xf32> to vector<8x28xf32>
    %c0_352 = arith.constant 0 : index
    %c756 = arith.constant 756 : index
    %501 = vector.load %arg12[%c0_352, %c756] : memref<8x784xf32, #tpu.memory_space<vmem>>, vector<8x28xf32>
    tpu.vector_store %arg12[%c0_352, %c756], %500 {strides = array<i32>} : memref<8x784xf32, #tpu.memory_space<vmem>>, vector<8x28xf32>,
    %c0_353 = arith.constant 0 : index
    %c0_354 = arith.constant 0 : index
    %c0_355 = arith.constant 0 : index
    %502 = vector.load %arg3[%c0_353, %c0_354, %c0_355] : memref<2x8x784xf32, #tpu.memory_space<vmem>>, vector<1x8x784xf32>
    %503 = vector.shape_cast %502 : vector<1x8x784xf32> to vector<8x784xf32>
    %504 = vector.broadcast %0 : f32 to vector<8x784xf32>
    %505 = arith.mulf %504, %503 : vector<8x784xf32>
    %c0_356 = arith.constant 0 : index
    %c0_357 = arith.constant 0 : index
    %506 = vector.load %arg12[%c0_356, %c0_357] : memref<8x784xf32, #tpu.memory_space<vmem>>, vector<8x784xf32>
    %507 = arith.addf %505, %506 : vector<8x784xf32>
    %cst_358 = arith.constant 0.000000e+00 : f32
    %508 = vector.broadcast %cst_358 : f32 to vector<8x784xf32>
    %509 = arith.maximumf %507, %508 : vector<8x784xf32>
    %c0_359 = arith.constant 0 : index
    %c0_360 = arith.constant 0 : index
    %c0_361 = arith.constant 0 : index
    %510 = vector.load %arg7[%c0_359, %c0_360, %c0_361] : memref<2x8x784xf32, #tpu.memory_space<vmem>>, vector<1x8x784xf32>
    %511 = vector.shape_cast %510 : vector<1x8x784xf32> to vector<8x784xf32>
    %512 = vector.shape_cast %509 : vector<8x784xf32> to vector<1x8x784xf32>
    tpu.vector_store %arg7[%c0_359, %c0_360, %c0_361], %512 {strides = array<i32>} : memref<2x8x784xf32, #tpu.memory_space<vmem>>, vector<1x8x784xf32>,
    %cst_362 = arith.constant dense<0.000000e+00> : vector<8xf32>
    %513 = vector.multi_reduction <add>, %509, %cst_362 [1] : vector<8x784xf32> to vector<8xf32>
    %514 = vector.shape_cast %513 : vector<8xf32> to vector<8x1xf32>
    %515 = arith.addf %4, %514 : vector<8x1xf32>
    %516 = arith.mulf %509, %509 : vector<8x784xf32>
    %cst_363 = arith.constant dense<0.000000e+00> : vector<8xf32>
    %517 = vector.multi_reduction <add>, %516, %cst_363 [1] : vector<8x784xf32> to vector<8xf32>
    %518 = vector.shape_cast %517 : vector<8xf32> to vector<8x1xf32>
    %519 = arith.addf %5, %518 : vector<8x1xf32>
    %c1_364 = arith.constant 1 : index
    %c0_365 = arith.constant 0 : index
    %c0_366 = arith.constant 0 : index
    %520 = vector.load %arg2[%c1_364, %c0_365, %c0_366] : memref<2x4x256xf32, #tpu.memory_space<vmem>>, vector<1x4x256xf32>
    %521 = vector.shape_cast %520 : vector<1x4x256xf32> to vector<4x256xf32>
    %cst_367 = arith.constant dense<0.000000e+00> : vector<72x256xf32>
    %522 = tpu.matmul %1, %521, %cst_367 {dimension_numbers = #tpu.dot_dimension_numbers<[1], [0], [0], [1], [0, 0, 1, 1], [], []>} : vector<72x4xf32>, vector<4x256xf32>, vector<72x256xf32> -> vector<72x256xf32>
    %c0_368 = arith.constant 0 : index
    %c0_369 = arith.constant 0 : index
    %523 = vector.load %arg10[%c0_368, %c0_369] : memref<72x256xf32, #tpu.memory_space<vmem>>, vector<72x256xf32>
    tpu.vector_store %arg10[%c0_368, %c0_369], %522 {strides = array<i32>} : memref<72x256xf32, #tpu.memory_space<vmem>>, vector<72x256xf32>,
    %c0_370 = arith.constant 0 : index
    %c0_371 = arith.constant 0 : index
    %524 = vector.load %arg10[%c0_370, %c0_371] : memref<72x256xf32, #tpu.memory_space<vmem>>, vector<8x14xf32>
    %c8_372 = arith.constant 8 : index
    %c1_373 = arith.constant 1 : index
    %525 = vector.load %arg10[%c8_372, %c1_373] : memref<72x256xf32, #tpu.memory_space<vmem>>, vector<8x14xf32>
    %526 = arith.addf %524, %525 : vector<8x14xf32>
    %c16_374 = arith.constant 16 : index
    %c2_375 = arith.constant 2 : index
    %527 = vector.load %arg10[%c16_374, %c2_375] : memref<72x256xf32, #tpu.memory_space<vmem>>, vector<8x14xf32>
    %528 = arith.addf %526, %527 : vector<8x14xf32>
    %c24_376 = arith.constant 24 : index
    %c16_377 = arith.constant 16 : index
    %529 = vector.load %arg10[%c24_376, %c16_377] : memref<72x256xf32, #tpu.memory_space<vmem>>, vector<8x14xf32>
    %530 = arith.addf %528, %529 : vector<8x14xf32>
    %c32_378 = arith.constant 32 : index
    %c17_379 = arith.constant 17 : index
    %531 = vector.load %arg10[%c32_378, %c17_379] : memref<72x256xf32, #tpu.memory_space<vmem>>, vector<8x14xf32>
    %532 = arith.addf %530, %531 : vector<8x14xf32>
    %c40_380 = arith.constant 40 : index
    %c18_381 = arith.constant 18 : index
    %533 = vector.load %arg10[%c40_380, %c18_381] : memref<72x256xf32, #tpu.memory_space<vmem>>, vector<8x14xf32>
    %534 = arith.addf %532, %533 : vector<8x14xf32>
    %c48_382 = arith.constant 48 : index
    %c32_383 = arith.constant 32 : index
    %535 = vector.load %arg10[%c48_382, %c32_383] : memref<72x256xf32, #tpu.memory_space<vmem>>, vector<8x14xf32>
    %536 = arith.addf %534, %535 : vector<8x14xf32>
    %c56_384 = arith.constant 56 : index
    %c33_385 = arith.constant 33 : index
    %537 = vector.load %arg10[%c56_384, %c33_385] : memref<72x256xf32, #tpu.memory_space<vmem>>, vector<8x14xf32>
    %538 = arith.addf %536, %537 : vector<8x14xf32>
    %c64_386 = arith.constant 64 : index
    %c34_387 = arith.constant 34 : index
    %539 = vector.load %arg10[%c64_386, %c34_387] : memref<72x256xf32, #tpu.memory_space<vmem>>, vector<8x14xf32>
    %540 = arith.addf %538, %539 : vector<8x14xf32>
    %541 = vector.broadcast %2 : vector<8x1xf32> to vector<8x14xf32>
    %542 = arith.addf %540, %541 : vector<8x14xf32>
    %c0_388 = arith.constant 0 : index
    %c16_389 = arith.constant 16 : index
    %543 = vector.load %arg10[%c0_388, %c16_389] : memref<72x256xf32, #tpu.memory_space<vmem>>, vector<8x14xf32>
    %c8_390 = arith.constant 8 : index
    %c17_391 = arith.constant 17 : index
    %544 = vector.load %arg10[%c8_390, %c17_391] : memref<72x256xf32, #tpu.memory_space<vmem>>, vector<8x14xf32>
    %545 = arith.addf %543, %544 : vector<8x14xf32>
    %c16_392 = arith.constant 16 : index
    %c18_393 = arith.constant 18 : index
    %546 = vector.load %arg10[%c16_392, %c18_393] : memref<72x256xf32, #tpu.memory_space<vmem>>, vector<8x14xf32>
    %547 = arith.addf %545, %546 : vector<8x14xf32>
    %c24_394 = arith.constant 24 : index
    %c32_395 = arith.constant 32 : index
    %548 = vector.load %arg10[%c24_394, %c32_395] : memref<72x256xf32, #tpu.memory_space<vmem>>, vector<8x14xf32>
    %549 = arith.addf %547, %548 : vector<8x14xf32>
    %c32_396 = arith.constant 32 : index
    %c33_397 = arith.constant 33 : index
    %550 = vector.load %arg10[%c32_396, %c33_397] : memref<72x256xf32, #tpu.memory_space<vmem>>, vector<8x14xf32>
    %551 = arith.addf %549, %550 : vector<8x14xf32>
    %c40_398 = arith.constant 40 : index
    %c34_399 = arith.constant 34 : index
    %552 = vector.load %arg10[%c40_398, %c34_399] : memref<72x256xf32, #tpu.memory_space<vmem>>, vector<8x14xf32>
    %553 = arith.addf %551, %552 : vector<8x14xf32>
    %c48_400 = arith.constant 48 : index
    %c48_401 = arith.constant 48 : index
    %554 = vector.load %arg10[%c48_400, %c48_401] : memref<72x256xf32, #tpu.memory_space<vmem>>, vector<8x14xf32>
    %555 = arith.addf %553, %554 : vector<8x14xf32>
    %c56_402 = arith.constant 56 : index
    %c49_403 = arith.constant 49 : index
    %556 = vector.load %arg10[%c56_402, %c49_403] : memref<72x256xf32, #tpu.memory_space<vmem>>, vector<8x14xf32>
    %557 = arith.addf %555, %556 : vector<8x14xf32>
    %c64_404 = arith.constant 64 : index
    %c50_405 = arith.constant 50 : index
    %558 = vector.load %arg10[%c64_404, %c50_405] : memref<72x256xf32, #tpu.memory_space<vmem>>, vector<8x14xf32>
    %559 = arith.addf %557, %558 : vector<8x14xf32>
    %560 = vector.broadcast %2 : vector<8x1xf32> to vector<8x14xf32>
    %561 = arith.addf %559, %560 : vector<8x14xf32>
    %c0_406 = arith.constant 0 : index
    %c32_407 = arith.constant 32 : index
    %562 = vector.load %arg10[%c0_406, %c32_407] : memref<72x256xf32, #tpu.memory_space<vmem>>, vector<8x14xf32>
    %c8_408 = arith.constant 8 : index
    %c33_409 = arith.constant 33 : index
    %563 = vector.load %arg10[%c8_408, %c33_409] : memref<72x256xf32, #tpu.memory_space<vmem>>, vector<8x14xf32>
    %564 = arith.addf %562, %563 : vector<8x14xf32>
    %c16_410 = arith.constant 16 : index
    %c34_411 = arith.constant 34 : index
    %565 = vector.load %arg10[%c16_410, %c34_411] : memref<72x256xf32, #tpu.memory_space<vmem>>, vector<8x14xf32>
    %566 = arith.addf %564, %565 : vector<8x14xf32>
    %c24_412 = arith.constant 24 : index
    %c48_413 = arith.constant 48 : index
    %567 = vector.load %arg10[%c24_412, %c48_413] : memref<72x256xf32, #tpu.memory_space<vmem>>, vector<8x14xf32>
    %568 = arith.addf %566, %567 : vector<8x14xf32>
    %c32_414 = arith.constant 32 : index
    %c49_415 = arith.constant 49 : index
    %569 = vector.load %arg10[%c32_414, %c49_415] : memref<72x256xf32, #tpu.memory_space<vmem>>, vector<8x14xf32>
    %570 = arith.addf %568, %569 : vector<8x14xf32>
    %c40_416 = arith.constant 40 : index
    %c50_417 = arith.constant 50 : index
    %571 = vector.load %arg10[%c40_416, %c50_417] : memref<72x256xf32, #tpu.memory_space<vmem>>, vector<8x14xf32>
    %572 = arith.addf %570, %571 : vector<8x14xf32>
    %c48_418 = arith.constant 48 : index
    %c64_419 = arith.constant 64 : index
    %573 = vector.load %arg10[%c48_418, %c64_419] : memref<72x256xf32, #tpu.memory_space<vmem>>, vector<8x14xf32>
    %574 = arith.addf %572, %573 : vector<8x14xf32>
    %c56_420 = arith.constant 56 : index
    %c65_421 = arith.constant 65 : index
    %575 = vector.load %arg10[%c56_420, %c65_421] : memref<72x256xf32, #tpu.memory_space<vmem>>, vector<8x14xf32>
    %576 = arith.addf %574, %575 : vector<8x14xf32>
    %c64_422 = arith.constant 64 : index
    %c66_423 = arith.constant 66 : index
    %577 = vector.load %arg10[%c64_422, %c66_423] : memref<72x256xf32, #tpu.memory_space<vmem>>, vector<8x14xf32>
    %578 = arith.addf %576, %577 : vector<8x14xf32>
    %579 = vector.broadcast %2 : vector<8x1xf32> to vector<8x14xf32>
    %580 = arith.addf %578, %579 : vector<8x14xf32>
    %c0_424 = arith.constant 0 : index
    %c48_425 = arith.constant 48 : index
    %581 = vector.load %arg10[%c0_424, %c48_425] : memref<72x256xf32, #tpu.memory_space<vmem>>, vector<8x14xf32>
    %c8_426 = arith.constant 8 : index
    %c49_427 = arith.constant 49 : index
    %582 = vector.load %arg10[%c8_426, %c49_427] : memref<72x256xf32, #tpu.memory_space<vmem>>, vector<8x14xf32>
    %583 = arith.addf %581, %582 : vector<8x14xf32>
    %c16_428 = arith.constant 16 : index
    %c50_429 = arith.constant 50 : index
    %584 = vector.load %arg10[%c16_428, %c50_429] : memref<72x256xf32, #tpu.memory_space<vmem>>, vector<8x14xf32>
    %585 = arith.addf %583, %584 : vector<8x14xf32>
    %c24_430 = arith.constant 24 : index
    %c64_431 = arith.constant 64 : index
    %586 = vector.load %arg10[%c24_430, %c64_431] : memref<72x256xf32, #tpu.memory_space<vmem>>, vector<8x14xf32>
    %587 = arith.addf %585, %586 : vector<8x14xf32>
    %c32_432 = arith.constant 32 : index
    %c65_433 = arith.constant 65 : index
    %588 = vector.load %arg10[%c32_432, %c65_433] : memref<72x256xf32, #tpu.memory_space<vmem>>, vector<8x14xf32>
    %589 = arith.addf %587, %588 : vector<8x14xf32>
    %c40_434 = arith.constant 40 : index
    %c66_435 = arith.constant 66 : index
    %590 = vector.load %arg10[%c40_434, %c66_435] : memref<72x256xf32, #tpu.memory_space<vmem>>, vector<8x14xf32>
    %591 = arith.addf %589, %590 : vector<8x14xf32>
    %c48_436 = arith.constant 48 : index
    %c80_437 = arith.constant 80 : index
    %592 = vector.load %arg10[%c48_436, %c80_437] : memref<72x256xf32, #tpu.memory_space<vmem>>, vector<8x14xf32>
    %593 = arith.addf %591, %592 : vector<8x14xf32>
    %c56_438 = arith.constant 56 : index
    %c81_439 = arith.constant 81 : index
    %594 = vector.load %arg10[%c56_438, %c81_439] : memref<72x256xf32, #tpu.memory_space<vmem>>, vector<8x14xf32>
    %595 = arith.addf %593, %594 : vector<8x14xf32>
    %c64_440 = arith.constant 64 : index
    %c82_441 = arith.constant 82 : index
    %596 = vector.load %arg10[%c64_440, %c82_441] : memref<72x256xf32, #tpu.memory_space<vmem>>, vector<8x14xf32>
    %597 = arith.addf %595, %596 : vector<8x14xf32>
    %598 = vector.broadcast %2 : vector<8x1xf32> to vector<8x14xf32>
    %599 = arith.addf %597, %598 : vector<8x14xf32>
    %c0_442 = arith.constant 0 : index
    %c64_443 = arith.constant 64 : index
    %600 = vector.load %arg10[%c0_442, %c64_443] : memref<72x256xf32, #tpu.memory_space<vmem>>, vector<8x14xf32>
    %c8_444 = arith.constant 8 : index
    %c65_445 = arith.constant 65 : index
    %601 = vector.load %arg10[%c8_444, %c65_445] : memref<72x256xf32, #tpu.memory_space<vmem>>, vector<8x14xf32>
    %602 = arith.addf %600, %601 : vector<8x14xf32>
    %c16_446 = arith.constant 16 : index
    %c66_447 = arith.constant 66 : index
    %603 = vector.load %arg10[%c16_446, %c66_447] : memref<72x256xf32, #tpu.memory_space<vmem>>, vector<8x14xf32>
    %604 = arith.addf %602, %603 : vector<8x14xf32>
    %c24_448 = arith.constant 24 : index
    %c80_449 = arith.constant 80 : index
    %605 = vector.load %arg10[%c24_448, %c80_449] : memref<72x256xf32, #tpu.memory_space<vmem>>, vector<8x14xf32>
    %606 = arith.addf %604, %605 : vector<8x14xf32>
    %c32_450 = arith.constant 32 : index
    %c81_451 = arith.constant 81 : index
    %607 = vector.load %arg10[%c32_450, %c81_451] : memref<72x256xf32, #tpu.memory_space<vmem>>, vector<8x14xf32>
    %608 = arith.addf %606, %607 : vector<8x14xf32>
    %c40_452 = arith.constant 40 : index
    %c82_453 = arith.constant 82 : index
    %609 = vector.load %arg10[%c40_452, %c82_453] : memref<72x256xf32, #tpu.memory_space<vmem>>, vector<8x14xf32>
    %610 = arith.addf %608, %609 : vector<8x14xf32>
    %c48_454 = arith.constant 48 : index
    %c96_455 = arith.constant 96 : index
    %611 = vector.load %arg10[%c48_454, %c96_455] : memref<72x256xf32, #tpu.memory_space<vmem>>, vector<8x14xf32>
    %612 = arith.addf %610, %611 : vector<8x14xf32>
    %c56_456 = arith.constant 56 : index
    %c97_457 = arith.constant 97 : index
    %613 = vector.load %arg10[%c56_456, %c97_457] : memref<72x256xf32, #tpu.memory_space<vmem>>, vector<8x14xf32>
    %614 = arith.addf %612, %613 : vector<8x14xf32>
    %c64_458 = arith.constant 64 : index
    %c98_459 = arith.constant 98 : index
    %615 = vector.load %arg10[%c64_458, %c98_459] : memref<72x256xf32, #tpu.memory_space<vmem>>, vector<8x14xf32>
    %616 = arith.addf %614, %615 : vector<8x14xf32>
    %617 = vector.broadcast %2 : vector<8x1xf32> to vector<8x14xf32>
    %618 = arith.addf %616, %617 : vector<8x14xf32>
    %c0_460 = arith.constant 0 : index
    %c80_461 = arith.constant 80 : index
    %619 = vector.load %arg10[%c0_460, %c80_461] : memref<72x256xf32, #tpu.memory_space<vmem>>, vector<8x14xf32>
    %c8_462 = arith.constant 8 : index
    %c81_463 = arith.constant 81 : index
    %620 = vector.load %arg10[%c8_462, %c81_463] : memref<72x256xf32, #tpu.memory_space<vmem>>, vector<8x14xf32>
    %621 = arith.addf %619, %620 : vector<8x14xf32>
    %c16_464 = arith.constant 16 : index
    %c82_465 = arith.constant 82 : index
    %622 = vector.load %arg10[%c16_464, %c82_465] : memref<72x256xf32, #tpu.memory_space<vmem>>, vector<8x14xf32>
    %623 = arith.addf %621, %622 : vector<8x14xf32>
    %c24_466 = arith.constant 24 : index
    %c96_467 = arith.constant 96 : index
    %624 = vector.load %arg10[%c24_466, %c96_467] : memref<72x256xf32, #tpu.memory_space<vmem>>, vector<8x14xf32>
    %625 = arith.addf %623, %624 : vector<8x14xf32>
    %c32_468 = arith.constant 32 : index
    %c97_469 = arith.constant 97 : index
    %626 = vector.load %arg10[%c32_468, %c97_469] : memref<72x256xf32, #tpu.memory_space<vmem>>, vector<8x14xf32>
    %627 = arith.addf %625, %626 : vector<8x14xf32>
    %c40_470 = arith.constant 40 : index
    %c98_471 = arith.constant 98 : index
    %628 = vector.load %arg10[%c40_470, %c98_471] : memref<72x256xf32, #tpu.memory_space<vmem>>, vector<8x14xf32>
    %629 = arith.addf %627, %628 : vector<8x14xf32>
    %c48_472 = arith.constant 48 : index
    %c112_473 = arith.constant 112 : index
    %630 = vector.load %arg10[%c48_472, %c112_473] : memref<72x256xf32, #tpu.memory_space<vmem>>, vector<8x14xf32>
    %631 = arith.addf %629, %630 : vector<8x14xf32>
    %c56_474 = arith.constant 56 : index
    %c113_475 = arith.constant 113 : index
    %632 = vector.load %arg10[%c56_474, %c113_475] : memref<72x256xf32, #tpu.memory_space<vmem>>, vector<8x14xf32>
    %633 = arith.addf %631, %632 : vector<8x14xf32>
    %c64_476 = arith.constant 64 : index
    %c114_477 = arith.constant 114 : index
    %634 = vector.load %arg10[%c64_476, %c114_477] : memref<72x256xf32, #tpu.memory_space<vmem>>, vector<8x14xf32>
    %635 = arith.addf %633, %634 : vector<8x14xf32>
    %636 = vector.broadcast %2 : vector<8x1xf32> to vector<8x14xf32>
    %637 = arith.addf %635, %636 : vector<8x14xf32>
    %c0_478 = arith.constant 0 : index
    %c96_479 = arith.constant 96 : index
    %638 = vector.load %arg10[%c0_478, %c96_479] : memref<72x256xf32, #tpu.memory_space<vmem>>, vector<8x14xf32>
    %c8_480 = arith.constant 8 : index
    %c97_481 = arith.constant 97 : index
    %639 = vector.load %arg10[%c8_480, %c97_481] : memref<72x256xf32, #tpu.memory_space<vmem>>, vector<8x14xf32>
    %640 = arith.addf %638, %639 : vector<8x14xf32>
    %c16_482 = arith.constant 16 : index
    %c98_483 = arith.constant 98 : index
    %641 = vector.load %arg10[%c16_482, %c98_483] : memref<72x256xf32, #tpu.memory_space<vmem>>, vector<8x14xf32>
    %642 = arith.addf %640, %641 : vector<8x14xf32>
    %c24_484 = arith.constant 24 : index
    %c112_485 = arith.constant 112 : index
    %643 = vector.load %arg10[%c24_484, %c112_485] : memref<72x256xf32, #tpu.memory_space<vmem>>, vector<8x14xf32>
    %644 = arith.addf %642, %643 : vector<8x14xf32>
    %c32_486 = arith.constant 32 : index
    %c113_487 = arith.constant 113 : index
    %645 = vector.load %arg10[%c32_486, %c113_487] : memref<72x256xf32, #tpu.memory_space<vmem>>, vector<8x14xf32>
    %646 = arith.addf %644, %645 : vector<8x14xf32>
    %c40_488 = arith.constant 40 : index
    %c114_489 = arith.constant 114 : index
    %647 = vector.load %arg10[%c40_488, %c114_489] : memref<72x256xf32, #tpu.memory_space<vmem>>, vector<8x14xf32>
    %648 = arith.addf %646, %647 : vector<8x14xf32>
    %c48_490 = arith.constant 48 : index
    %c128_491 = arith.constant 128 : index
    %649 = vector.load %arg10[%c48_490, %c128_491] : memref<72x256xf32, #tpu.memory_space<vmem>>, vector<8x14xf32>
    %650 = arith.addf %648, %649 : vector<8x14xf32>
    %c56_492 = arith.constant 56 : index
    %c129_493 = arith.constant 129 : index
    %651 = vector.load %arg10[%c56_492, %c129_493] : memref<72x256xf32, #tpu.memory_space<vmem>>, vector<8x14xf32>
    %652 = arith.addf %650, %651 : vector<8x14xf32>
    %c64_494 = arith.constant 64 : index
    %c130_495 = arith.constant 130 : index
    %653 = vector.load %arg10[%c64_494, %c130_495] : memref<72x256xf32, #tpu.memory_space<vmem>>, vector<8x14xf32>
    %654 = arith.addf %652, %653 : vector<8x14xf32>
    %655 = vector.broadcast %2 : vector<8x1xf32> to vector<8x14xf32>
    %656 = arith.addf %654, %655 : vector<8x14xf32>
    %c0_496 = arith.constant 0 : index
    %c112_497 = arith.constant 112 : index
    %657 = vector.load %arg10[%c0_496, %c112_497] : memref<72x256xf32, #tpu.memory_space<vmem>>, vector<8x14xf32>
    %c8_498 = arith.constant 8 : index
    %c113_499 = arith.constant 113 : index
    %658 = vector.load %arg10[%c8_498, %c113_499] : memref<72x256xf32, #tpu.memory_space<vmem>>, vector<8x14xf32>
    %659 = arith.addf %657, %658 : vector<8x14xf32>
    %c16_500 = arith.constant 16 : index
    %c114_501 = arith.constant 114 : index
    %660 = vector.load %arg10[%c16_500, %c114_501] : memref<72x256xf32, #tpu.memory_space<vmem>>, vector<8x14xf32>
    %661 = arith.addf %659, %660 : vector<8x14xf32>
    %c24_502 = arith.constant 24 : index
    %c128_503 = arith.constant 128 : index
    %662 = vector.load %arg10[%c24_502, %c128_503] : memref<72x256xf32, #tpu.memory_space<vmem>>, vector<8x14xf32>
    %663 = arith.addf %661, %662 : vector<8x14xf32>
    %c32_504 = arith.constant 32 : index
    %c129_505 = arith.constant 129 : index
    %664 = vector.load %arg10[%c32_504, %c129_505] : memref<72x256xf32, #tpu.memory_space<vmem>>, vector<8x14xf32>
    %665 = arith.addf %663, %664 : vector<8x14xf32>
    %c40_506 = arith.constant 40 : index
    %c130_507 = arith.constant 130 : index
    %666 = vector.load %arg10[%c40_506, %c130_507] : memref<72x256xf32, #tpu.memory_space<vmem>>, vector<8x14xf32>
    %667 = arith.addf %665, %666 : vector<8x14xf32>
    %c48_508 = arith.constant 48 : index
    %c144_509 = arith.constant 144 : index
    %668 = vector.load %arg10[%c48_508, %c144_509] : memref<72x256xf32, #tpu.memory_space<vmem>>, vector<8x14xf32>
    %669 = arith.addf %667, %668 : vector<8x14xf32>
    %c56_510 = arith.constant 56 : index
    %c145_511 = arith.constant 145 : index
    %670 = vector.load %arg10[%c56_510, %c145_511] : memref<72x256xf32, #tpu.memory_space<vmem>>, vector<8x14xf32>
    %671 = arith.addf %669, %670 : vector<8x14xf32>
    %c64_512 = arith.constant 64 : index
    %c146_513 = arith.constant 146 : index
    %672 = vector.load %arg10[%c64_512, %c146_513] : memref<72x256xf32, #tpu.memory_space<vmem>>, vector<8x14xf32>
    %673 = arith.addf %671, %672 : vector<8x14xf32>
    %674 = vector.broadcast %2 : vector<8x1xf32> to vector<8x14xf32>
    %675 = arith.addf %673, %674 : vector<8x14xf32>
    %c0_514 = arith.constant 0 : index
    %c128_515 = arith.constant 128 : index
    %676 = vector.load %arg10[%c0_514, %c128_515] : memref<72x256xf32, #tpu.memory_space<vmem>>, vector<8x14xf32>
    %c8_516 = arith.constant 8 : index
    %c129_517 = arith.constant 129 : index
    %677 = vector.load %arg10[%c8_516, %c129_517] : memref<72x256xf32, #tpu.memory_space<vmem>>, vector<8x14xf32>
    %678 = arith.addf %676, %677 : vector<8x14xf32>
    %c16_518 = arith.constant 16 : index
    %c130_519 = arith.constant 130 : index
    %679 = vector.load %arg10[%c16_518, %c130_519] : memref<72x256xf32, #tpu.memory_space<vmem>>, vector<8x14xf32>
    %680 = arith.addf %678, %679 : vector<8x14xf32>
    %c24_520 = arith.constant 24 : index
    %c144_521 = arith.constant 144 : index
    %681 = vector.load %arg10[%c24_520, %c144_521] : memref<72x256xf32, #tpu.memory_space<vmem>>, vector<8x14xf32>
    %682 = arith.addf %680, %681 : vector<8x14xf32>
    %c32_522 = arith.constant 32 : index
    %c145_523 = arith.constant 145 : index
    %683 = vector.load %arg10[%c32_522, %c145_523] : memref<72x256xf32, #tpu.memory_space<vmem>>, vector<8x14xf32>
    %684 = arith.addf %682, %683 : vector<8x14xf32>
    %c40_524 = arith.constant 40 : index
    %c146_525 = arith.constant 146 : index
    %685 = vector.load %arg10[%c40_524, %c146_525] : memref<72x256xf32, #tpu.memory_space<vmem>>, vector<8x14xf32>
    %686 = arith.addf %684, %685 : vector<8x14xf32>
    %c48_526 = arith.constant 48 : index
    %c160_527 = arith.constant 160 : index
    %687 = vector.load %arg10[%c48_526, %c160_527] : memref<72x256xf32, #tpu.memory_space<vmem>>, vector<8x14xf32>
    %688 = arith.addf %686, %687 : vector<8x14xf32>
    %c56_528 = arith.constant 56 : index
    %c161_529 = arith.constant 161 : index
    %689 = vector.load %arg10[%c56_528, %c161_529] : memref<72x256xf32, #tpu.memory_space<vmem>>, vector<8x14xf32>
    %690 = arith.addf %688, %689 : vector<8x14xf32>
    %c64_530 = arith.constant 64 : index
    %c162_531 = arith.constant 162 : index
    %691 = vector.load %arg10[%c64_530, %c162_531] : memref<72x256xf32, #tpu.memory_space<vmem>>, vector<8x14xf32>
    %692 = arith.addf %690, %691 : vector<8x14xf32>
    %693 = vector.broadcast %2 : vector<8x1xf32> to vector<8x14xf32>
    %694 = arith.addf %692, %693 : vector<8x14xf32>
    %c0_532 = arith.constant 0 : index
    %c144_533 = arith.constant 144 : index
    %695 = vector.load %arg10[%c0_532, %c144_533] : memref<72x256xf32, #tpu.memory_space<vmem>>, vector<8x14xf32>
    %c8_534 = arith.constant 8 : index
    %c145_535 = arith.constant 145 : index
    %696 = vector.load %arg10[%c8_534, %c145_535] : memref<72x256xf32, #tpu.memory_space<vmem>>, vector<8x14xf32>
    %697 = arith.addf %695, %696 : vector<8x14xf32>
    %c16_536 = arith.constant 16 : index
    %c146_537 = arith.constant 146 : index
    %698 = vector.load %arg10[%c16_536, %c146_537] : memref<72x256xf32, #tpu.memory_space<vmem>>, vector<8x14xf32>
    %699 = arith.addf %697, %698 : vector<8x14xf32>
    %c24_538 = arith.constant 24 : index
    %c160_539 = arith.constant 160 : index
    %700 = vector.load %arg10[%c24_538, %c160_539] : memref<72x256xf32, #tpu.memory_space<vmem>>, vector<8x14xf32>
    %701 = arith.addf %699, %700 : vector<8x14xf32>
    %c32_540 = arith.constant 32 : index
    %c161_541 = arith.constant 161 : index
    %702 = vector.load %arg10[%c32_540, %c161_541] : memref<72x256xf32, #tpu.memory_space<vmem>>, vector<8x14xf32>
    %703 = arith.addf %701, %702 : vector<8x14xf32>
    %c40_542 = arith.constant 40 : index
    %c162_543 = arith.constant 162 : index
    %704 = vector.load %arg10[%c40_542, %c162_543] : memref<72x256xf32, #tpu.memory_space<vmem>>, vector<8x14xf32>
    %705 = arith.addf %703, %704 : vector<8x14xf32>
    %c48_544 = arith.constant 48 : index
    %c176_545 = arith.constant 176 : index
    %706 = vector.load %arg10[%c48_544, %c176_545] : memref<72x256xf32, #tpu.memory_space<vmem>>, vector<8x14xf32>
    %707 = arith.addf %705, %706 : vector<8x14xf32>
    %c56_546 = arith.constant 56 : index
    %c177_547 = arith.constant 177 : index
    %708 = vector.load %arg10[%c56_546, %c177_547] : memref<72x256xf32, #tpu.memory_space<vmem>>, vector<8x14xf32>
    %709 = arith.addf %707, %708 : vector<8x14xf32>
    %c64_548 = arith.constant 64 : index
    %c178_549 = arith.constant 178 : index
    %710 = vector.load %arg10[%c64_548, %c178_549] : memref<72x256xf32, #tpu.memory_space<vmem>>, vector<8x14xf32>
    %711 = arith.addf %709, %710 : vector<8x14xf32>
    %712 = vector.broadcast %2 : vector<8x1xf32> to vector<8x14xf32>
    %713 = arith.addf %711, %712 : vector<8x14xf32>
    %c0_550 = arith.constant 0 : index
    %c160_551 = arith.constant 160 : index
    %714 = vector.load %arg10[%c0_550, %c160_551] : memref<72x256xf32, #tpu.memory_space<vmem>>, vector<8x14xf32>
    %c8_552 = arith.constant 8 : index
    %c161_553 = arith.constant 161 : index
    %715 = vector.load %arg10[%c8_552, %c161_553] : memref<72x256xf32, #tpu.memory_space<vmem>>, vector<8x14xf32>
    %716 = arith.addf %714, %715 : vector<8x14xf32>
    %c16_554 = arith.constant 16 : index
    %c162_555 = arith.constant 162 : index
    %717 = vector.load %arg10[%c16_554, %c162_555] : memref<72x256xf32, #tpu.memory_space<vmem>>, vector<8x14xf32>
    %718 = arith.addf %716, %717 : vector<8x14xf32>
    %c24_556 = arith.constant 24 : index
    %c176_557 = arith.constant 176 : index
    %719 = vector.load %arg10[%c24_556, %c176_557] : memref<72x256xf32, #tpu.memory_space<vmem>>, vector<8x14xf32>
    %720 = arith.addf %718, %719 : vector<8x14xf32>
    %c32_558 = arith.constant 32 : index
    %c177_559 = arith.constant 177 : index
    %721 = vector.load %arg10[%c32_558, %c177_559] : memref<72x256xf32, #tpu.memory_space<vmem>>, vector<8x14xf32>
    %722 = arith.addf %720, %721 : vector<8x14xf32>
    %c40_560 = arith.constant 40 : index
    %c178_561 = arith.constant 178 : index
    %723 = vector.load %arg10[%c40_560, %c178_561] : memref<72x256xf32, #tpu.memory_space<vmem>>, vector<8x14xf32>
    %724 = arith.addf %722, %723 : vector<8x14xf32>
    %c48_562 = arith.constant 48 : index
    %c192_563 = arith.constant 192 : index
    %725 = vector.load %arg10[%c48_562, %c192_563] : memref<72x256xf32, #tpu.memory_space<vmem>>, vector<8x14xf32>
    %726 = arith.addf %724, %725 : vector<8x14xf32>
    %c56_564 = arith.constant 56 : index
    %c193_565 = arith.constant 193 : index
    %727 = vector.load %arg10[%c56_564, %c193_565] : memref<72x256xf32, #tpu.memory_space<vmem>>, vector<8x14xf32>
    %728 = arith.addf %726, %727 : vector<8x14xf32>
    %c64_566 = arith.constant 64 : index
    %c194_567 = arith.constant 194 : index
    %729 = vector.load %arg10[%c64_566, %c194_567] : memref<72x256xf32, #tpu.memory_space<vmem>>, vector<8x14xf32>
    %730 = arith.addf %728, %729 : vector<8x14xf32>
    %731 = vector.broadcast %2 : vector<8x1xf32> to vector<8x14xf32>
    %732 = arith.addf %730, %731 : vector<8x14xf32>
    %c0_568 = arith.constant 0 : index
    %c176_569 = arith.constant 176 : index
    %733 = vector.load %arg10[%c0_568, %c176_569] : memref<72x256xf32, #tpu.memory_space<vmem>>, vector<8x14xf32>
    %c8_570 = arith.constant 8 : index
    %c177_571 = arith.constant 177 : index
    %734 = vector.load %arg10[%c8_570, %c177_571] : memref<72x256xf32, #tpu.memory_space<vmem>>, vector<8x14xf32>
    %735 = arith.addf %733, %734 : vector<8x14xf32>
    %c16_572 = arith.constant 16 : index
    %c178_573 = arith.constant 178 : index
    %736 = vector.load %arg10[%c16_572, %c178_573] : memref<72x256xf32, #tpu.memory_space<vmem>>, vector<8x14xf32>
    %737 = arith.addf %735, %736 : vector<8x14xf32>
    %c24_574 = arith.constant 24 : index
    %c192_575 = arith.constant 192 : index
    %738 = vector.load %arg10[%c24_574, %c192_575] : memref<72x256xf32, #tpu.memory_space<vmem>>, vector<8x14xf32>
    %739 = arith.addf %737, %738 : vector<8x14xf32>
    %c32_576 = arith.constant 32 : index
    %c193_577 = arith.constant 193 : index
    %740 = vector.load %arg10[%c32_576, %c193_577] : memref<72x256xf32, #tpu.memory_space<vmem>>, vector<8x14xf32>
    %741 = arith.addf %739, %740 : vector<8x14xf32>
    %c40_578 = arith.constant 40 : index
    %c194_579 = arith.constant 194 : index
    %742 = vector.load %arg10[%c40_578, %c194_579] : memref<72x256xf32, #tpu.memory_space<vmem>>, vector<8x14xf32>
    %743 = arith.addf %741, %742 : vector<8x14xf32>
    %c48_580 = arith.constant 48 : index
    %c208_581 = arith.constant 208 : index
    %744 = vector.load %arg10[%c48_580, %c208_581] : memref<72x256xf32, #tpu.memory_space<vmem>>, vector<8x14xf32>
    %745 = arith.addf %743, %744 : vector<8x14xf32>
    %c56_582 = arith.constant 56 : index
    %c209_583 = arith.constant 209 : index
    %746 = vector.load %arg10[%c56_582, %c209_583] : memref<72x256xf32, #tpu.memory_space<vmem>>, vector<8x14xf32>
    %747 = arith.addf %745, %746 : vector<8x14xf32>
    %c64_584 = arith.constant 64 : index
    %c210_585 = arith.constant 210 : index
    %748 = vector.load %arg10[%c64_584, %c210_585] : memref<72x256xf32, #tpu.memory_space<vmem>>, vector<8x14xf32>
    %749 = arith.addf %747, %748 : vector<8x14xf32>
    %750 = vector.broadcast %2 : vector<8x1xf32> to vector<8x14xf32>
    %751 = arith.addf %749, %750 : vector<8x14xf32>
    %c0_586 = arith.constant 0 : index
    %c192_587 = arith.constant 192 : index
    %752 = vector.load %arg10[%c0_586, %c192_587] : memref<72x256xf32, #tpu.memory_space<vmem>>, vector<8x14xf32>
    %c8_588 = arith.constant 8 : index
    %c193_589 = arith.constant 193 : index
    %753 = vector.load %arg10[%c8_588, %c193_589] : memref<72x256xf32, #tpu.memory_space<vmem>>, vector<8x14xf32>
    %754 = arith.addf %752, %753 : vector<8x14xf32>
    %c16_590 = arith.constant 16 : index
    %c194_591 = arith.constant 194 : index
    %755 = vector.load %arg10[%c16_590, %c194_591] : memref<72x256xf32, #tpu.memory_space<vmem>>, vector<8x14xf32>
    %756 = arith.addf %754, %755 : vector<8x14xf32>
    %c24_592 = arith.constant 24 : index
    %c208_593 = arith.constant 208 : index
    %757 = vector.load %arg10[%c24_592, %c208_593] : memref<72x256xf32, #tpu.memory_space<vmem>>, vector<8x14xf32>
    %758 = arith.addf %756, %757 : vector<8x14xf32>
    %c32_594 = arith.constant 32 : index
    %c209_595 = arith.constant 209 : index
    %759 = vector.load %arg10[%c32_594, %c209_595] : memref<72x256xf32, #tpu.memory_space<vmem>>, vector<8x14xf32>
    %760 = arith.addf %758, %759 : vector<8x14xf32>
    %c40_596 = arith.constant 40 : index
    %c210_597 = arith.constant 210 : index
    %761 = vector.load %arg10[%c40_596, %c210_597] : memref<72x256xf32, #tpu.memory_space<vmem>>, vector<8x14xf32>
    %762 = arith.addf %760, %761 : vector<8x14xf32>
    %c48_598 = arith.constant 48 : index
    %c224_599 = arith.constant 224 : index
    %763 = vector.load %arg10[%c48_598, %c224_599] : memref<72x256xf32, #tpu.memory_space<vmem>>, vector<8x14xf32>
    %764 = arith.addf %762, %763 : vector<8x14xf32>
    %c56_600 = arith.constant 56 : index
    %c225_601 = arith.constant 225 : index
    %765 = vector.load %arg10[%c56_600, %c225_601] : memref<72x256xf32, #tpu.memory_space<vmem>>, vector<8x14xf32>
    %766 = arith.addf %764, %765 : vector<8x14xf32>
    %c64_602 = arith.constant 64 : index
    %c226_603 = arith.constant 226 : index
    %767 = vector.load %arg10[%c64_602, %c226_603] : memref<72x256xf32, #tpu.memory_space<vmem>>, vector<8x14xf32>
    %768 = arith.addf %766, %767 : vector<8x14xf32>
    %769 = vector.broadcast %2 : vector<8x1xf32> to vector<8x14xf32>
    %770 = arith.addf %768, %769 : vector<8x14xf32>
    %c0_604 = arith.constant 0 : index
    %c208_605 = arith.constant 208 : index
    %771 = vector.load %arg10[%c0_604, %c208_605] : memref<72x256xf32, #tpu.memory_space<vmem>>, vector<8x14xf32>
    %c8_606 = arith.constant 8 : index
    %c209_607 = arith.constant 209 : index
    %772 = vector.load %arg10[%c8_606, %c209_607] : memref<72x256xf32, #tpu.memory_space<vmem>>, vector<8x14xf32>
    %773 = arith.addf %771, %772 : vector<8x14xf32>
    %c16_608 = arith.constant 16 : index
    %c210_609 = arith.constant 210 : index
    %774 = vector.load %arg10[%c16_608, %c210_609] : memref<72x256xf32, #tpu.memory_space<vmem>>, vector<8x14xf32>
    %775 = arith.addf %773, %774 : vector<8x14xf32>
    %c24_610 = arith.constant 24 : index
    %c224_611 = arith.constant 224 : index
    %776 = vector.load %arg10[%c24_610, %c224_611] : memref<72x256xf32, #tpu.memory_space<vmem>>, vector<8x14xf32>
    %777 = arith.addf %775, %776 : vector<8x14xf32>
    %c32_612 = arith.constant 32 : index
    %c225_613 = arith.constant 225 : index
    %778 = vector.load %arg10[%c32_612, %c225_613] : memref<72x256xf32, #tpu.memory_space<vmem>>, vector<8x14xf32>
    %779 = arith.addf %777, %778 : vector<8x14xf32>
    %c40_614 = arith.constant 40 : index
    %c226_615 = arith.constant 226 : index
    %780 = vector.load %arg10[%c40_614, %c226_615] : memref<72x256xf32, #tpu.memory_space<vmem>>, vector<8x14xf32>
    %781 = arith.addf %779, %780 : vector<8x14xf32>
    %c48_616 = arith.constant 48 : index
    %c240_617 = arith.constant 240 : index
    %782 = vector.load %arg10[%c48_616, %c240_617] : memref<72x256xf32, #tpu.memory_space<vmem>>, vector<8x14xf32>
    %783 = arith.addf %781, %782 : vector<8x14xf32>
    %c56_618 = arith.constant 56 : index
    %c241_619 = arith.constant 241 : index
    %784 = vector.load %arg10[%c56_618, %c241_619] : memref<72x256xf32, #tpu.memory_space<vmem>>, vector<8x14xf32>
    %785 = arith.addf %783, %784 : vector<8x14xf32>
    %c64_620 = arith.constant 64 : index
    %c242_621 = arith.constant 242 : index
    %786 = vector.load %arg10[%c64_620, %c242_621] : memref<72x256xf32, #tpu.memory_space<vmem>>, vector<8x14xf32>
    %787 = arith.addf %785, %786 : vector<8x14xf32>
    %788 = vector.broadcast %2 : vector<8x1xf32> to vector<8x14xf32>
    %789 = arith.addf %787, %788 : vector<8x14xf32>
    %cst_622 = arith.constant 1.000000e+00 : f32
    %790 = vector.broadcast %cst_622 : f32 to vector<8x14xf32>
    %791 = arith.mulf %790, %542 : vector<8x14xf32>
    %cst_623 = arith.constant 0.000000e+00 : f32
    %792 = vector.broadcast %cst_623 : f32 to vector<8x14xf32>
    %793 = arith.mulf %792, %561 : vector<8x14xf32>
    %794 = arith.addf %791, %793 : vector<8x14xf32>
    %c0_624 = arith.constant 0 : index
    %c0_625 = arith.constant 0 : index
    %795 = vector.load %arg11[%c0_624, %c0_625] : memref<224x14xf32, #tpu.memory_space<vmem>>, vector<8x14xf32>
    tpu.vector_store %arg11[%c0_624, %c0_625], %794 {strides = array<i32>} : memref<224x14xf32, #tpu.memory_space<vmem>>, vector<8x14xf32>,
    %cst_626 = arith.constant 7.500000e-01 : f32
    %796 = vector.broadcast %cst_626 : f32 to vector<8x14xf32>
    %797 = arith.mulf %796, %542 : vector<8x14xf32>
    %cst_627 = arith.constant 2.500000e-01 : f32
    %798 = vector.broadcast %cst_627 : f32 to vector<8x14xf32>
    %799 = arith.mulf %798, %561 : vector<8x14xf32>
    %800 = arith.addf %797, %799 : vector<8x14xf32>
    %c8_628 = arith.constant 8 : index
    %c0_629 = arith.constant 0 : index
    %801 = vector.load %arg11[%c8_628, %c0_629] : memref<224x14xf32, #tpu.memory_space<vmem>>, vector<8x14xf32>
    tpu.vector_store %arg11[%c8_628, %c0_629], %800 {strides = array<i32>} : memref<224x14xf32, #tpu.memory_space<vmem>>, vector<8x14xf32>,
    %cst_630 = arith.constant 2.500000e-01 : f32
    %802 = vector.broadcast %cst_630 : f32 to vector<8x14xf32>
    %803 = arith.mulf %802, %542 : vector<8x14xf32>
    %cst_631 = arith.constant 7.500000e-01 : f32
    %804 = vector.broadcast %cst_631 : f32 to vector<8x14xf32>
    %805 = arith.mulf %804, %561 : vector<8x14xf32>
    %806 = arith.addf %803, %805 : vector<8x14xf32>
    %c16_632 = arith.constant 16 : index
    %c0_633 = arith.constant 0 : index
    %807 = vector.load %arg11[%c16_632, %c0_633] : memref<224x14xf32, #tpu.memory_space<vmem>>, vector<8x14xf32>
    tpu.vector_store %arg11[%c16_632, %c0_633], %806 {strides = array<i32>} : memref<224x14xf32, #tpu.memory_space<vmem>>, vector<8x14xf32>,
    %cst_634 = arith.constant 7.500000e-01 : f32
    %808 = vector.broadcast %cst_634 : f32 to vector<8x14xf32>
    %809 = arith.mulf %808, %561 : vector<8x14xf32>
    %cst_635 = arith.constant 2.500000e-01 : f32
    %810 = vector.broadcast %cst_635 : f32 to vector<8x14xf32>
    %811 = arith.mulf %810, %580 : vector<8x14xf32>
    %812 = arith.addf %809, %811 : vector<8x14xf32>
    %c24_636 = arith.constant 24 : index
    %c0_637 = arith.constant 0 : index
    %813 = vector.load %arg11[%c24_636, %c0_637] : memref<224x14xf32, #tpu.memory_space<vmem>>, vector<8x14xf32>
    tpu.vector_store %arg11[%c24_636, %c0_637], %812 {strides = array<i32>} : memref<224x14xf32, #tpu.memory_space<vmem>>, vector<8x14xf32>,
    %cst_638 = arith.constant 2.500000e-01 : f32
    %814 = vector.broadcast %cst_638 : f32 to vector<8x14xf32>
    %815 = arith.mulf %814, %561 : vector<8x14xf32>
    %cst_639 = arith.constant 7.500000e-01 : f32
    %816 = vector.broadcast %cst_639 : f32 to vector<8x14xf32>
    %817 = arith.mulf %816, %580 : vector<8x14xf32>
    %818 = arith.addf %815, %817 : vector<8x14xf32>
    %c32_640 = arith.constant 32 : index
    %c0_641 = arith.constant 0 : index
    %819 = vector.load %arg11[%c32_640, %c0_641] : memref<224x14xf32, #tpu.memory_space<vmem>>, vector<8x14xf32>
    tpu.vector_store %arg11[%c32_640, %c0_641], %818 {strides = array<i32>} : memref<224x14xf32, #tpu.memory_space<vmem>>, vector<8x14xf32>,
    %cst_642 = arith.constant 7.500000e-01 : f32
    %820 = vector.broadcast %cst_642 : f32 to vector<8x14xf32>
    %821 = arith.mulf %820, %580 : vector<8x14xf32>
    %cst_643 = arith.constant 2.500000e-01 : f32
    %822 = vector.broadcast %cst_643 : f32 to vector<8x14xf32>
    %823 = arith.mulf %822, %599 : vector<8x14xf32>
    %824 = arith.addf %821, %823 : vector<8x14xf32>
    %c40_644 = arith.constant 40 : index
    %c0_645 = arith.constant 0 : index
    %825 = vector.load %arg11[%c40_644, %c0_645] : memref<224x14xf32, #tpu.memory_space<vmem>>, vector<8x14xf32>
    tpu.vector_store %arg11[%c40_644, %c0_645], %824 {strides = array<i32>} : memref<224x14xf32, #tpu.memory_space<vmem>>, vector<8x14xf32>,
    %cst_646 = arith.constant 2.500000e-01 : f32
    %826 = vector.broadcast %cst_646 : f32 to vector<8x14xf32>
    %827 = arith.mulf %826, %580 : vector<8x14xf32>
    %cst_647 = arith.constant 7.500000e-01 : f32
    %828 = vector.broadcast %cst_647 : f32 to vector<8x14xf32>
    %829 = arith.mulf %828, %599 : vector<8x14xf32>
    %830 = arith.addf %827, %829 : vector<8x14xf32>
    %c48_648 = arith.constant 48 : index
    %c0_649 = arith.constant 0 : index
    %831 = vector.load %arg11[%c48_648, %c0_649] : memref<224x14xf32, #tpu.memory_space<vmem>>, vector<8x14xf32>
    tpu.vector_store %arg11[%c48_648, %c0_649], %830 {strides = array<i32>} : memref<224x14xf32, #tpu.memory_space<vmem>>, vector<8x14xf32>,
    %cst_650 = arith.constant 7.500000e-01 : f32
    %832 = vector.broadcast %cst_650 : f32 to vector<8x14xf32>
    %833 = arith.mulf %832, %599 : vector<8x14xf32>
    %cst_651 = arith.constant 2.500000e-01 : f32
    %834 = vector.broadcast %cst_651 : f32 to vector<8x14xf32>
    %835 = arith.mulf %834, %618 : vector<8x14xf32>
    %836 = arith.addf %833, %835 : vector<8x14xf32>
    %c56_652 = arith.constant 56 : index
    %c0_653 = arith.constant 0 : index
    %837 = vector.load %arg11[%c56_652, %c0_653] : memref<224x14xf32, #tpu.memory_space<vmem>>, vector<8x14xf32>
    tpu.vector_store %arg11[%c56_652, %c0_653], %836 {strides = array<i32>} : memref<224x14xf32, #tpu.memory_space<vmem>>, vector<8x14xf32>,
    %cst_654 = arith.constant 2.500000e-01 : f32
    %838 = vector.broadcast %cst_654 : f32 to vector<8x14xf32>
    %839 = arith.mulf %838, %599 : vector<8x14xf32>
    %cst_655 = arith.constant 7.500000e-01 : f32
    %840 = vector.broadcast %cst_655 : f32 to vector<8x14xf32>
    %841 = arith.mulf %840, %618 : vector<8x14xf32>
    %842 = arith.addf %839, %841 : vector<8x14xf32>
    %c64_656 = arith.constant 64 : index
    %c0_657 = arith.constant 0 : index
    %843 = vector.load %arg11[%c64_656, %c0_657] : memref<224x14xf32, #tpu.memory_space<vmem>>, vector<8x14xf32>
    tpu.vector_store %arg11[%c64_656, %c0_657], %842 {strides = array<i32>} : memref<224x14xf32, #tpu.memory_space<vmem>>, vector<8x14xf32>,
    %cst_658 = arith.constant 7.500000e-01 : f32
    %844 = vector.broadcast %cst_658 : f32 to vector<8x14xf32>
    %845 = arith.mulf %844, %618 : vector<8x14xf32>
    %cst_659 = arith.constant 2.500000e-01 : f32
    %846 = vector.broadcast %cst_659 : f32 to vector<8x14xf32>
    %847 = arith.mulf %846, %637 : vector<8x14xf32>
    %848 = arith.addf %845, %847 : vector<8x14xf32>
    %c72_660 = arith.constant 72 : index
    %c0_661 = arith.constant 0 : index
    %849 = vector.load %arg11[%c72_660, %c0_661] : memref<224x14xf32, #tpu.memory_space<vmem>>, vector<8x14xf32>
    tpu.vector_store %arg11[%c72_660, %c0_661], %848 {strides = array<i32>} : memref<224x14xf32, #tpu.memory_space<vmem>>, vector<8x14xf32>,
    %cst_662 = arith.constant 2.500000e-01 : f32
    %850 = vector.broadcast %cst_662 : f32 to vector<8x14xf32>
    %851 = arith.mulf %850, %618 : vector<8x14xf32>
    %cst_663 = arith.constant 7.500000e-01 : f32
    %852 = vector.broadcast %cst_663 : f32 to vector<8x14xf32>
    %853 = arith.mulf %852, %637 : vector<8x14xf32>
    %854 = arith.addf %851, %853 : vector<8x14xf32>
    %c80_664 = arith.constant 80 : index
    %c0_665 = arith.constant 0 : index
    %855 = vector.load %arg11[%c80_664, %c0_665] : memref<224x14xf32, #tpu.memory_space<vmem>>, vector<8x14xf32>
    tpu.vector_store %arg11[%c80_664, %c0_665], %854 {strides = array<i32>} : memref<224x14xf32, #tpu.memory_space<vmem>>, vector<8x14xf32>,
    %cst_666 = arith.constant 7.500000e-01 : f32
    %856 = vector.broadcast %cst_666 : f32 to vector<8x14xf32>
    %857 = arith.mulf %856, %637 : vector<8x14xf32>
    %cst_667 = arith.constant 2.500000e-01 : f32
    %858 = vector.broadcast %cst_667 : f32 to vector<8x14xf32>
    %859 = arith.mulf %858, %656 : vector<8x14xf32>
    %860 = arith.addf %857, %859 : vector<8x14xf32>
    %c88_668 = arith.constant 88 : index
    %c0_669 = arith.constant 0 : index
    %861 = vector.load %arg11[%c88_668, %c0_669] : memref<224x14xf32, #tpu.memory_space<vmem>>, vector<8x14xf32>
    tpu.vector_store %arg11[%c88_668, %c0_669], %860 {strides = array<i32>} : memref<224x14xf32, #tpu.memory_space<vmem>>, vector<8x14xf32>,
    %cst_670 = arith.constant 2.500000e-01 : f32
    %862 = vector.broadcast %cst_670 : f32 to vector<8x14xf32>
    %863 = arith.mulf %862, %637 : vector<8x14xf32>
    %cst_671 = arith.constant 7.500000e-01 : f32
    %864 = vector.broadcast %cst_671 : f32 to vector<8x14xf32>
    %865 = arith.mulf %864, %656 : vector<8x14xf32>
    %866 = arith.addf %863, %865 : vector<8x14xf32>
    %c96_672 = arith.constant 96 : index
    %c0_673 = arith.constant 0 : index
    %867 = vector.load %arg11[%c96_672, %c0_673] : memref<224x14xf32, #tpu.memory_space<vmem>>, vector<8x14xf32>
    tpu.vector_store %arg11[%c96_672, %c0_673], %866 {strides = array<i32>} : memref<224x14xf32, #tpu.memory_space<vmem>>, vector<8x14xf32>,
    %cst_674 = arith.constant 7.500000e-01 : f32
    %868 = vector.broadcast %cst_674 : f32 to vector<8x14xf32>
    %869 = arith.mulf %868, %656 : vector<8x14xf32>
    %cst_675 = arith.constant 2.500000e-01 : f32
    %870 = vector.broadcast %cst_675 : f32 to vector<8x14xf32>
    %871 = arith.mulf %870, %675 : vector<8x14xf32>
    %872 = arith.addf %869, %871 : vector<8x14xf32>
    %c104_676 = arith.constant 104 : index
    %c0_677 = arith.constant 0 : index
    %873 = vector.load %arg11[%c104_676, %c0_677] : memref<224x14xf32, #tpu.memory_space<vmem>>, vector<8x14xf32>
    tpu.vector_store %arg11[%c104_676, %c0_677], %872 {strides = array<i32>} : memref<224x14xf32, #tpu.memory_space<vmem>>, vector<8x14xf32>,
    %cst_678 = arith.constant 2.500000e-01 : f32
    %874 = vector.broadcast %cst_678 : f32 to vector<8x14xf32>
    %875 = arith.mulf %874, %656 : vector<8x14xf32>
    %cst_679 = arith.constant 7.500000e-01 : f32
    %876 = vector.broadcast %cst_679 : f32 to vector<8x14xf32>
    %877 = arith.mulf %876, %675 : vector<8x14xf32>
    %878 = arith.addf %875, %877 : vector<8x14xf32>
    %c112_680 = arith.constant 112 : index
    %c0_681 = arith.constant 0 : index
    %879 = vector.load %arg11[%c112_680, %c0_681] : memref<224x14xf32, #tpu.memory_space<vmem>>, vector<8x14xf32>
    tpu.vector_store %arg11[%c112_680, %c0_681], %878 {strides = array<i32>} : memref<224x14xf32, #tpu.memory_space<vmem>>, vector<8x14xf32>,
    %cst_682 = arith.constant 7.500000e-01 : f32
    %880 = vector.broadcast %cst_682 : f32 to vector<8x14xf32>
    %881 = arith.mulf %880, %675 : vector<8x14xf32>
    %cst_683 = arith.constant 2.500000e-01 : f32
    %882 = vector.broadcast %cst_683 : f32 to vector<8x14xf32>
    %883 = arith.mulf %882, %694 : vector<8x14xf32>
    %884 = arith.addf %881, %883 : vector<8x14xf32>
    %c120_684 = arith.constant 120 : index
    %c0_685 = arith.constant 0 : index
    %885 = vector.load %arg11[%c120_684, %c0_685] : memref<224x14xf32, #tpu.memory_space<vmem>>, vector<8x14xf32>
    tpu.vector_store %arg11[%c120_684, %c0_685], %884 {strides = array<i32>} : memref<224x14xf32, #tpu.memory_space<vmem>>, vector<8x14xf32>,
    %cst_686 = arith.constant 2.500000e-01 : f32
    %886 = vector.broadcast %cst_686 : f32 to vector<8x14xf32>
    %887 = arith.mulf %886, %675 : vector<8x14xf32>
    %cst_687 = arith.constant 7.500000e-01 : f32
    %888 = vector.broadcast %cst_687 : f32 to vector<8x14xf32>
    %889 = arith.mulf %888, %694 : vector<8x14xf32>
    %890 = arith.addf %887, %889 : vector<8x14xf32>
    %c128_688 = arith.constant 128 : index
    %c0_689 = arith.constant 0 : index
    %891 = vector.load %arg11[%c128_688, %c0_689] : memref<224x14xf32, #tpu.memory_space<vmem>>, vector<8x14xf32>
    tpu.vector_store %arg11[%c128_688, %c0_689], %890 {strides = array<i32>} : memref<224x14xf32, #tpu.memory_space<vmem>>, vector<8x14xf32>,
    %cst_690 = arith.constant 7.500000e-01 : f32
    %892 = vector.broadcast %cst_690 : f32 to vector<8x14xf32>
    %893 = arith.mulf %892, %694 : vector<8x14xf32>
    %cst_691 = arith.constant 2.500000e-01 : f32
    %894 = vector.broadcast %cst_691 : f32 to vector<8x14xf32>
    %895 = arith.mulf %894, %713 : vector<8x14xf32>
    %896 = arith.addf %893, %895 : vector<8x14xf32>
    %c136_692 = arith.constant 136 : index
    %c0_693 = arith.constant 0 : index
    %897 = vector.load %arg11[%c136_692, %c0_693] : memref<224x14xf32, #tpu.memory_space<vmem>>, vector<8x14xf32>
    tpu.vector_store %arg11[%c136_692, %c0_693], %896 {strides = array<i32>} : memref<224x14xf32, #tpu.memory_space<vmem>>, vector<8x14xf32>,
    %cst_694 = arith.constant 2.500000e-01 : f32
    %898 = vector.broadcast %cst_694 : f32 to vector<8x14xf32>
    %899 = arith.mulf %898, %694 : vector<8x14xf32>
    %cst_695 = arith.constant 7.500000e-01 : f32
    %900 = vector.broadcast %cst_695 : f32 to vector<8x14xf32>
    %901 = arith.mulf %900, %713 : vector<8x14xf32>
    %902 = arith.addf %899, %901 : vector<8x14xf32>
    %c144_696 = arith.constant 144 : index
    %c0_697 = arith.constant 0 : index
    %903 = vector.load %arg11[%c144_696, %c0_697] : memref<224x14xf32, #tpu.memory_space<vmem>>, vector<8x14xf32>
    tpu.vector_store %arg11[%c144_696, %c0_697], %902 {strides = array<i32>} : memref<224x14xf32, #tpu.memory_space<vmem>>, vector<8x14xf32>,
    %cst_698 = arith.constant 7.500000e-01 : f32
    %904 = vector.broadcast %cst_698 : f32 to vector<8x14xf32>
    %905 = arith.mulf %904, %713 : vector<8x14xf32>
    %cst_699 = arith.constant 2.500000e-01 : f32
    %906 = vector.broadcast %cst_699 : f32 to vector<8x14xf32>
    %907 = arith.mulf %906, %732 : vector<8x14xf32>
    %908 = arith.addf %905, %907 : vector<8x14xf32>
    %c152_700 = arith.constant 152 : index
    %c0_701 = arith.constant 0 : index
    %909 = vector.load %arg11[%c152_700, %c0_701] : memref<224x14xf32, #tpu.memory_space<vmem>>, vector<8x14xf32>
    tpu.vector_store %arg11[%c152_700, %c0_701], %908 {strides = array<i32>} : memref<224x14xf32, #tpu.memory_space<vmem>>, vector<8x14xf32>,
    %cst_702 = arith.constant 2.500000e-01 : f32
    %910 = vector.broadcast %cst_702 : f32 to vector<8x14xf32>
    %911 = arith.mulf %910, %713 : vector<8x14xf32>
    %cst_703 = arith.constant 7.500000e-01 : f32
    %912 = vector.broadcast %cst_703 : f32 to vector<8x14xf32>
    %913 = arith.mulf %912, %732 : vector<8x14xf32>
    %914 = arith.addf %911, %913 : vector<8x14xf32>
    %c160_704 = arith.constant 160 : index
    %c0_705 = arith.constant 0 : index
    %915 = vector.load %arg11[%c160_704, %c0_705] : memref<224x14xf32, #tpu.memory_space<vmem>>, vector<8x14xf32>
    tpu.vector_store %arg11[%c160_704, %c0_705], %914 {strides = array<i32>} : memref<224x14xf32, #tpu.memory_space<vmem>>, vector<8x14xf32>,
    %cst_706 = arith.constant 7.500000e-01 : f32
    %916 = vector.broadcast %cst_706 : f32 to vector<8x14xf32>
    %917 = arith.mulf %916, %732 : vector<8x14xf32>
    %cst_707 = arith.constant 2.500000e-01 : f32
    %918 = vector.broadcast %cst_707 : f32 to vector<8x14xf32>
    %919 = arith.mulf %918, %751 : vector<8x14xf32>
    %920 = arith.addf %917, %919 : vector<8x14xf32>
    %c168_708 = arith.constant 168 : index
    %c0_709 = arith.constant 0 : index
    %921 = vector.load %arg11[%c168_708, %c0_709] : memref<224x14xf32, #tpu.memory_space<vmem>>, vector<8x14xf32>
    tpu.vector_store %arg11[%c168_708, %c0_709], %920 {strides = array<i32>} : memref<224x14xf32, #tpu.memory_space<vmem>>, vector<8x14xf32>,
    %cst_710 = arith.constant 2.500000e-01 : f32
    %922 = vector.broadcast %cst_710 : f32 to vector<8x14xf32>
    %923 = arith.mulf %922, %732 : vector<8x14xf32>
    %cst_711 = arith.constant 7.500000e-01 : f32
    %924 = vector.broadcast %cst_711 : f32 to vector<8x14xf32>
    %925 = arith.mulf %924, %751 : vector<8x14xf32>
    %926 = arith.addf %923, %925 : vector<8x14xf32>
    %c176_712 = arith.constant 176 : index
    %c0_713 = arith.constant 0 : index
    %927 = vector.load %arg11[%c176_712, %c0_713] : memref<224x14xf32, #tpu.memory_space<vmem>>, vector<8x14xf32>
    tpu.vector_store %arg11[%c176_712, %c0_713], %926 {strides = array<i32>} : memref<224x14xf32, #tpu.memory_space<vmem>>, vector<8x14xf32>,
    %cst_714 = arith.constant 7.500000e-01 : f32
    %928 = vector.broadcast %cst_714 : f32 to vector<8x14xf32>
    %929 = arith.mulf %928, %751 : vector<8x14xf32>
    %cst_715 = arith.constant 2.500000e-01 : f32
    %930 = vector.broadcast %cst_715 : f32 to vector<8x14xf32>
    %931 = arith.mulf %930, %770 : vector<8x14xf32>
    %932 = arith.addf %929, %931 : vector<8x14xf32>
    %c184_716 = arith.constant 184 : index
    %c0_717 = arith.constant 0 : index
    %933 = vector.load %arg11[%c184_716, %c0_717] : memref<224x14xf32, #tpu.memory_space<vmem>>, vector<8x14xf32>
    tpu.vector_store %arg11[%c184_716, %c0_717], %932 {strides = array<i32>} : memref<224x14xf32, #tpu.memory_space<vmem>>, vector<8x14xf32>,
    %cst_718 = arith.constant 2.500000e-01 : f32
    %934 = vector.broadcast %cst_718 : f32 to vector<8x14xf32>
    %935 = arith.mulf %934, %751 : vector<8x14xf32>
    %cst_719 = arith.constant 7.500000e-01 : f32
    %936 = vector.broadcast %cst_719 : f32 to vector<8x14xf32>
    %937 = arith.mulf %936, %770 : vector<8x14xf32>
    %938 = arith.addf %935, %937 : vector<8x14xf32>
    %c192_720 = arith.constant 192 : index
    %c0_721 = arith.constant 0 : index
    %939 = vector.load %arg11[%c192_720, %c0_721] : memref<224x14xf32, #tpu.memory_space<vmem>>, vector<8x14xf32>
    tpu.vector_store %arg11[%c192_720, %c0_721], %938 {strides = array<i32>} : memref<224x14xf32, #tpu.memory_space<vmem>>, vector<8x14xf32>,
    %cst_722 = arith.constant 7.500000e-01 : f32
    %940 = vector.broadcast %cst_722 : f32 to vector<8x14xf32>
    %941 = arith.mulf %940, %770 : vector<8x14xf32>
    %cst_723 = arith.constant 2.500000e-01 : f32
    %942 = vector.broadcast %cst_723 : f32 to vector<8x14xf32>
    %943 = arith.mulf %942, %789 : vector<8x14xf32>
    %944 = arith.addf %941, %943 : vector<8x14xf32>
    %c200_724 = arith.constant 200 : index
    %c0_725 = arith.constant 0 : index
    %945 = vector.load %arg11[%c200_724, %c0_725] : memref<224x14xf32, #tpu.memory_space<vmem>>, vector<8x14xf32>
    tpu.vector_store %arg11[%c200_724, %c0_725], %944 {strides = array<i32>} : memref<224x14xf32, #tpu.memory_space<vmem>>, vector<8x14xf32>,
    %cst_726 = arith.constant 2.500000e-01 : f32
    %946 = vector.broadcast %cst_726 : f32 to vector<8x14xf32>
    %947 = arith.mulf %946, %770 : vector<8x14xf32>
    %cst_727 = arith.constant 7.500000e-01 : f32
    %948 = vector.broadcast %cst_727 : f32 to vector<8x14xf32>
    %949 = arith.mulf %948, %789 : vector<8x14xf32>
    %950 = arith.addf %947, %949 : vector<8x14xf32>
    %c208_728 = arith.constant 208 : index
    %c0_729 = arith.constant 0 : index
    %951 = vector.load %arg11[%c208_728, %c0_729] : memref<224x14xf32, #tpu.memory_space<vmem>>, vector<8x14xf32>
    tpu.vector_store %arg11[%c208_728, %c0_729], %950 {strides = array<i32>} : memref<224x14xf32, #tpu.memory_space<vmem>>, vector<8x14xf32>,
    %cst_730 = arith.constant 7.500000e-01 : f32
    %952 = vector.broadcast %cst_730 : f32 to vector<8x14xf32>
    %953 = arith.mulf %952, %789 : vector<8x14xf32>
    %cst_731 = arith.constant 2.500000e-01 : f32
    %954 = vector.broadcast %cst_731 : f32 to vector<8x14xf32>
    %955 = arith.mulf %954, %789 : vector<8x14xf32>
    %956 = arith.addf %953, %955 : vector<8x14xf32>
    %c216_732 = arith.constant 216 : index
    %c0_733 = arith.constant 0 : index
    %957 = vector.load %arg11[%c216_732, %c0_733] : memref<224x14xf32, #tpu.memory_space<vmem>>, vector<8x14xf32>
    tpu.vector_store %arg11[%c216_732, %c0_733], %956 {strides = array<i32>} : memref<224x14xf32, #tpu.memory_space<vmem>>, vector<8x14xf32>,
    %c0_734 = arith.constant 0 : index
    %c0_735 = arith.constant 0 : index
    %958 = vector.load %arg11[%c0_734, %c0_735] : memref<224x14xf32, #tpu.memory_space<vmem>>, vector<224x14xf32>
    %cst_736 = arith.constant dense<0.000000e+00> : vector<224x28xf32>
    %959 = tpu.matmul %958, %3, %cst_736 {dimension_numbers = #tpu.dot_dimension_numbers<[1], [0], [0], [1], [0, 0, 1, 1], [], []>} : vector<224x14xf32>, vector<14x28xf32>, vector<224x28xf32> -> vector<224x28xf32>
    %960 = vector.extract_strided_slice %959 {offsets = [0, 0], sizes = [8, 28], strides = [1, 1]} : vector<224x28xf32> to vector<8x28xf32>
    %c0_737 = arith.constant 0 : index
    %c0_738 = arith.constant 0 : index
    %961 = vector.load %arg12[%c0_737, %c0_738] : memref<8x784xf32, #tpu.memory_space<vmem>>, vector<8x28xf32>
    tpu.vector_store %arg12[%c0_737, %c0_738], %960 {strides = array<i32>} : memref<8x784xf32, #tpu.memory_space<vmem>>, vector<8x28xf32>,
    %962 = vector.extract_strided_slice %959 {offsets = [8, 0], sizes = [8, 28], strides = [1, 1]} : vector<224x28xf32> to vector<8x28xf32>
    %c0_739 = arith.constant 0 : index
    %c28_740 = arith.constant 28 : index
    %963 = vector.load %arg12[%c0_739, %c28_740] : memref<8x784xf32, #tpu.memory_space<vmem>>, vector<8x28xf32>
    tpu.vector_store %arg12[%c0_739, %c28_740], %962 {strides = array<i32>} : memref<8x784xf32, #tpu.memory_space<vmem>>, vector<8x28xf32>,
    %964 = vector.extract_strided_slice %959 {offsets = [16, 0], sizes = [8, 28], strides = [1, 1]} : vector<224x28xf32> to vector<8x28xf32>
    %c0_741 = arith.constant 0 : index
    %c56_742 = arith.constant 56 : index
    %965 = vector.load %arg12[%c0_741, %c56_742] : memref<8x784xf32, #tpu.memory_space<vmem>>, vector<8x28xf32>
    tpu.vector_store %arg12[%c0_741, %c56_742], %964 {strides = array<i32>} : memref<8x784xf32, #tpu.memory_space<vmem>>, vector<8x28xf32>,
    %966 = vector.extract_strided_slice %959 {offsets = [24, 0], sizes = [8, 28], strides = [1, 1]} : vector<224x28xf32> to vector<8x28xf32>
    %c0_743 = arith.constant 0 : index
    %c84_744 = arith.constant 84 : index
    %967 = vector.load %arg12[%c0_743, %c84_744] : memref<8x784xf32, #tpu.memory_space<vmem>>, vector<8x28xf32>
    tpu.vector_store %arg12[%c0_743, %c84_744], %966 {strides = array<i32>} : memref<8x784xf32, #tpu.memory_space<vmem>>, vector<8x28xf32>,
    %968 = vector.extract_strided_slice %959 {offsets = [32, 0], sizes = [8, 28], strides = [1, 1]} : vector<224x28xf32> to vector<8x28xf32>
    %c0_745 = arith.constant 0 : index
    %c112_746 = arith.constant 112 : index
    %969 = vector.load %arg12[%c0_745, %c112_746] : memref<8x784xf32, #tpu.memory_space<vmem>>, vector<8x28xf32>
    tpu.vector_store %arg12[%c0_745, %c112_746], %968 {strides = array<i32>} : memref<8x784xf32, #tpu.memory_space<vmem>>, vector<8x28xf32>,
    %970 = vector.extract_strided_slice %959 {offsets = [40, 0], sizes = [8, 28], strides = [1, 1]} : vector<224x28xf32> to vector<8x28xf32>
    %c0_747 = arith.constant 0 : index
    %c140_748 = arith.constant 140 : index
    %971 = vector.load %arg12[%c0_747, %c140_748] : memref<8x784xf32, #tpu.memory_space<vmem>>, vector<8x28xf32>
    tpu.vector_store %arg12[%c0_747, %c140_748], %970 {strides = array<i32>} : memref<8x784xf32, #tpu.memory_space<vmem>>, vector<8x28xf32>,
    %972 = vector.extract_strided_slice %959 {offsets = [48, 0], sizes = [8, 28], strides = [1, 1]} : vector<224x28xf32> to vector<8x28xf32>
    %c0_749 = arith.constant 0 : index
    %c168_750 = arith.constant 168 : index
    %973 = vector.load %arg12[%c0_749, %c168_750] : memref<8x784xf32, #tpu.memory_space<vmem>>, vector<8x28xf32>
    tpu.vector_store %arg12[%c0_749, %c168_750], %972 {strides = array<i32>} : memref<8x784xf32, #tpu.memory_space<vmem>>, vector<8x28xf32>,
    %974 = vector.extract_strided_slice %959 {offsets = [56, 0], sizes = [8, 28], strides = [1, 1]} : vector<224x28xf32> to vector<8x28xf32>
    %c0_751 = arith.constant 0 : index
    %c196_752 = arith.constant 196 : index
    %975 = vector.load %arg12[%c0_751, %c196_752] : memref<8x784xf32, #tpu.memory_space<vmem>>, vector<8x28xf32>
    tpu.vector_store %arg12[%c0_751, %c196_752], %974 {strides = array<i32>} : memref<8x784xf32, #tpu.memory_space<vmem>>, vector<8x28xf32>,
    %976 = vector.extract_strided_slice %959 {offsets = [64, 0], sizes = [8, 28], strides = [1, 1]} : vector<224x28xf32> to vector<8x28xf32>
    %c0_753 = arith.constant 0 : index
    %c224_754 = arith.constant 224 : index
    %977 = vector.load %arg12[%c0_753, %c224_754] : memref<8x784xf32, #tpu.memory_space<vmem>>, vector<8x28xf32>
    tpu.vector_store %arg12[%c0_753, %c224_754], %976 {strides = array<i32>} : memref<8x784xf32, #tpu.memory_space<vmem>>, vector<8x28xf32>,
    %978 = vector.extract_strided_slice %959 {offsets = [72, 0], sizes = [8, 28], strides = [1, 1]} : vector<224x28xf32> to vector<8x28xf32>
    %c0_755 = arith.constant 0 : index
    %c252_756 = arith.constant 252 : index
    %979 = vector.load %arg12[%c0_755, %c252_756] : memref<8x784xf32, #tpu.memory_space<vmem>>, vector<8x28xf32>
    tpu.vector_store %arg12[%c0_755, %c252_756], %978 {strides = array<i32>} : memref<8x784xf32, #tpu.memory_space<vmem>>, vector<8x28xf32>,
    %980 = vector.extract_strided_slice %959 {offsets = [80, 0], sizes = [8, 28], strides = [1, 1]} : vector<224x28xf32> to vector<8x28xf32>
    %c0_757 = arith.constant 0 : index
    %c280_758 = arith.constant 280 : index
    %981 = vector.load %arg12[%c0_757, %c280_758] : memref<8x784xf32, #tpu.memory_space<vmem>>, vector<8x28xf32>
    tpu.vector_store %arg12[%c0_757, %c280_758], %980 {strides = array<i32>} : memref<8x784xf32, #tpu.memory_space<vmem>>, vector<8x28xf32>,
    %982 = vector.extract_strided_slice %959 {offsets = [88, 0], sizes = [8, 28], strides = [1, 1]} : vector<224x28xf32> to vector<8x28xf32>
    %c0_759 = arith.constant 0 : index
    %c308_760 = arith.constant 308 : index
    %983 = vector.load %arg12[%c0_759, %c308_760] : memref<8x784xf32, #tpu.memory_space<vmem>>, vector<8x28xf32>
    tpu.vector_store %arg12[%c0_759, %c308_760], %982 {strides = array<i32>} : memref<8x784xf32, #tpu.memory_space<vmem>>, vector<8x28xf32>,
    %984 = vector.extract_strided_slice %959 {offsets = [96, 0], sizes = [8, 28], strides = [1, 1]} : vector<224x28xf32> to vector<8x28xf32>
    %c0_761 = arith.constant 0 : index
    %c336_762 = arith.constant 336 : index
    %985 = vector.load %arg12[%c0_761, %c336_762] : memref<8x784xf32, #tpu.memory_space<vmem>>, vector<8x28xf32>
    tpu.vector_store %arg12[%c0_761, %c336_762], %984 {strides = array<i32>} : memref<8x784xf32, #tpu.memory_space<vmem>>, vector<8x28xf32>,
    %986 = vector.extract_strided_slice %959 {offsets = [104, 0], sizes = [8, 28], strides = [1, 1]} : vector<224x28xf32> to vector<8x28xf32>
    %c0_763 = arith.constant 0 : index
    %c364_764 = arith.constant 364 : index
    %987 = vector.load %arg12[%c0_763, %c364_764] : memref<8x784xf32, #tpu.memory_space<vmem>>, vector<8x28xf32>
    tpu.vector_store %arg12[%c0_763, %c364_764], %986 {strides = array<i32>} : memref<8x784xf32, #tpu.memory_space<vmem>>, vector<8x28xf32>,
    %988 = vector.extract_strided_slice %959 {offsets = [112, 0], sizes = [8, 28], strides = [1, 1]} : vector<224x28xf32> to vector<8x28xf32>
    %c0_765 = arith.constant 0 : index
    %c392_766 = arith.constant 392 : index
    %989 = vector.load %arg12[%c0_765, %c392_766] : memref<8x784xf32, #tpu.memory_space<vmem>>, vector<8x28xf32>
    tpu.vector_store %arg12[%c0_765, %c392_766], %988 {strides = array<i32>} : memref<8x784xf32, #tpu.memory_space<vmem>>, vector<8x28xf32>,
    %990 = vector.extract_strided_slice %959 {offsets = [120, 0], sizes = [8, 28], strides = [1, 1]} : vector<224x28xf32> to vector<8x28xf32>
    %c0_767 = arith.constant 0 : index
    %c420_768 = arith.constant 420 : index
    %991 = vector.load %arg12[%c0_767, %c420_768] : memref<8x784xf32, #tpu.memory_space<vmem>>, vector<8x28xf32>
    tpu.vector_store %arg12[%c0_767, %c420_768], %990 {strides = array<i32>} : memref<8x784xf32, #tpu.memory_space<vmem>>, vector<8x28xf32>,
    %992 = vector.extract_strided_slice %959 {offsets = [128, 0], sizes = [8, 28], strides = [1, 1]} : vector<224x28xf32> to vector<8x28xf32>
    %c0_769 = arith.constant 0 : index
    %c448_770 = arith.constant 448 : index
    %993 = vector.load %arg12[%c0_769, %c448_770] : memref<8x784xf32, #tpu.memory_space<vmem>>, vector<8x28xf32>
    tpu.vector_store %arg12[%c0_769, %c448_770], %992 {strides = array<i32>} : memref<8x784xf32, #tpu.memory_space<vmem>>, vector<8x28xf32>,
    %994 = vector.extract_strided_slice %959 {offsets = [136, 0], sizes = [8, 28], strides = [1, 1]} : vector<224x28xf32> to vector<8x28xf32>
    %c0_771 = arith.constant 0 : index
    %c476_772 = arith.constant 476 : index
    %995 = vector.load %arg12[%c0_771, %c476_772] : memref<8x784xf32, #tpu.memory_space<vmem>>, vector<8x28xf32>
    tpu.vector_store %arg12[%c0_771, %c476_772], %994 {strides = array<i32>} : memref<8x784xf32, #tpu.memory_space<vmem>>, vector<8x28xf32>,
    %996 = vector.extract_strided_slice %959 {offsets = [144, 0], sizes = [8, 28], strides = [1, 1]} : vector<224x28xf32> to vector<8x28xf32>
    %c0_773 = arith.constant 0 : index
    %c504_774 = arith.constant 504 : index
    %997 = vector.load %arg12[%c0_773, %c504_774] : memref<8x784xf32, #tpu.memory_space<vmem>>, vector<8x28xf32>
    tpu.vector_store %arg12[%c0_773, %c504_774], %996 {strides = array<i32>} : memref<8x784xf32, #tpu.memory_space<vmem>>, vector<8x28xf32>,
    %998 = vector.extract_strided_slice %959 {offsets = [152, 0], sizes = [8, 28], strides = [1, 1]} : vector<224x28xf32> to vector<8x28xf32>
    %c0_775 = arith.constant 0 : index
    %c532_776 = arith.constant 532 : index
    %999 = vector.load %arg12[%c0_775, %c532_776] : memref<8x784xf32, #tpu.memory_space<vmem>>, vector<8x28xf32>
    tpu.vector_store %arg12[%c0_775, %c532_776], %998 {strides = array<i32>} : memref<8x784xf32, #tpu.memory_space<vmem>>, vector<8x28xf32>,
    %1000 = vector.extract_strided_slice %959 {offsets = [160, 0], sizes = [8, 28], strides = [1, 1]} : vector<224x28xf32> to vector<8x28xf32>
    %c0_777 = arith.constant 0 : index
    %c560_778 = arith.constant 560 : index
    %1001 = vector.load %arg12[%c0_777, %c560_778] : memref<8x784xf32, #tpu.memory_space<vmem>>, vector<8x28xf32>
    tpu.vector_store %arg12[%c0_777, %c560_778], %1000 {strides = array<i32>} : memref<8x784xf32, #tpu.memory_space<vmem>>, vector<8x28xf32>,
    %1002 = vector.extract_strided_slice %959 {offsets = [168, 0], sizes = [8, 28], strides = [1, 1]} : vector<224x28xf32> to vector<8x28xf32>
    %c0_779 = arith.constant 0 : index
    %c588_780 = arith.constant 588 : index
    %1003 = vector.load %arg12[%c0_779, %c588_780] : memref<8x784xf32, #tpu.memory_space<vmem>>, vector<8x28xf32>
    tpu.vector_store %arg12[%c0_779, %c588_780], %1002 {strides = array<i32>} : memref<8x784xf32, #tpu.memory_space<vmem>>, vector<8x28xf32>,
    %1004 = vector.extract_strided_slice %959 {offsets = [176, 0], sizes = [8, 28], strides = [1, 1]} : vector<224x28xf32> to vector<8x28xf32>
    %c0_781 = arith.constant 0 : index
    %c616_782 = arith.constant 616 : index
    %1005 = vector.load %arg12[%c0_781, %c616_782] : memref<8x784xf32, #tpu.memory_space<vmem>>, vector<8x28xf32>
    tpu.vector_store %arg12[%c0_781, %c616_782], %1004 {strides = array<i32>} : memref<8x784xf32, #tpu.memory_space<vmem>>, vector<8x28xf32>,
    %1006 = vector.extract_strided_slice %959 {offsets = [184, 0], sizes = [8, 28], strides = [1, 1]} : vector<224x28xf32> to vector<8x28xf32>
    %c0_783 = arith.constant 0 : index
    %c644_784 = arith.constant 644 : index
    %1007 = vector.load %arg12[%c0_783, %c644_784] : memref<8x784xf32, #tpu.memory_space<vmem>>, vector<8x28xf32>
    tpu.vector_store %arg12[%c0_783, %c644_784], %1006 {strides = array<i32>} : memref<8x784xf32, #tpu.memory_space<vmem>>, vector<8x28xf32>,
    %1008 = vector.extract_strided_slice %959 {offsets = [192, 0], sizes = [8, 28], strides = [1, 1]} : vector<224x28xf32> to vector<8x28xf32>
    %c0_785 = arith.constant 0 : index
    %c672_786 = arith.constant 672 : index
    %1009 = vector.load %arg12[%c0_785, %c672_786] : memref<8x784xf32, #tpu.memory_space<vmem>>, vector<8x28xf32>
    tpu.vector_store %arg12[%c0_785, %c672_786], %1008 {strides = array<i32>} : memref<8x784xf32, #tpu.memory_space<vmem>>, vector<8x28xf32>,
    %1010 = vector.extract_strided_slice %959 {offsets = [200, 0], sizes = [8, 28], strides = [1, 1]} : vector<224x28xf32> to vector<8x28xf32>
    %c0_787 = arith.constant 0 : index
    %c700_788 = arith.constant 700 : index
    %1011 = vector.load %arg12[%c0_787, %c700_788] : memref<8x784xf32, #tpu.memory_space<vmem>>, vector<8x28xf32>
    tpu.vector_store %arg12[%c0_787, %c700_788], %1010 {strides = array<i32>} : memref<8x784xf32, #tpu.memory_space<vmem>>, vector<8x28xf32>,
    %1012 = vector.extract_strided_slice %959 {offsets = [208, 0], sizes = [8, 28], strides = [1, 1]} : vector<224x28xf32> to vector<8x28xf32>
    %c0_789 = arith.constant 0 : index
    %c728_790 = arith.constant 728 : index
    %1013 = vector.load %arg12[%c0_789, %c728_790] : memref<8x784xf32, #tpu.memory_space<vmem>>, vector<8x28xf32>
    tpu.vector_store %arg12[%c0_789, %c728_790], %1012 {strides = array<i32>} : memref<8x784xf32, #tpu.memory_space<vmem>>, vector<8x28xf32>,
    %1014 = vector.extract_strided_slice %959 {offsets = [216, 0], sizes = [8, 28], strides = [1, 1]} : vector<224x28xf32> to vector<8x28xf32>
    %c0_791 = arith.constant 0 : index
    %c756_792 = arith.constant 756 : index
    %1015 = vector.load %arg12[%c0_791, %c756_792] : memref<8x784xf32, #tpu.memory_space<vmem>>, vector<8x28xf32>
    tpu.vector_store %arg12[%c0_791, %c756_792], %1014 {strides = array<i32>} : memref<8x784xf32, #tpu.memory_space<vmem>>, vector<8x28xf32>,
    %c1_793 = arith.constant 1 : index
    %c0_794 = arith.constant 0 : index
    %c0_795 = arith.constant 0 : index
    %1016 = vector.load %arg3[%c1_793, %c0_794, %c0_795] : memref<2x8x784xf32, #tpu.memory_space<vmem>>, vector<1x8x784xf32>
    %1017 = vector.shape_cast %1016 : vector<1x8x784xf32> to vector<8x784xf32>
    %1018 = vector.broadcast %0 : f32 to vector<8x784xf32>
    %1019 = arith.mulf %1018, %1017 : vector<8x784xf32>
    %c0_796 = arith.constant 0 : index
    %c0_797 = arith.constant 0 : index
    %1020 = vector.load %arg12[%c0_796, %c0_797] : memref<8x784xf32, #tpu.memory_space<vmem>>, vector<8x784xf32>
    %1021 = arith.addf %1019, %1020 : vector<8x784xf32>
    %cst_798 = arith.constant 0.000000e+00 : f32
    %1022 = vector.broadcast %cst_798 : f32 to vector<8x784xf32>
    %1023 = arith.maximumf %1021, %1022 : vector<8x784xf32>
    %c1_799 = arith.constant 1 : index
    %c0_800 = arith.constant 0 : index
    %c0_801 = arith.constant 0 : index
    %1024 = vector.load %arg7[%c1_799, %c0_800, %c0_801] : memref<2x8x784xf32, #tpu.memory_space<vmem>>, vector<1x8x784xf32>
    %1025 = vector.shape_cast %1024 : vector<1x8x784xf32> to vector<8x784xf32>
    %1026 = vector.shape_cast %1023 : vector<8x784xf32> to vector<1x8x784xf32>
    tpu.vector_store %arg7[%c1_799, %c0_800, %c0_801], %1026 {strides = array<i32>} : memref<2x8x784xf32, #tpu.memory_space<vmem>>, vector<1x8x784xf32>,
    %cst_802 = arith.constant dense<0.000000e+00> : vector<8xf32>
    %1027 = vector.multi_reduction <add>, %1023, %cst_802 [1] : vector<8x784xf32> to vector<8xf32>
    %1028 = vector.shape_cast %1027 : vector<8xf32> to vector<8x1xf32>
    %1029 = arith.addf %515, %1028 : vector<8x1xf32>
    %1030 = arith.mulf %1023, %1023 : vector<8x784xf32>
    %cst_803 = arith.constant dense<0.000000e+00> : vector<8xf32>
    %1031 = vector.multi_reduction <add>, %1030, %cst_803 [1] : vector<8x784xf32> to vector<8xf32>
    %1032 = vector.shape_cast %1031 : vector<8xf32> to vector<8x1xf32>
    %1033 = arith.addf %519, %1032 : vector<8x1xf32>
    %c0_804 = arith.constant 0 : index
    %c0_805 = arith.constant 0 : index
    %c0_806 = arith.constant 0 : index
    %1034 = vector.load %arg8[%c0_804, %c0_805, %c0_806] : memref<1x8x1xf32, #tpu.memory_space<vmem>>, vector<1x8x1xf32>
    %1035 = vector.shape_cast %1034 : vector<1x8x1xf32> to vector<8x1xf32>
    %1036 = vector.shape_cast %1029 : vector<8x1xf32> to vector<1x8x1xf32>
    tpu.vector_store %arg8[%c0_804, %c0_805, %c0_806], %1036 {strides = array<i32>} : memref<1x8x1xf32, #tpu.memory_space<vmem>>, vector<1x8x1xf32>,
    %c0_807 = arith.constant 0 : index
    %c0_808 = arith.constant 0 : index
    %c0_809 = arith.constant 0 : index
    %1037 = vector.load %arg9[%c0_807, %c0_808, %c0_809] : memref<1x8x1xf32, #tpu.memory_space<vmem>>, vector<1x8x1xf32>
    %1038 = vector.shape_cast %1037 : vector<1x8x1xf32> to vector<8x1xf32>
    %1039 = vector.shape_cast %1033 : vector<8x1xf32> to vector<1x8x1xf32>
    tpu.vector_store %arg9[%c0_807, %c0_808, %c0_809], %1039 {strides = array<i32>} : memref<1x8x1xf32, #tpu.memory_space<vmem>>, vector<1x8x1xf32>,
    return
  }
  func.func @transform_0(%arg0: i32) -> (i32, i32) {
    %c0_i32 = arith.constant 0 : i32
    %c0_i32_0 = arith.constant 0 : i32
    %c0_i32_1 = arith.constant 0 : i32
    return %c0_i32, %c0_i32_0 : i32, i32
  }
  func.func @transform_1(%arg0: i32) -> (i32, i32, i32) {
    %c0_i32 = arith.constant 0 : i32
    %c0_i32_0 = arith.constant 0 : i32
    %c0_i32_1 = arith.constant 0 : i32
    return %arg0, %c0_i32, %c0_i32_0 : i32, i32, i32
  }
  func.func @transform_2(%arg0: i32) -> (i32, i32, i32) {
    %c0_i32 = arith.constant 0 : i32
    %c0_i32_0 = arith.constant 0 : i32
    %c0_i32_1 = arith.constant 0 : i32
    return %arg0, %c0_i32, %c0_i32_0 : i32, i32, i32
  }
  func.func @transform_3(%arg0: i32) -> (i32, i32) {
    %c0_i32 = arith.constant 0 : i32
    %c0_i32_0 = arith.constant 0 : i32
    %c0_i32_1 = arith.constant 0 : i32
    return %c0_i32, %c0_i32_0 : i32, i32
  }
  func.func @transform_4(%arg0: i32) -> (i32, i32) {
    %c0_i32 = arith.constant 0 : i32
    %c0_i32_0 = arith.constant 0 : i32
    %c0_i32_1 = arith.constant 0 : i32
    return %c0_i32, %c0_i32_0 : i32, i32
  }
  func.func @transform_5(%arg0: i32) -> (i32, i32) {
    %c0_i32 = arith.constant 0 : i32
    %c0_i32_0 = arith.constant 0 : i32
    %c0_i32_1 = arith.constant 0 : i32
    return %c0_i32, %c0_i32_0 : i32, i32
  }
  func.func @transform_6(%arg0: i32) -> (i32, i32, i32) {
    %c0_i32 = arith.constant 0 : i32
    %c0_i32_0 = arith.constant 0 : i32
    %c0_i32_1 = arith.constant 0 : i32
    return %arg0, %c0_i32, %c0_i32_0 : i32, i32, i32
  }
  func.func @transform_7(%arg0: i32) -> (i32, i32, i32) {
    %c0_i32 = arith.constant 0 : i32
    %c0_i32_0 = arith.constant 0 : i32
    %c0_i32_1 = arith.constant 0 : i32
    return %arg0, %c0_i32, %c0_i32_0 : i32, i32, i32
  }
  func.func @transform_8(%arg0: i32) -> (i32, i32, i32) {
    %c0_i32 = arith.constant 0 : i32
    %c0_i32_0 = arith.constant 0 : i32
    %c0_i32_1 = arith.constant 0 : i32
    return %arg0, %c0_i32, %c0_i32_0 : i32, i32, i32
  }
}

</mosaic_0001>

<llo_original>
// kernel: c_rb_forward.3
$region0: #{c_rb_forward.3}
  #allocation0 [shape = 'u32[]', space=smem, size = 0x4, offset = 0x4, fixed_abs, tag = 'smem constant byte address 0x4 - core index']
  #allocation1 [shape = 'u32[72,128]{1,0:T(1,128)}', space=vmem, size = 0x9000, scoped, tag = 'internal scratch']
  %s0 = inlined_call_operand.vmem [shape: f32[1,2], index: 0, kind: input, shape index: {}]
  %s1 = inlined_call_operand.vmem [shape: f32[2,8,784], index: 1, kind: input, shape index: {}]
  %s2 = inlined_call_operand.vmem [shape: f32[2,8,784], index: 2, kind: input, shape index: {}]
  %s3 = inlined_call_operand.vmem [shape: f32[2,8,784], index: 3, kind: input, shape index: {}]
  %s4 = inlined_call_operand.vmem [shape: f32[8,1], index: 4, kind: input, shape index: {}]
  %s5 = inlined_call_operand.vmem [shape: f32[8,1], index: 5, kind: input, shape index: {}]
  %s6 = inlined_call_operand.vmem [shape: f32[2,8,784], index: 6, kind: output, shape index: {}]
  %s7 = sld [smem:[#allocation0]]
  $region38: #{c_rb_forward.3} parent=0
    _
  %s9 = ssub.s32 1, %s7
  %s10 = scalar_select 0, %s9, %s7
  $region1: #{c_rb_forward.3} parent=0
    #allocation2 [shape = 'u8[512]{0}', space=smem, size = 0x200, scoped, tag = 'input window, operand 0, single buffered']
    #allocation3 [shape = 's32[1]{0}', space=sflag, size = 0x4, scoped, tag = 'scoped memory for c_rb_forward.3']
    %11 = vsyncpa [#allocation3], 0
    // Predicated region
    $region2: #{c_rb_forward.3} parent=1 // pred_check
      _
    $region3: #{c_rb_forward.3} parent=1 // pred_check_branch
      %13 = sbr.rel (0) target = $region5
    $region4: #{c_rb_forward.3} parent=1 // pred_region
      %15 = vsyncadd [#allocation3], 0
      %s17 = sshll.u32 %s0, 4
      %s18 = int_to_ptr.vmem [resolvable:$true] %s17
      %20 = dma.vmem_to_smem %s18, 16, [#allocation2], [#allocation3]
    $region5: #{c_rb_forward.3} parent=1 // pred_fallthru
      _
    // Predicated region
    $region6: #{c_rb_forward.3} parent=1 // pred_check
      _
    $region7: #{c_rb_forward.3} parent=1 // pred_check_branch
      %22 = sbr.rel (0) target = $region9
    $region8: #{c_rb_forward.3} parent=1 // pred_region
      _
    $region9: #{c_rb_forward.3} parent=1 // pred_fallthru
      _
    // Predicated region
    $region10: #{c_rb_forward.3} parent=1 // pred_check
      _
    $region11: #{c_rb_forward.3} parent=1 // pred_check_branch
      %24 = sbr.rel (0) target = $region13
    $region12: #{c_rb_forward.3} parent=1 // pred_region
      _
    $region13: #{c_rb_forward.3} parent=1 // pred_fallthru
      _
    // Predicated region
    $region14: #{c_rb_forward.3} parent=1 // pred_check
      _
    $region15: #{c_rb_forward.3} parent=1 // pred_check_branch
      %26 = sbr.rel (0) target = $region17
    $region16: #{c_rb_forward.3} parent=1 // pred_region
      _
    $region17: #{c_rb_forward.3} parent=1 // pred_fallthru
      _
    // Predicated region
    $region18: #{c_rb_forward.3} parent=1 // pred_check
      _
    $region19: #{c_rb_forward.3} parent=1 // pred_check_branch
      %28 = sbr.rel (0) target = $region21
    $region20: #{c_rb_forward.3} parent=1 // pred_region
      _
    $region21: #{c_rb_forward.3} parent=1 // pred_fallthru
      _
    // Predicated region
    $region22: #{c_rb_forward.3} parent=1 // pred_check
      _
    $region23: #{c_rb_forward.3} parent=1 // pred_check_branch
      %30 = sbr.rel (0) target = $region25
    $region24: #{c_rb_forward.3} parent=1 // pred_region
      _
    $region25: #{c_rb_forward.3} parent=1 // pred_fallthru
      _
    // Predicated region
    $region26: #{c_rb_forward.3} parent=1 // pred_check
      _
    $region27: #{c_rb_forward.3} parent=1 // pred_check_branch
      %32 = sbr.rel (0) target = $region29
    $region28: #{c_rb_forward.3} parent=1 // pred_region
      %34 = dma.done [#allocation3], 16
    $region29: #{c_rb_forward.3} parent=1 // pred_fallthru
      _
    %35 = sfence
    %s36 = sld [smem:[#allocation2]]
    %s37 = sld [smem:[#allocation2 + $0x1]]
    %v38 = vld [vmem:[%s4] sm:$0xff]
    %v39 = vld [vmem:[%s5] sm:$0xff]
    %v40 = vld [vmem:[%s3] sm:$0xff]
    %v41 = vld [vmem:[%s3 + $0x8] sm:$0xff]
    %v42 = vld [vmem:[%s3 + $0x10] sm:$0xff]
    %v43 = vld [vmem:[%s3 + $0x18] sm:$0xff]
    %v44 = vld [vmem:[%s3 + $0x20] sm:$0xff]
    %v45 = vld [vmem:[%s3 + $0x28] sm:$0xff]
    %v46 = vld [vmem:[%s3 + $0x30] sm:$0xff]
    %v47 = vstv %s36
    %v48 = vmul.f32 %v47, %v40
    %v49 = vmul.f32 %v47, %v41
    %v50 = vmul.f32 %v47, %v42
    %v51 = vmul.f32 %v47, %v43
    %v52 = vmul.f32 %v47, %v44
    %v53 = vmul.f32 %v47, %v45
    %v54 = vmul.f32 %v47, %v46
    %v55 = vld [vmem:[%s2] sm:$0xff]
    %v56 = vld [vmem:[%s2 + $0x8] sm:$0xff]
    %v57 = vld [vmem:[%s2 + $0x10] sm:$0xff]
    %v58 = vld [vmem:[%s2 + $0x18] sm:$0xff]
    %v59 = vld [vmem:[%s2 + $0x20] sm:$0xff]
    %v60 = vld [vmem:[%s2 + $0x28] sm:$0xff]
    %v61 = vld [vmem:[%s2 + $0x30] sm:$0xff]
    %v62 = vstv %s37
    %v63 = vmul.f32 %v62, %v55
    %v64 = vmul.f32 %v62, %v56
    %v65 = vmul.f32 %v62, %v57
    %v66 = vmul.f32 %v62, %v58
    %v67 = vmul.f32 %v62, %v59
    %v68 = vmul.f32 %v62, %v60
    %v69 = vmul.f32 %v62, %v61
    %v70 = vadd.f32 %v48, %v63
    %v71 = vadd.f32 %v49, %v64
    %v72 = vadd.f32 %v50, %v65
    %v73 = vadd.f32 %v51, %v66
    %v74 = vadd.f32 %v52, %v67
    %v75 = vadd.f32 %v53, %v68
    %v76 = vadd.f32 %v54, %v69
    %v77 = vld [vmem:[%s1] sm:$0xff]
    %v78 = vld [vmem:[%s1 + $0x8] sm:$0xff]
    %v79 = vld [vmem:[%s1 + $0x10] sm:$0xff]
    %v80 = vld [vmem:[%s1 + $0x18] sm:$0xff]
    %v81 = vld [vmem:[%s1 + $0x20] sm:$0xff]
    %v82 = vld [vmem:[%s1 + $0x28] sm:$0xff]
    %v83 = vld [vmem:[%s1 + $0x30] sm:$0xff]
    %85 = vset.pattern.permute.xlu0 0
    %86 = vperm.xlu0 %85, %v38
    %v87 = vpop.permute.xlu0 %86
    %v89 = vmul.f32 %v77, %v87
    %v90 = vmul.f32 %v78, %v87
    %v91 = vmul.f32 %v79, %v87
    %v92 = vmul.f32 %v80, %v87
    %v93 = vmul.f32 %v81, %v87
    %v94 = vmul.f32 %v82, %v87
    %v95 = vmul.f32 %v83, %v87
    %v96 = vadd.f32 %v70, %v89
    %v97 = vadd.f32 %v71, %v90
    %v98 = vadd.f32 %v72, %v91
    %v99 = vadd.f32 %v73, %v92
    %v100 = vadd.f32 %v74, %v93
    %v101 = vadd.f32 %v75, %v94
    %v102 = vadd.f32 %v76, %v95
    %104 = vset.pattern.permute.xlu0 0
    %105 = vperm.xlu0 %104, %v39
    %v106 = vpop.permute.xlu0 %105
    %v108 = vadd.f32 %v96, %v106
    %v109 = vadd.f32 %v97, %v106
    %v110 = vadd.f32 %v98, %v106
    %v111 = vadd.f32 %v99, %v106
    %v112 = vadd.f32 %v100, %v106
    %v113 = vadd.f32 %v101, %v106
    %v114 = vadd.f32 %v102, %v106
    %115 = vst [vmem:[%s6] sm:$0xff] %v108
    %116 = vst [vmem:[%s6 + $0x8] sm:$0xff] %v109
    %117 = vst [vmem:[%s6 + $0x10] sm:$0xff] %v110
    %118 = vst [vmem:[%s6 + $0x18] sm:$0xff] %v111
    %119 = vst [vmem:[%s6 + $0x20] sm:$0xff] %v112
    %120 = vst [vmem:[%s6 + $0x28] sm:$0xff] %v113
    %vm121 = vcmask 130048
    %122 = vst.msk [vmem:[%s6 + $0x30] sm:$0xff] %vm121, %v114
    %s123 = scalar_lea.vmem %s3, 56
    %v124 = vld [vmem:[%s123] sm:$0xff]
    %v125 = vld [vmem:[%s123 + $0x8] sm:$0xff]
    %v126 = vld [vmem:[%s123 + $0x10] sm:$0xff]
    %v127 = vld [vmem:[%s123 + $0x18] sm:$0xff]
    %v128 = vld [vmem:[%s123 + $0x20] sm:$0xff]
    %v129 = vld [vmem:[%s123 + $0x28] sm:$0xff]
    %v130 = vld [vmem:[%s123 + $0x30] sm:$0xff]
    %v131 = vmul.f32 %v47, %v124
    %v132 = vmul.f32 %v47, %v125
    %v133 = vmul.f32 %v47, %v126
    %v134 = vmul.f32 %v47, %v127
    %v135 = vmul.f32 %v47, %v128
    %v136 = vmul.f32 %v47, %v129
    %v137 = vmul.f32 %v47, %v130
    %s138 = scalar_lea.vmem %s2, 56
    %v139 = vld [vmem:[%s138] sm:$0xff]
    %v140 = vld [vmem:[%s138 + $0x8] sm:$0xff]
    %v141 = vld [vmem:[%s138 + $0x10] sm:$0xff]
    %v142 = vld [vmem:[%s138 + $0x18] sm:$0xff]
    %v143 = vld [vmem:[%s138 + $0x20] sm:$0xff]
    %v144 = vld [vmem:[%s138 + $0x28] sm:$0xff]
    %v145 = vld [vmem:[%s138 + $0x30] sm:$0xff]
    %v146 = vmul.f32 %v62, %v139
    %v147 = vmul.f32 %v62, %v140
    %v148 = vmul.f32 %v62, %v141
    %v149 = vmul.f32 %v62, %v142
    %v150 = vmul.f32 %v62, %v143
    %v151 = vmul.f32 %v62, %v144
    %v152 = vmul.f32 %v62, %v145
    %v153 = vadd.f32 %v131, %v146
    %v154 = vadd.f32 %v132, %v147
    %v155 = vadd.f32 %v133, %v148
    %v156 = vadd.f32 %v134, %v149
    %v157 = vadd.f32 %v135, %v150
    %v158 = vadd.f32 %v136, %v151
    %v159 = vadd.f32 %v137, %v152
    %s160 = scalar_lea.vmem %s1, 56
    %v161 = vld [vmem:[%s160] sm:$0xff]
    %v162 = vld [vmem:[%s160 + $0x8] sm:$0xff]
    %v163 = vld [vmem:[%s160 + $0x10] sm:$0xff]
    %v164 = vld [vmem:[%s160 + $0x18] sm:$0xff]
    %v165 = vld [vmem:[%s160 + $0x20] sm:$0xff]
    %v166 = vld [vmem:[%s160 + $0x28] sm:$0xff]
    %v167 = vld [vmem:[%s160 + $0x30] sm:$0xff]
    %v168 = vmul.f32 %v161, %v87
    %v169 = vmul.f32 %v162, %v87
    %v170 = vmul.f32 %v163, %v87
    %v171 = vmul.f32 %v164, %v87
    %v172 = vmul.f32 %v165, %v87
    %v173 = vmul.f32 %v166, %v87
    %v174 = vmul.f32 %v167, %v87
    %v175 = vadd.f32 %v153, %v168
    %v176 = vadd.f32 %v154, %v169
    %v177 = vadd.f32 %v155, %v170
    %v178 = vadd.f32 %v156, %v171
    %v179 = vadd.f32 %v157, %v172
    %v180 = vadd.f32 %v158, %v173
    %v181 = vadd.f32 %v159, %v174
    %v182 = vadd.f32 %v175, %v106
    %v183 = vadd.f32 %v176, %v106
    %v184 = vadd.f32 %v177, %v106
    %v185 = vadd.f32 %v178, %v106
    %v186 = vadd.f32 %v179, %v106
    %v187 = vadd.f32 %v180, %v106
    %v188 = vadd.f32 %v181, %v106
    %s189 = scalar_lea.vmem %s6, 56
    %190 = vst [vmem:[%s189] sm:$0xff] %v182
    %191 = vst [vmem:[%s189 + $0x8] sm:$0xff] %v183
    %192 = vst [vmem:[%s189 + $0x10] sm:$0xff] %v184
    %193 = vst [vmem:[%s189 + $0x18] sm:$0xff] %v185
    %194 = vst [vmem:[%s189 + $0x20] sm:$0xff] %v186
    %195 = vst [vmem:[%s189 + $0x28] sm:$0xff] %v187
    %196 = vst.msk [vmem:[%s189 + $0x30] sm:$0xff] %vm121, %v188
    // Predicated region
    $region30: #{c_rb_forward.3} parent=1 // pred_check
      _
    $region31: #{c_rb_forward.3} parent=1 // pred_check_branch
      %198 = sbr.rel (0) target = $region33
    $region32: #{c_rb_forward.3} parent=1 // pred_region
      _
    $region33: #{c_rb_forward.3} parent=1 // pred_fallthru
      _
    // Predicated region
    $region34: #{c_rb_forward.3} parent=1 // pred_check
      _
    $region35: #{c_rb_forward.3} parent=1 // pred_check_branch
      %200 = sbr.rel (0) target = $region37
    $region36: #{c_rb_forward.3} parent=1 // pred_region
      _
    $region37: #{c_rb_forward.3} parent=1 // pred_fallthru
      _
    %201 = vsyncpa [#allocation3], 1

// kernel: c_rb_forward.2
$region0: #{c_rb_forward.2}
  #allocation0 [shape = 'u32[]', space=smem, size = 0x4, offset = 0x4, fixed_abs, tag = 'smem constant byte address 0x4 - core index']
  #allocation1 [shape = 'u32[72,128]{1,0:T(1,128)}', space=vmem, size = 0x9000, scoped, tag = 'internal scratch']
  #allocation2 [shape = 'f32[72,256]{1,0:T(8,128)}', space=vmem, size = 0x12000, scoped, tag = 'scratch operand']
  #allocation3 [shape = 'f32[224,14]{1,0:T(8,128)}', space=vmem, size = 0x1c000, scoped, tag = 'scratch operand']
  #allocation4 [shape = 'f32[8,784]{1,0:T(8,128)}', space=vmem, size = 0x7000, scoped, tag = 'scratch operand']
  #allocation5 [shape = 'f32[1,1]{1,0:T(1,128)S(6)}', space=smem, size = 0x200, scoped, tag = 'scoped memory for c_rb_forward.2']
  %s0 = inlined_call_operand.<no memory space> [shape: f32[1,1], index: 0, kind: input, shape index: {}]
  %s1 = inlined_call_operand.vmem [shape: f32[2,4,256], index: 1, kind: input, shape index: {}]
  %s2 = inlined_call_operand.vmem [shape: f32[2,8,784], index: 2, kind: input, shape index: {}]
  %s3 = inlined_call_operand.vmem [shape: f32[72,4], index: 3, kind: input, shape index: {}]
  %s4 = inlined_call_operand.vmem [shape: f32[8,1], index: 4, kind: input, shape index: {}]
  %s5 = inlined_call_operand.vmem [shape: f32[14,28], index: 5, kind: input, shape index: {}]
  %s6 = inlined_call_operand.vmem [shape: f32[2,8,784], index: 6, kind: output, shape index: {0}]
  %s7 = inlined_call_operand.vmem [shape: f32[1,8,1], index: 7, kind: output, shape index: {1}]
  %s8 = inlined_call_operand.vmem [shape: f32[1,8,1], index: 8, kind: output, shape index: {2}]
  %9 = xla_tuple %s6, %s7, %s8
  %s10 = sld [smem:[#allocation0]]
  $region50: #{c_rb_forward.2} parent=0
    _
  %s12 = ssub.s32 1, %s10
  %s13 = scalar_select 0, %s12, %s10
  %14 = sst [smem:[#allocation5]] %s0
  // Predicated region
  $region2: #{c_rb_forward.2} parent=0 // pred_check
    _
  $region3: #{c_rb_forward.2} parent=0 // pred_check_branch
    %16 = sbr.rel (0) target = $region5
  $region4: #{c_rb_forward.2} parent=0 // pred_region
    _
  $region5: #{c_rb_forward.2} parent=0 // pred_fallthru
    _
  // Predicated region
  $region6: #{c_rb_forward.2} parent=0 // pred_check
    _
  $region7: #{c_rb_forward.2} parent=0 // pred_check_branch
    %18 = sbr.rel (0) target = $region9
  $region8: #{c_rb_forward.2} parent=0 // pred_region
    _
  $region9: #{c_rb_forward.2} parent=0 // pred_fallthru
    _
  // Predicated region
  $region10: #{c_rb_forward.2} parent=0 // pred_check
    _
  $region11: #{c_rb_forward.2} parent=0 // pred_check_branch
    %20 = sbr.rel (0) target = $region13
  $region12: #{c_rb_forward.2} parent=0 // pred_region
    _
  $region13: #{c_rb_forward.2} parent=0 // pred_fallthru
    _
  // Predicated region
  $region14: #{c_rb_forward.2} parent=0 // pred_check
    _
  $region15: #{c_rb_forward.2} parent=0 // pred_check_branch
    %22 = sbr.rel (0) target = $region17
  $region16: #{c_rb_forward.2} parent=0 // pred_region
    _
  $region17: #{c_rb_forward.2} parent=0 // pred_fallthru
    _
  // Predicated region
  $region18: #{c_rb_forward.2} parent=0 // pred_check
    _
  $region19: #{c_rb_forward.2} parent=0 // pred_check_branch
    %24 = sbr.rel (0) target = $region21
  $region20: #{c_rb_forward.2} parent=0 // pred_region
    _
  $region21: #{c_rb_forward.2} parent=0 // pred_fallthru
    _
  // Predicated region
  $region22: #{c_rb_forward.2} parent=0 // pred_check
    _
  $region23: #{c_rb_forward.2} parent=0 // pred_check_branch
    %26 = sbr.rel (0) target = $region25
  $region24: #{c_rb_forward.2} parent=0 // pred_region
    _
  $region25: #{c_rb_forward.2} parent=0 // pred_fallthru
    _
  %s27 = sld [smem:[#allocation5]]
  %v28 = vld [vmem:[%s3] sm:$0xff]
  %v29 = vld [vmem:[%s3 + $0x8] sm:$0xff]
  %v30 = vld [vmem:[%s3 + $0x10] sm:$0xff]
  %v31 = vld [vmem:[%s3 + $0x18] sm:$0xff]
  %v32 = vld [vmem:[%s3 + $0x20] sm:$0xff]
  %v33 = vld [vmem:[%s3 + $0x28] sm:$0xff]
  %v34 = vld [vmem:[%s3 + $0x30] sm:$0xff]
  %v35 = vld [vmem:[%s3 + $0x38] sm:$0xff]
  %v36 = vld [vmem:[%s3 + $0x40] sm:$0xff]
  %v37 = vld [vmem:[%s4] sm:$0xff]
  %v38 = vld [vmem:[%s5] sm:$0xff]
  %v39 = vld [vmem:[%s5 + $0x8] sm:$0x3f]
  %v40 = vld [vmem:[%s1] sm:$0xff]
  %42 = vst [vmem:[#allocation1] ss:$2 sm:$0xff] %v40
  %v43 = vld.sshfl [vmem:[#allocation1] sm:$0xff pattern:$0x75316420]
  %v44 = vld.sshfl [vmem:[#allocation1 + $0x8] sm:$0xff pattern:$0x75316420]
  %vm45 = vcmask 31744
  %v47 = vsel %vm45, %v28, 0
  %v50 = vsel %vm45, %v29, 0
  %v53 = vsel %vm45, %v30, 0
  %v56 = vsel %vm45, %v31, 0
  %v59 = vsel %vm45, %v32, 0
  %v62 = vsel %vm45, %v33, 0
  %v65 = vsel %vm45, %v34, 0
  %v68 = vsel %vm45, %v35, 0
  %v71 = vsel %vm45, %v36, 0
  %vm73 = vcmask 1043456
  %v74 = vsel %vm73, %v43, 0
  %v76 = vsel %vm73, %v44, 0
  %78 = vmatpush.msra.mxu0 0.0
  %79 = vmatpush.msra.mxu0 0.0
  %80 = vmatpush.msra.mxu0 0.0
  %81 = vmatpush.msra.mxu0 0.0
  %82 = vmatpush.msra.mxu0 0.0
  %83 = vmatpush.msra.mxu0 0.0
  %84 = vmatpush.msra.mxu0 0.0
  %85 = vmatpush.msra.mxu0 0.0
  %86 = vmatpush.msra.mxu0 0.0
  %87 = vmatpush.msra.mxu0 0.0
  %88 = vmatpush.msra.mxu0 0.0
  %89 = vmatpush.msra.mxu0 0.0
  %90 = vmatpush.msra.mxu0 0.0
  %91 = vmatpush.msra.mxu0 0.0
  %92 = vmatpush.msra.mxu0 0.0
  %93 = vmatpush.msra.mxu0 %v74
  %94 = vmatmul.f32.gmra.mxu0 %v47
  %v95 = vpop.f32.mrf.mxu0
  %v96 = vadd.f32 0.0, %v95
  %97 = vmatmul.f32.gmra.mxu0 %v50
  %v98 = vpop.f32.mrf.mxu0
  %v99 = vadd.f32 0.0, %v98
  %100 = vmatmul.f32.gmra.mxu0 %v53
  %v101 = vpop.f32.mrf.mxu0
  %v102 = vadd.f32 0.0, %v101
  %103 = vmatmul.f32.gmra.mxu0 %v56
  %v104 = vpop.f32.mrf.mxu0
  %v105 = vadd.f32 0.0, %v104
  %106 = vmatmul.f32.gmra.mxu0 %v59
  %v107 = vpop.f32.mrf.mxu0
  %v108 = vadd.f32 0.0, %v107
  %109 = vmatmul.f32.gmra.mxu0 %v62
  %v110 = vpop.f32.mrf.mxu0
  %v111 = vadd.f32 0.0, %v110
  %112 = vmatmul.f32.gmra.mxu0 %v65
  %v113 = vpop.f32.mrf.mxu0
  %v114 = vadd.f32 0.0, %v113
  %115 = vmatmul.f32.gmra.mxu0 %v68
  %v116 = vpop.f32.mrf.mxu0
  %v117 = vadd.f32 0.0, %v116
  %118 = vmatmul.f32.gmra.mxu0 %v71
  %v119 = vpop.f32.mrf.mxu0
  %v120 = vadd.f32 0.0, %v119
  %121 = vdwg.mxu0
  %122 = vmatpush.msra.mxu0 0.0
  %123 = vmatpush.msra.mxu0 0.0
  %124 = vmatpush.msra.mxu0 0.0
  %125 = vmatpush.msra.mxu0 0.0
  %126 = vmatpush.msra.mxu0 0.0
  %127 = vmatpush.msra.mxu0 0.0
  %128 = vmatpush.msra.mxu0 0.0
  %129 = vmatpush.msra.mxu0 0.0
  %130 = vmatpush.msra.mxu0 0.0
  %131 = vmatpush.msra.mxu0 0.0
  %132 = vmatpush.msra.mxu0 0.0
  %133 = vmatpush.msra.mxu0 0.0
  %134 = vmatpush.msra.mxu0 0.0
  %135 = vmatpush.msra.mxu0 0.0
  %136 = vmatpush.msra.mxu0 0.0
  %137 = vmatpush.msra.mxu0 %v76
  %138 = vmatmul.f32.gmra.mxu0 %v47
  %v139 = vpop.f32.mrf.mxu0
  %v140 = vadd.f32 0.0, %v139
  %141 = vmatmul.f32.gmra.mxu0 %v50
  %v142 = vpop.f32.mrf.mxu0
  %v143 = vadd.f32 0.0, %v142
  %144 = vmatmul.f32.gmra.mxu0 %v53
  %v145 = vpop.f32.mrf.mxu0
  %v146 = vadd.f32 0.0, %v145
  %147 = vmatmul.f32.gmra.mxu0 %v56
  %v148 = vpop.f32.mrf.mxu0
  %v149 = vadd.f32 0.0, %v148
  %150 = vmatmul.f32.gmra.mxu0 %v59
  %v151 = vpop.f32.mrf.mxu0
  %v152 = vadd.f32 0.0, %v151
  %153 = vmatmul.f32.gmra.mxu0 %v62
  %v154 = vpop.f32.mrf.mxu0
  %v155 = vadd.f32 0.0, %v154
  %156 = vmatmul.f32.gmra.mxu0 %v65
  %v157 = vpop.f32.mrf.mxu0
  %v158 = vadd.f32 0.0, %v157
  %159 = vmatmul.f32.gmra.mxu0 %v68
  %v160 = vpop.f32.mrf.mxu0
  %v161 = vadd.f32 0.0, %v160
  %162 = vmatmul.f32.gmra.mxu0 %v71
  %v163 = vpop.f32.mrf.mxu0
  %v164 = vadd.f32 0.0, %v163
  %165 = vdwg.mxu0
  %166 = vst [vmem:[#allocation2] sm:$0xff] %v96
  %167 = vst [vmem:[#allocation2 + $0x8] sm:$0xff] %v140
  %168 = vst [vmem:[#allocation2 + $0x10] sm:$0xff] %v99
  %169 = vst [vmem:[#allocation2 + $0x18] sm:$0xff] %v143
  %170 = vst [vmem:[#allocation2 + $0x20] sm:$0xff] %v102
  %171 = vst [vmem:[#allocation2 + $0x28] sm:$0xff] %v146
  %172 = vst [vmem:[#allocation2 + $0x30] sm:$0xff] %v105
  %173 = vst [vmem:[#allocation2 + $0x38] sm:$0xff] %v149
  %174 = vst [vmem:[#allocation2 + $0x40] sm:$0xff] %v108
  %175 = vst [vmem:[#allocation2 + $0x48] sm:$0xff] %v152
  %176 = vst [vmem:[#allocation2 + $0x50] sm:$0xff] %v111
  %177 = vst [vmem:[#allocation2 + $0x58] sm:$0xff] %v155
  %178 = vst [vmem:[#allocation2 + $0x60] sm:$0xff] %v114
  %179 = vst [vmem:[#allocation2 + $0x68] sm:$0xff] %v158
  %180 = vst [vmem:[#allocation2 + $0x70] sm:$0xff] %v117
  %181 = vst [vmem:[#allocation2 + $0x78] sm:$0xff] %v161
  %182 = vst [vmem:[#allocation2 + $0x80] sm:$0xff] %v120
  %183 = vst [vmem:[#allocation2 + $0x88] sm:$0xff] %v164
  %v184 = vld [vmem:[#allocation2] sm:$0xff]
  %v185 = vld [vmem:[#allocation2 + $0x10] sm:$0xff]
  %187 = vrot.lane.b32.xlu0 %v185, 127
  %v188 = vpop.permute.xlu0 %187
  %v190 = vadd.f32 %v184, %v188
  %v191 = vld [vmem:[#allocation2 + $0x20] sm:$0xff]
  %193 = vrot.lane.b32.xlu0 %v191, 126
  %v194 = vpop.permute.xlu0 %193
  %v196 = vadd.f32 %v190, %v194
  %v197 = vld [vmem:[#allocation2 + $0x30] sm:$0xff]
  %199 = vrot.lane.b32.xlu0 %v197, 112
  %v200 = vpop.permute.xlu0 %199
  %v202 = vadd.f32 %v196, %v200
  %v203 = vld [vmem:[#allocation2 + $0x40] sm:$0xff]
  %205 = vrot.lane.b32.xlu0 %v203, 111
  %v206 = vpop.permute.xlu0 %205
  %v208 = vadd.f32 %v202, %v206
  %v209 = vld [vmem:[#allocation2 + $0x50] sm:$0xff]
  %211 = vrot.lane.b32.xlu0 %v209, 110
  %v212 = vpop.permute.xlu0 %211
  %v214 = vadd.f32 %v208, %v212
  %v215 = vld [vmem:[#allocation2 + $0x60] sm:$0xff]
  %217 = vrot.lane.b32.xlu0 %v215, 96
  %v218 = vpop.permute.xlu0 %217
  %v220 = vadd.f32 %v214, %v218
  %v221 = vld [vmem:[#allocation2 + $0x70] sm:$0xff]
  %223 = vrot.lane.b32.xlu0 %v221, 95
  %v224 = vpop.permute.xlu0 %223
  %v226 = vadd.f32 %v220, %v224
  %v227 = vld [vmem:[#allocation2 + $0x80] sm:$0xff]
  %229 = vrot.lane.b32.xlu0 %v227, 94
  %v230 = vpop.permute.xlu0 %229
  %v232 = vadd.f32 %v226, %v230
  %234 = vset.pattern.permute.xlu0 0
  %235 = vperm.xlu0 %234, %v37
  %v236 = vpop.permute.xlu0 %235
  %v238 = vadd.f32 %v232, %v236
  %v239 = vld [vmem:[#allocation2 + $0x68] sm:$0xff]
  %241 = vrot.lane.b32.xlu0 %v239, 96
  %v242 = vpop.permute.xlu0 %241
  %v244 = vadd.f32 %v214, %v242
  %v245 = vld [vmem:[#allocation2 + $0x78] sm:$0xff]
  %247 = vrot.lane.b32.xlu0 %v245, 95
  %v248 = vpop.permute.xlu0 %247
  %v250 = vadd.f32 %v244, %v248
  %v251 = vld [vmem:[#allocation2 + $0x88] sm:$0xff]
  %253 = vrot.lane.b32.xlu0 %v251, 94
  %v254 = vpop.permute.xlu0 %253
  %v256 = vadd.f32 %v250, %v254
  %v257 = vadd.f32 %v256, %v236
  %v258 = vld [vmem:[#allocation2 + $0x38] sm:$0xff]
  %260 = vrot.lane.b32.xlu0 %v258, 112
  %v261 = vpop.permute.xlu0 %260
  %v263 = vadd.f32 %v196, %v261
  %v264 = vld [vmem:[#allocation2 + $0x48] sm:$0xff]
  %266 = vrot.lane.b32.xlu0 %v264, 111
  %v267 = vpop.permute.xlu0 %266
  %v269 = vadd.f32 %v263, %v267
  %v270 = vld [vmem:[#allocation2 + $0x58] sm:$0xff]
  %272 = vrot.lane.b32.xlu0 %v270, 110
  %v273 = vpop.permute.xlu0 %272
  %v275 = vadd.f32 %v269, %v273
  %v276 = vadd.f32 %v275, %v242
  %v277 = vadd.f32 %v276, %v248
  %v278 = vadd.f32 %v277, %v254
  %v279 = vadd.f32 %v278, %v236
  %v280 = vld [vmem:[#allocation2 + $0x8] sm:$0xff]
  %v281 = vld [vmem:[#allocation2 + $0x18] sm:$0xff]
  %283 = vrot.lane.b32.xlu0 %v281, 127
  %v284 = vpop.permute.xlu0 %283
  %v286 = vadd.f32 %v280, %v284
  %v287 = vld [vmem:[#allocation2 + $0x28] sm:$0xff]
  %289 = vrot.lane.b32.xlu0 %v287, 126
  %v290 = vpop.permute.xlu0 %289
  %v292 = vadd.f32 %v286, %v290
  %v293 = vadd.f32 %v292, %v261
  %v294 = vadd.f32 %v293, %v267
  %v295 = vadd.f32 %v294, %v273
  %v296 = vadd.f32 %v295, %v242
  %v297 = vadd.f32 %v296, %v248
  %v298 = vadd.f32 %v297, %v254
  %v299 = vadd.f32 %v298, %v236
  %v300 = vmul.f32 %v238, 0.0
  %302 = vrot.lane.b32.xlu0 %v300, 112
  %v303 = vpop.permute.xlu0 %302
  %v305 = vadd.f32 %v238, %v303
  %vm306 = vcmask 113664
  %307 = vst.msk [vmem:[#allocation3] sm:$0xff] %vm306, %v305
  %v308 = vmul.f32 %v238, 0.75
  %v309 = vmul.f32 %v238, 0.25
  %311 = vrot.lane.b32.xlu0 %v309, 112
  %v312 = vpop.permute.xlu0 %311
  %v314 = vadd.f32 %v308, %v312
  %315 = vst.msk [vmem:[#allocation3 + $0x8] sm:$0xff] %vm306, %v314
  %317 = vrot.lane.b32.xlu0 %v308, 112
  %v318 = vpop.permute.xlu0 %317
  %v320 = vadd.f32 %v309, %v318
  %321 = vst.msk [vmem:[#allocation3 + $0x10] sm:$0xff] %vm306, %v320
  %323 = vrot.lane.b32.xlu0 %v314, 112
  %v324 = vpop.permute.xlu0 %323
  %326 = vst.msk [vmem:[#allocation3 + $0x18] sm:$0xff] %vm306, %v324
  %328 = vrot.lane.b32.xlu0 %v320, 112
  %v329 = vpop.permute.xlu0 %328
  %331 = vst.msk [vmem:[#allocation3 + $0x20] sm:$0xff] %vm306, %v329
  %332 = vrot.lane.b32.xlu0 %v314, 96
  %v333 = vpop.permute.xlu0 %332
  %335 = vst.msk [vmem:[#allocation3 + $0x28] sm:$0xff] %vm306, %v333
  %336 = vrot.lane.b32.xlu0 %v320, 96
  %v337 = vpop.permute.xlu0 %336
  %339 = vst.msk [vmem:[#allocation3 + $0x30] sm:$0xff] %vm306, %v337
  %340 = vrot.lane.b32.xlu0 %v314, 80
  %v341 = vpop.permute.xlu0 %340
  %343 = vst.msk [vmem:[#allocation3 + $0x38] sm:$0xff] %vm306, %v341
  %344 = vrot.lane.b32.xlu0 %v320, 80
  %v345 = vpop.permute.xlu0 %344
  %347 = vst.msk [vmem:[#allocation3 + $0x40] sm:$0xff] %vm306, %v345
  %348 = vrot.lane.b32.xlu0 %v314, 64
  %v349 = vpop.permute.xlu0 %348
  %351 = vst.msk [vmem:[#allocation3 + $0x48] sm:$0xff] %vm306, %v349
  %352 = vrot.lane.b32.xlu0 %v320, 64
  %v353 = vpop.permute.xlu0 %352
  %355 = vst.msk [vmem:[#allocation3 + $0x50] sm:$0xff] %vm306, %v353
  %v356 = vmul.f32 %v257, 0.25
  %358 = vrot.lane.b32.xlu0 %v356, 112
  %v359 = vpop.permute.xlu0 %358
  %v361 = vadd.f32 %v308, %v359
  %363 = vrot.lane.b32.xlu0 %v361, 48
  %v364 = vpop.permute.xlu0 %363
  %366 = vst.msk [vmem:[#allocation3 + $0x58] sm:$0xff] %vm306, %v364
  %v367 = vmul.f32 %v257, 0.75
  %369 = vrot.lane.b32.xlu0 %v367, 112
  %v370 = vpop.permute.xlu0 %369
  %v372 = vadd.f32 %v309, %v370
  %374 = vrot.lane.b32.xlu0 %v372, 48
  %v375 = vpop.permute.xlu0 %374
  %377 = vst.msk [vmem:[#allocation3 + $0x60] sm:$0xff] %vm306, %v375
  %v378 = vmul.f32 %v279, 0.25
  %380 = vrot.lane.b32.xlu0 %v378, 112
  %v381 = vpop.permute.xlu0 %380
  %v383 = vadd.f32 %v367, %v381
  %385 = vrot.lane.b32.xlu0 %v383, 32
  %v386 = vpop.permute.xlu0 %385
  %388 = vst.msk [vmem:[#allocation3 + $0x68] sm:$0xff] %vm306, %v386
  %v389 = vmul.f32 %v279, 0.75
  %391 = vrot.lane.b32.xlu0 %v389, 112
  %v392 = vpop.permute.xlu0 %391
  %v394 = vadd.f32 %v356, %v392
  %396 = vrot.lane.b32.xlu0 %v394, 32
  %v397 = vpop.permute.xlu0 %396
  %399 = vst.msk [vmem:[#allocation3 + $0x70] sm:$0xff] %vm306, %v397
  %v400 = vmul.f32 %v299, 0.25
  %402 = vrot.lane.b32.xlu0 %v400, 112
  %v403 = vpop.permute.xlu0 %402
  %v405 = vadd.f32 %v389, %v403
  %407 = vrot.lane.b32.xlu0 %v405, 16
  %v408 = vpop.permute.xlu0 %407
  %410 = vst.msk [vmem:[#allocation3 + $0x78] sm:$0xff] %vm306, %v408
  %v411 = vmul.f32 %v299, 0.75
  %413 = vrot.lane.b32.xlu0 %v411, 112
  %v414 = vpop.permute.xlu0 %413
  %v416 = vadd.f32 %v378, %v414
  %418 = vrot.lane.b32.xlu0 %v416, 16
  %v419 = vpop.permute.xlu0 %418
  %421 = vst.msk [vmem:[#allocation3 + $0x80] sm:$0xff] %vm306, %v419
  %v422 = vadd.f32 %v411, %v403
  %423 = vst.msk [vmem:[#allocation3 + $0x88] sm:$0xff] %vm306, %v422
  %v424 = vadd.f32 %v400, %v414
  %425 = vst.msk [vmem:[#allocation3 + $0x90] sm:$0xff] %vm306, %v424
  %427 = vrot.lane.b32.xlu0 %v422, 112
  %v428 = vpop.permute.xlu0 %427
  %430 = vst.msk [vmem:[#allocation3 + $0x98] sm:$0xff] %vm306, %v428
  %432 = vrot.lane.b32.xlu0 %v424, 112
  %v433 = vpop.permute.xlu0 %432
  %435 = vst.msk [vmem:[#allocation3 + $0xa0] sm:$0xff] %vm306, %v433
  %436 = vrot.lane.b32.xlu0 %v422, 96
  %v437 = vpop.permute.xlu0 %436
  %439 = vst.msk [vmem:[#allocation3 + $0xa8] sm:$0xff] %vm306, %v437
  %440 = vrot.lane.b32.xlu0 %v424, 96
  %v441 = vpop.permute.xlu0 %440
  %443 = vst.msk [vmem:[#allocation3 + $0xb0] sm:$0xff] %vm306, %v441
  %444 = vrot.lane.b32.xlu0 %v422, 80
  %v445 = vpop.permute.xlu0 %444
  %447 = vst.msk [vmem:[#allocation3 + $0xb8] sm:$0xff] %vm306, %v445
  %448 = vrot.lane.b32.xlu0 %v424, 80
  %v449 = vpop.permute.xlu0 %448
  %451 = vst.msk [vmem:[#allocation3 + $0xc0] sm:$0xff] %vm306, %v449
  %452 = vrot.lane.b32.xlu0 %v422, 64
  %v453 = vpop.permute.xlu0 %452
  %455 = vst.msk [vmem:[#allocation3 + $0xc8] sm:$0xff] %vm306, %v453
  %456 = vrot.lane.b32.xlu0 %v424, 64
  %v457 = vpop.permute.xlu0 %456
  %459 = vst.msk [vmem:[#allocation3 + $0xd0] sm:$0xff] %vm306, %v457
  %v460 = vadd.f32 %v411, %v400
  %462 = vrot.lane.b32.xlu0 %v460, 48
  %v463 = vpop.permute.xlu0 %462
  %465 = vst.msk [vmem:[#allocation3 + $0xd8] sm:$0xff] %vm306, %v463
  %v466 = vld [vmem:[#allocation3] sm:$0xff]
  %v467 = vld [vmem:[#allocation3 + $0x8] sm:$0xff]
  %v468 = vld [vmem:[#allocation3 + $0x10] sm:$0xff]
  %v469 = vld [vmem:[#allocation3 + $0x18] sm:$0xff]
  %v470 = vld [vmem:[#allocation3 + $0x20] sm:$0xff]
  %v471 = vld [vmem:[#allocation3 + $0x28] sm:$0xff]
  %v472 = vld [vmem:[#allocation3 + $0x30] sm:$0xff]
  %v473 = vld [vmem:[#allocation3 + $0x38] sm:$0xff]
  %v474 = vld [vmem:[#allocation3 + $0x40] sm:$0xff]
  %v475 = vld [vmem:[#allocation3 + $0x48] sm:$0xff]
  %v476 = vld [vmem:[#allocation3 + $0x50] sm:$0xff]
  %v477 = vld [vmem:[#allocation3 + $0x58] sm:$0xff]
  %v478 = vld [vmem:[#allocation3 + $0x60] sm:$0xff]
  %v479 = vld [vmem:[#allocation3 + $0x68] sm:$0xff]
  %v480 = vld [vmem:[#allocation3 + $0x70] sm:$0xff]
  %v481 = vld [vmem:[#allocation3 + $0x78] sm:$0xff]
  %v482 = vld [vmem:[#allocation3 + $0x80] sm:$0xff]
  %v483 = vld [vmem:[#allocation3 + $0x88] sm:$0xff]
  %v484 = vld [vmem:[#allocation3 + $0x90] sm:$0xff]
  %v485 = vld [vmem:[#allocation3 + $0x98] sm:$0xff]
  %v486 = vld [vmem:[#allocation3 + $0xa0] sm:$0xff]
  %v487 = vld [vmem:[#allocation3 + $0xa8] sm:$0xff]
  %v488 = vld [vmem:[#allocation3 + $0xb0] sm:$0xff]
  %v489 = vld [vmem:[#allocation3 + $0xb8] sm:$0xff]
  %v490 = vld [vmem:[#allocation3 + $0xc0] sm:$0xff]
  %v491 = vld [vmem:[#allocation3 + $0xc8] sm:$0xff]
  %v492 = vld [vmem:[#allocation3 + $0xd0] sm:$0xff]
  %v493 = vld [vmem:[#allocation3 + $0xd8] sm:$0xff]
  %v495 = vsel %vm306, %v466, 0
  %v498 = vsel %vm306, %v467, 0
  %v501 = vsel %vm306, %v468, 0
  %v504 = vsel %vm306, %v469, 0
  %v507 = vsel %vm306, %v470, 0
  %v510 = vsel %vm306, %v471, 0
  %v513 = vsel %vm306, %v472, 0
  %v516 = vsel %vm306, %v473, 0
  %v519 = vsel %vm306, %v474, 0
  %v522 = vsel %vm306, %v475, 0
  %v525 = vsel %vm306, %v476, 0
  %v528 = vsel %vm306, %v477, 0
  %v531 = vsel %vm306, %v478, 0
  %v534 = vsel %vm306, %v479, 0
  %v537 = vsel %vm306, %v480, 0
  %v540 = vsel %vm306, %v481, 0
  %v543 = vsel %vm306, %v482, 0
  %v546 = vsel %vm306, %v483, 0
  %v549 = vsel %vm306, %v484, 0
  %v552 = vsel %vm306, %v485, 0
  %v555 = vsel %vm306, %v486, 0
  %v558 = vsel %vm306, %v487, 0
  %v561 = vsel %vm306, %v488, 0
  %v564 = vsel %vm306, %v489, 0
  %v567 = vsel %vm306, %v490, 0
  %v570 = vsel %vm306, %v491, 0
  %v573 = vsel %vm306, %v492, 0
  %v576 = vsel %vm306, %v493, 0
  %vm578 = vcmask 1045504
  %v580 = vsel %vm578, %v39, 0
  %582 = vmatpush.msra.mxu0 0.0
  %583 = vmatpush.msra.mxu0 0.0
  %584 = vmatpush.msra.mxu0 0.0
  %585 = vmatpush.msra.mxu0 0.0
  %586 = vmatpush.msra.mxu0 0.0
  %587 = vmatpush.msra.mxu0 0.0
  %588 = vmatpush.msra.mxu0 0.0
  %589 = vmatpush.msra.mxu0 0.0
  %590 = vmatpush.msra.mxu0 0.0
  %591 = vmatpush.msra.mxu0 0.0
  %592 = vmatpush.msra.mxu0 0.0
  %593 = vmatpush.msra.mxu0 0.0
  %594 = vmatpush.msra.mxu0 0.0
  %595 = vmatpush.msra.mxu0 0.0
  %596 = vmatpush.msra.mxu0 %v580
  %597 = vmatpush.msra.mxu0 %v38
  %598 = vmatmul.f32.gmra.mxu0 %v495
  %v599 = vpop.f32.mrf.mxu0
  %v600 = vadd.f32 0.0, %v599
  %601 = vmatmul.f32.gmra.mxu0 %v498
  %v602 = vpop.f32.mrf.mxu0
  %v603 = vadd.f32 0.0, %v602
  %604 = vmatmul.f32.gmra.mxu0 %v501
  %v605 = vpop.f32.mrf.mxu0
  %v606 = vadd.f32 0.0, %v605
  %607 = vmatmul.f32.gmra.mxu0 %v504
  %v608 = vpop.f32.mrf.mxu0
  %v609 = vadd.f32 0.0, %v608
  %610 = vmatmul.f32.gmra.mxu0 %v507
  %v611 = vpop.f32.mrf.mxu0
  %v612 = vadd.f32 0.0, %v611
  %613 = vmatmul.f32.gmra.mxu0 %v510
  %v614 = vpop.f32.mrf.mxu0
  %v615 = vadd.f32 0.0, %v614
  %616 = vmatmul.f32.gmra.mxu0 %v513
  %v617 = vpop.f32.mrf.mxu0
  %v618 = vadd.f32 0.0, %v617
  %619 = vmatmul.f32.gmra.mxu0 %v516
  %v620 = vpop.f32.mrf.mxu0
  %v621 = vadd.f32 0.0, %v620
  %622 = vmatmul.f32.gmra.mxu0 %v519
  %v623 = vpop.f32.mrf.mxu0
  %v624 = vadd.f32 0.0, %v623
  %625 = vmatmul.f32.gmra.mxu0 %v522
  %v626 = vpop.f32.mrf.mxu0
  %v627 = vadd.f32 0.0, %v626
  %628 = vmatmul.f32.gmra.mxu0 %v525
  %v629 = vpop.f32.mrf.mxu0
  %v630 = vadd.f32 0.0, %v629
  %631 = vmatmul.f32.gmra.mxu0 %v528
  %v632 = vpop.f32.mrf.mxu0
  %v633 = vadd.f32 0.0, %v632
  %634 = vmatmul.f32.gmra.mxu0 %v531
  %v635 = vpop.f32.mrf.mxu0
  %v636 = vadd.f32 0.0, %v635
  %637 = vmatmul.f32.gmra.mxu0 %v534
  %v638 = vpop.f32.mrf.mxu0
  %v639 = vadd.f32 0.0, %v638
  %640 = vmatmul.f32.gmra.mxu0 %v537
  %v641 = vpop.f32.mrf.mxu0
  %v642 = vadd.f32 0.0, %v641
  %643 = vmatmul.f32.gmra.mxu0 %v540
  %v644 = vpop.f32.mrf.mxu0
  %v645 = vadd.f32 0.0, %v644
  %646 = vmatmul.f32.gmra.mxu0 %v543
  %v647 = vpop.f32.mrf.mxu0
  %v648 = vadd.f32 0.0, %v647
  %649 = vmatmul.f32.gmra.mxu0 %v546
  %v650 = vpop.f32.mrf.mxu0
  %v651 = vadd.f32 0.0, %v650
  %652 = vmatmul.f32.gmra.mxu0 %v549
  %v653 = vpop.f32.mrf.mxu0
  %v654 = vadd.f32 0.0, %v653
  %655 = vmatmul.f32.gmra.mxu0 %v552
  %v656 = vpop.f32.mrf.mxu0
  %v657 = vadd.f32 0.0, %v656
  %658 = vmatmul.f32.gmra.mxu0 %v555
  %v659 = vpop.f32.mrf.mxu0
  %v660 = vadd.f32 0.0, %v659
  %661 = vmatmul.f32.gmra.mxu0 %v558
  %v662 = vpop.f32.mrf.mxu0
  %v663 = vadd.f32 0.0, %v662
  %664 = vmatmul.f32.gmra.mxu0 %v561
  %v665 = vpop.f32.mrf.mxu0
  %v666 = vadd.f32 0.0, %v665
  %667 = vmatmul.f32.gmra.mxu0 %v564
  %v668 = vpop.f32.mrf.mxu0
  %v669 = vadd.f32 0.0, %v668
  %670 = vmatmul.f32.gmra.mxu0 %v567
  %v671 = vpop.f32.mrf.mxu0
  %v672 = vadd.f32 0.0, %v671
  %673 = vmatmul.f32.gmra.mxu0 %v570
  %v674 = vpop.f32.mrf.mxu0
  %v675 = vadd.f32 0.0, %v674
  %676 = vmatmul.f32.gmra.mxu0 %v573
  %v677 = vpop.f32.mrf.mxu0
  %v678 = vadd.f32 0.0, %v677
  %679 = vmatmul.f32.gmra.mxu0 %v576
  %v680 = vpop.f32.mrf.mxu0
  %v681 = vadd.f32 0.0, %v680
  %682 = vdwg.mxu0
  %vm683 = vcmask 228352
  %684 = vst.msk [vmem:[#allocation4] sm:$0xff] %vm683, %v600
  %686 = vrot.lane.b32.xlu0 %v603, 28
  %v687 = vpop.permute.xlu0 %686
  %vm689 = vcmask 457952
  %690 = vst.msk [vmem:[#allocation4] sm:$0xff] %vm689, %v687
  %692 = vrot.lane.b32.xlu0 %v606, 56
  %v693 = vpop.permute.xlu0 %692
  %vm695 = vcmask 687552
  %696 = vst.msk [vmem:[#allocation4] sm:$0xff] %vm695, %v693
  %698 = vrot.lane.b32.xlu0 %v609, 84
  %v699 = vpop.permute.xlu0 %698
  %vm701 = vcmask 917152
  %702 = vst.msk [vmem:[#allocation4] sm:$0xff] %vm701, %v699
  %704 = vrot.lane.b32.xlu0 %v612, 112
  %v705 = vpop.permute.xlu0 %704
  %vm707 = vcmask 1048448
  %708 = vst.msk [vmem:[#allocation4] sm:$0xff] %vm707, %v705
  %vm709 = vcmask 97280
  %710 = vst.msk [vmem:[#allocation4 + $0x8] sm:$0xff] %vm709, %v705
  %712 = vrot.lane.b32.xlu0 %v615, 12
  %v713 = vpop.permute.xlu0 %712
  %vm715 = vcmask 326752
  %716 = vst.msk [vmem:[#allocation4 + $0x8] sm:$0xff] %vm715, %v713
  %718 = vrot.lane.b32.xlu0 %v618, 40
  %v719 = vpop.permute.xlu0 %718
  %vm721 = vcmask 556352
  %722 = vst.msk [vmem:[#allocation4 + $0x8] sm:$0xff] %vm721, %v719
  %724 = vrot.lane.b32.xlu0 %v621, 68
  %v725 = vpop.permute.xlu0 %724
  %vm727 = vcmask 785952
  %728 = vst.msk [vmem:[#allocation4 + $0x8] sm:$0xff] %vm727, %v725
  %730 = vrot.lane.b32.xlu0 %v624, 96
  %v731 = vpop.permute.xlu0 %730
  %vm733 = vcmask 1015552
  %734 = vst.msk [vmem:[#allocation4 + $0x8] sm:$0xff] %vm733, %v731
  %736 = vrot.lane.b32.xlu0 %v627, 124
  %v737 = vpop.permute.xlu0 %736
  %vm739 = vcmask 1048544
  %740 = vst.msk [vmem:[#allocation4 + $0x8] sm:$0xff] %vm739, %v737
  %vm741 = vcmask 195584
  %742 = vst.msk [vmem:[#allocation4 + $0x10] sm:$0xff] %vm741, %v737
  %744 = vrot.lane.b32.xlu0 %v630, 24
  %v745 = vpop.permute.xlu0 %744
  %vm747 = vcmask 425152
  %748 = vst.msk [vmem:[#allocation4 + $0x10] sm:$0xff] %vm747, %v745
  %750 = vrot.lane.b32.xlu0 %v633, 52
  %v751 = vpop.permute.xlu0 %750
  %vm753 = vcmask 654752
  %754 = vst.msk [vmem:[#allocation4 + $0x10] sm:$0xff] %vm753, %v751
  %756 = vrot.lane.b32.xlu0 %v636, 80
  %v757 = vpop.permute.xlu0 %756
  %vm759 = vcmask 884352
  %760 = vst.msk [vmem:[#allocation4 + $0x10] sm:$0xff] %vm759, %v757
  %762 = vrot.lane.b32.xlu0 %v639, 108
  %v763 = vpop.permute.xlu0 %762
  %vm765 = vcmask 1048416
  %766 = vst.msk [vmem:[#allocation4 + $0x10] sm:$0xff] %vm765, %v763
  %vm767 = vcmask 64512
  %768 = vst.msk [vmem:[#allocation4 + $0x18] sm:$0xff] %vm767, %v763
  %770 = vrot.lane.b32.xlu0 %v642, 8
  %v771 = vpop.permute.xlu0 %770
  %vm773 = vcmask 293952
  %774 = vst.msk [vmem:[#allocation4 + $0x18] sm:$0xff] %vm773, %v771
  %776 = vrot.lane.b32.xlu0 %v645, 36
  %v777 = vpop.permute.xlu0 %776
  %vm779 = vcmask 523552
  %780 = vst.msk [vmem:[#allocation4 + $0x18] sm:$0xff] %vm779, %v777
  %782 = vrot.lane.b32.xlu0 %v648, 64
  %v783 = vpop.permute.xlu0 %782
  %vm785 = vcmask 753152
  %786 = vst.msk [vmem:[#allocation4 + $0x18] sm:$0xff] %vm785, %v783
  %788 = vrot.lane.b32.xlu0 %v651, 92
  %v789 = vpop.permute.xlu0 %788
  %vm791 = vcmask 982752
  %792 = vst.msk [vmem:[#allocation4 + $0x18] sm:$0xff] %vm791, %v789
  %794 = vrot.lane.b32.xlu0 %v654, 120
  %v795 = vpop.permute.xlu0 %794
  %vm797 = vcmask 1048512
  %798 = vst.msk [vmem:[#allocation4 + $0x18] sm:$0xff] %vm797, %v795
  %vm799 = vcmask 162816
  %800 = vst.msk [vmem:[#allocation4 + $0x20] sm:$0xff] %vm799, %v795
  %802 = vrot.lane.b32.xlu0 %v657, 20
  %v803 = vpop.permute.xlu0 %802
  %vm805 = vcmask 392352
  %806 = vst.msk [vmem:[#allocation4 + $0x20] sm:$0xff] %vm805, %v803
  %808 = vrot.lane.b32.xlu0 %v660, 48
  %v809 = vpop.permute.xlu0 %808
  %vm811 = vcmask 621952
  %812 = vst.msk [vmem:[#allocation4 + $0x20] sm:$0xff] %vm811, %v809
  %814 = vrot.lane.b32.xlu0 %v663, 76
  %v815 = vpop.permute.xlu0 %814
  %vm817 = vcmask 851552
  %818 = vst.msk [vmem:[#allocation4 + $0x20] sm:$0xff] %vm817, %v815
  %820 = vrot.lane.b32.xlu0 %v666, 104
  %v821 = vpop.permute.xlu0 %820
  %vm823 = vcmask 1048384
  %824 = vst.msk [vmem:[#allocation4 + $0x20] sm:$0xff] %vm823, %v821
  %825 = vst.msk [vmem:[#allocation4 + $0x28] sm:$0xff] %vm45, %v821
  %827 = vrot.lane.b32.xlu0 %v669, 4
  %v828 = vpop.permute.xlu0 %827
  %vm830 = vcmask 261152
  %831 = vst.msk [vmem:[#allocation4 + $0x28] sm:$0xff] %vm830, %v828
  %833 = vrot.lane.b32.xlu0 %v672, 32
  %v834 = vpop.permute.xlu0 %833
  %vm836 = vcmask 490752
  %837 = vst.msk [vmem:[#allocation4 + $0x28] sm:$0xff] %vm836, %v834
  %839 = vrot.lane.b32.xlu0 %v675, 60
  %v840 = vpop.permute.xlu0 %839
  %vm842 = vcmask 720352
  %843 = vst.msk [vmem:[#allocation4 + $0x28] sm:$0xff] %vm842, %v840
  %845 = vrot.lane.b32.xlu0 %v678, 88
  %v846 = vpop.permute.xlu0 %845
  %vm848 = vcmask 949952
  %849 = vst.msk [vmem:[#allocation4 + $0x28] sm:$0xff] %vm848, %v846
  %851 = vrot.lane.b32.xlu0 %v681, 116
  %v852 = vpop.permute.xlu0 %851
  %vm854 = vcmask 1048480
  %855 = vst.msk [vmem:[#allocation4 + $0x28] sm:$0xff] %vm854, %v852
  %vm856 = vcmask 130048
  %857 = vst.msk [vmem:[#allocation4 + $0x30] sm:$0xff] %vm856, %v852
  %v858 = vld [vmem:[%s2] sm:$0xff]
  %v859 = vld [vmem:[%s2 + $0x8] sm:$0xff]
  %v860 = vld [vmem:[%s2 + $0x10] sm:$0xff]
  %v861 = vld [vmem:[%s2 + $0x18] sm:$0xff]
  %v862 = vld [vmem:[%s2 + $0x20] sm:$0xff]
  %v863 = vld [vmem:[%s2 + $0x28] sm:$0xff]
  %v864 = vld [vmem:[%s2 + $0x30] sm:$0xff]
  %v865 = vstv %s27
  %v866 = vmul.f32 %v865, %v858
  %v867 = vmul.f32 %v865, %v859
  %v868 = vmul.f32 %v865, %v860
  %v869 = vmul.f32 %v865, %v861
  %v870 = vmul.f32 %v865, %v862
  %v871 = vmul.f32 %v865, %v863
  %v872 = vmul.f32 %v865, %v864
  %v873 = vld [vmem:[#allocation4] sm:$0xff]
  %v874 = vld [vmem:[#allocation4 + $0x8] sm:$0xff]
  %v875 = vld [vmem:[#allocation4 + $0x10] sm:$0xff]
  %v876 = vld [vmem:[#allocation4 + $0x18] sm:$0xff]
  %v877 = vld [vmem:[#allocation4 + $0x20] sm:$0xff]
  %v878 = vld [vmem:[#allocation4 + $0x28] sm:$0xff]
  %v879 = vld [vmem:[#allocation4 + $0x30] sm:$0xff]
  %v880 = vadd.f32 %v866, %v873
  %v881 = vadd.f32 %v867, %v874
  %v882 = vadd.f32 %v868, %v875
  %v883 = vadd.f32 %v869, %v876
  %v884 = vadd.f32 %v870, %v877
  %v885 = vadd.f32 %v871, %v878
  %v886 = vadd.f32 %v872, %v879
  %v887 = vmax.f32 %v880, 0.0
  %v888 = vmax.f32 %v881, 0.0
  %v889 = vmax.f32 %v882, 0.0
  %v890 = vmax.f32 %v883, 0.0
  %v891 = vmax.f32 %v884, 0.0
  %v892 = vmax.f32 %v885, 0.0
  %v893 = vmax.f32 %v886, 0.0
  %894 = vst [vmem:[%s6] sm:$0xff] %v887
  %895 = vst [vmem:[%s6 + $0x8] sm:$0xff] %v888
  %896 = vst [vmem:[%s6 + $0x10] sm:$0xff] %v889
  %897 = vst [vmem:[%s6 + $0x18] sm:$0xff] %v890
  %898 = vst [vmem:[%s6 + $0x20] sm:$0xff] %v891
  %899 = vst [vmem:[%s6 + $0x28] sm:$0xff] %v892
  %900 = vst.msk [vmem:[%s6 + $0x30] sm:$0xff] %vm856, %v893
  %v901 = vadd.f32 %v887, %v888
  %v902 = vadd.f32 %v901, %v889
  %v903 = vadd.f32 %v902, %v890
  %v904 = vadd.f32 %v903, %v891
  %v905 = vadd.f32 %v904, %v892
  %v906 = vsel %vm856, %v893, 0.0
  %v907 = vadd.f32 %v905, %v906
  %908 = vadd.xlane.f32.xlu0 %v907
  %v909 = vpop.xlane.xlu0 %908
  %v910 = vadd.f32 %v909, 0.0
  %v911 = vmul.f32 %v887, %v887
  %v912 = vmul.f32 %v888, %v888
  %v913 = vmul.f32 %v889, %v889
  %v914 = vmul.f32 %v890, %v890
  %v915 = vmul.f32 %v891, %v891
  %v916 = vmul.f32 %v892, %v892
  %v917 = vmul.f32 %v893, %v893
  %v918 = vadd.f32 %v911, %v912
  %v919 = vadd.f32 %v918, %v913
  %v920 = vadd.f32 %v919, %v914
  %v921 = vadd.f32 %v920, %v915
  %v922 = vadd.f32 %v921, %v916
  %v923 = vsel %vm856, %v917, 0.0
  %v924 = vadd.f32 %v922, %v923
  %925 = vadd.xlane.f32.xlu0 %v924
  %v926 = vpop.xlane.xlu0 %925
  %v927 = vadd.f32 %v926, 0.0
  %s928 = scalar_lea.vmem %s1, 8
  %v929 = vld [vmem:[%s928] sm:$0xff]
  %931 = vst [vmem:[#allocation1] ss:$2 sm:$0xff] %v929
  %v932 = vld.sshfl [vmem:[#allocation1] sm:$0xff pattern:$0x75316420]
  %v933 = vld.sshfl [vmem:[#allocation1 + $0x8] sm:$0xff pattern:$0x75316420]
  %v934 = vsel %vm73, %v932, 0
  %v936 = vsel %vm73, %v933, 0
  %938 = vmatpush.msra.mxu0 0.0
  %939 = vmatpush.msra.mxu0 0.0
  %940 = vmatpush.msra.mxu0 0.0
  %941 = vmatpush.msra.mxu0 0.0
  %942 = vmatpush.msra.mxu0 0.0
  %943 = vmatpush.msra.mxu0 0.0
  %944 = vmatpush.msra.mxu0 0.0
  %945 = vmatpush.msra.mxu0 0.0
  %946 = vmatpush.msra.mxu0 0.0
  %947 = vmatpush.msra.mxu0 0.0
  %948 = vmatpush.msra.mxu0 0.0
  %949 = vmatpush.msra.mxu0 0.0
  %950 = vmatpush.msra.mxu0 0.0
  %951 = vmatpush.msra.mxu0 0.0
  %952 = vmatpush.msra.mxu0 0.0
  %953 = vmatpush.msra.mxu0 %v934
  %954 = vmatmul.f32.gmra.mxu0 %v47
  %v955 = vpop.f32.mrf.mxu0
  %v956 = vadd.f32 0.0, %v955
  %957 = vmatmul.f32.gmra.mxu0 %v50
  %v958 = vpop.f32.mrf.mxu0
  %v959 = vadd.f32 0.0, %v958
  %960 = vmatmul.f32.gmra.mxu0 %v53
  %v961 = vpop.f32.mrf.mxu0
  %v962 = vadd.f32 0.0, %v961
  %963 = vmatmul.f32.gmra.mxu0 %v56
  %v964 = vpop.f32.mrf.mxu0
  %v965 = vadd.f32 0.0, %v964
  %966 = vmatmul.f32.gmra.mxu0 %v59
  %v967 = vpop.f32.mrf.mxu0
  %v968 = vadd.f32 0.0, %v967
  %969 = vmatmul.f32.gmra.mxu0 %v62
  %v970 = vpop.f32.mrf.mxu0
  %v971 = vadd.f32 0.0, %v970
  %972 = vmatmul.f32.gmra.mxu0 %v65
  %v973 = vpop.f32.mrf.mxu0
  %v974 = vadd.f32 0.0, %v973
  %975 = vmatmul.f32.gmra.mxu0 %v68
  %v976 = vpop.f32.mrf.mxu0
  %v977 = vadd.f32 0.0, %v976
  %978 = vmatmul.f32.gmra.mxu0 %v71
  %v979 = vpop.f32.mrf.mxu0
  %v980 = vadd.f32 0.0, %v979
  %981 = vdwg.mxu0
  %982 = vmatpush.msra.mxu0 0.0
  %983 = vmatpush.msra.mxu0 0.0
  %984 = vmatpush.msra.mxu0 0.0
  %985 = vmatpush.msra.mxu0 0.0
  %986 = vmatpush.msra.mxu0 0.0
  %987 = vmatpush.msra.mxu0 0.0
  %988 = vmatpush.msra.mxu0 0.0
  %989 = vmatpush.msra.mxu0 0.0
  %990 = vmatpush.msra.mxu0 0.0
  %991 = vmatpush.msra.mxu0 0.0
  %992 = vmatpush.msra.mxu0 0.0
  %993 = vmatpush.msra.mxu0 0.0
  %994 = vmatpush.msra.mxu0 0.0
  %995 = vmatpush.msra.mxu0 0.0
  %996 = vmatpush.msra.mxu0 0.0
  %997 = vmatpush.msra.mxu0 %v936
  %998 = vmatmul.f32.gmra.mxu0 %v47
  %v999 = vpop.f32.mrf.mxu0
  %v1000 = vadd.f32 0.0, %v999
  %1001 = vmatmul.f32.gmra.mxu0 %v50
  %v1002 = vpop.f32.mrf.mxu0
  %v1003 = vadd.f32 0.0, %v1002
  %1004 = vmatmul.f32.gmra.mxu0 %v53
  %v1005 = vpop.f32.mrf.mxu0
  %v1006 = vadd.f32 0.0, %v1005
  %1007 = vmatmul.f32.gmra.mxu0 %v56
  %v1008 = vpop.f32.mrf.mxu0
  %v1009 = vadd.f32 0.0, %v1008
  %1010 = vmatmul.f32.gmra.mxu0 %v59
  %v1011 = vpop.f32.mrf.mxu0
  %v1012 = vadd.f32 0.0, %v1011
  %1013 = vmatmul.f32.gmra.mxu0 %v62
  %v1014 = vpop.f32.mrf.mxu0
  %v1015 = vadd.f32 0.0, %v1014
  %1016 = vmatmul.f32.gmra.mxu0 %v65
  %v1017 = vpop.f32.mrf.mxu0
  %v1018 = vadd.f32 0.0, %v1017
  %1019 = vmatmul.f32.gmra.mxu0 %v68
  %v1020 = vpop.f32.mrf.mxu0
  %v1021 = vadd.f32 0.0, %v1020
  %1022 = vmatmul.f32.gmra.mxu0 %v71
  %v1023 = vpop.f32.mrf.mxu0
  %v1024 = vadd.f32 0.0, %v1023
  %1025 = vdwg.mxu0
  %1026 = vst [vmem:[#allocation2] sm:$0xff] %v956
  %1027 = vst [vmem:[#allocation2 + $0x8] sm:$0xff] %v1000
  %1028 = vst [vmem:[#allocation2 + $0x10] sm:$0xff] %v959
  %1029 = vst [vmem:[#allocation2 + $0x18] sm:$0xff] %v1003
  %1030 = vst [vmem:[#allocation2 + $0x20] sm:$0xff] %v962
  %1031 = vst [vmem:[#allocation2 + $0x28] sm:$0xff] %v1006
  %1032 = vst [vmem:[#allocation2 + $0x30] sm:$0xff] %v965
  %1033 = vst [vmem:[#allocation2 + $0x38] sm:$0xff] %v1009
  %1034 = vst [vmem:[#allocation2 + $0x40] sm:$0xff] %v968
  %1035 = vst [vmem:[#allocation2 + $0x48] sm:$0xff] %v1012
  %1036 = vst [vmem:[#allocation2 + $0x50] sm:$0xff] %v971
  %1037 = vst [vmem:[#allocation2 + $0x58] sm:$0xff] %v1015
  %1038 = vst [vmem:[#allocation2 + $0x60] sm:$0xff] %v974
  %1039 = vst [vmem:[#allocation2 + $0x68] sm:$0xff] %v1018
  %1040 = vst [vmem:[#allocation2 + $0x70] sm:$0xff] %v977
  %1041 = vst [vmem:[#allocation2 + $0x78] sm:$0xff] %v1021
  %1042 = vst [vmem:[#allocation2 + $0x80] sm:$0xff] %v980
  %1043 = vst [vmem:[#allocation2 + $0x88] sm:$0xff] %v1024
  %v1044 = vld [vmem:[#allocation2] sm:$0xff]
  %v1045 = vld [vmem:[#allocation2 + $0x10] sm:$0xff]
  %1047 = vrot.lane.b32.xlu0 %v1045, 127
  %v1048 = vpop.permute.xlu0 %1047
  %v1050 = vadd.f32 %v1044, %v1048
  %v1051 = vld [vmem:[#allocation2 + $0x20] sm:$0xff]
  %1053 = vrot.lane.b32.xlu0 %v1051, 126
  %v1054 = vpop.permute.xlu0 %1053
  %v1056 = vadd.f32 %v1050, %v1054
  %v1057 = vld [vmem:[#allocation2 + $0x30] sm:$0xff]
  %1059 = vrot.lane.b32.xlu0 %v1057, 112
  %v1060 = vpop.permute.xlu0 %1059
  %v1062 = vadd.f32 %v1056, %v1060
  %v1063 = vld [vmem:[#allocation2 + $0x40] sm:$0xff]
  %1065 = vrot.lane.b32.xlu0 %v1063, 111
  %v1066 = vpop.permute.xlu0 %1065
  %v1068 = vadd.f32 %v1062, %v1066
  %v1069 = vld [vmem:[#allocation2 + $0x50] sm:$0xff]
  %1071 = vrot.lane.b32.xlu0 %v1069, 110
  %v1072 = vpop.permute.xlu0 %1071
  %v1074 = vadd.f32 %v1068, %v1072
  %v1075 = vld [vmem:[#allocation2 + $0x60] sm:$0xff]
  %1077 = vrot.lane.b32.xlu0 %v1075, 96
  %v1078 = vpop.permute.xlu0 %1077
  %v1080 = vadd.f32 %v1074, %v1078
  %v1081 = vld [vmem:[#allocation2 + $0x70] sm:$0xff]
  %1083 = vrot.lane.b32.xlu0 %v1081, 95
  %v1084 = vpop.permute.xlu0 %1083
  %v1086 = vadd.f32 %v1080, %v1084
  %v1087 = vld [vmem:[#allocation2 + $0x80] sm:$0xff]
  %1089 = vrot.lane.b32.xlu0 %v1087, 94
  %v1090 = vpop.permute.xlu0 %1089
  %v1092 = vadd.f32 %v1086, %v1090
  %v1093 = vadd.f32 %v1092, %v236
  %v1094 = vld [vmem:[#allocation2 + $0x68] sm:$0xff]
  %1096 = vrot.lane.b32.xlu0 %v1094, 96
  %v1097 = vpop.permute.xlu0 %1096
  %v1099 = vadd.f32 %v1074, %v1097
  %v1100 = vld [vmem:[#allocation2 + $0x78] sm:$0xff]
  %1102 = vrot.lane.b32.xlu0 %v1100, 95
  %v1103 = vpop.permute.xlu0 %1102
  %v1105 = vadd.f32 %v1099, %v1103
  %v1106 = vld [vmem:[#allocation2 + $0x88] sm:$0xff]
  %1108 = vrot.lane.b32.xlu0 %v1106, 94
  %v1109 = vpop.permute.xlu0 %1108
  %v1111 = vadd.f32 %v1105, %v1109
  %v1112 = vadd.f32 %v1111, %v236
  %v1113 = vld [vmem:[#allocation2 + $0x38] sm:$0xff]
  %1115 = vrot.lane.b32.xlu0 %v1113, 112
  %v1116 = vpop.permute.xlu0 %1115
  %v1118 = vadd.f32 %v1056, %v1116
  %v1119 = vld [vmem:[#allocation2 + $0x48] sm:$0xff]
  %1121 = vrot.lane.b32.xlu0 %v1119, 111
  %v1122 = vpop.permute.xlu0 %1121
  %v1124 = vadd.f32 %v1118, %v1122
  %v1125 = vld [vmem:[#allocation2 + $0x58] sm:$0xff]
  %1127 = vrot.lane.b32.xlu0 %v1125, 110
  %v1128 = vpop.permute.xlu0 %1127
  %v1130 = vadd.f32 %v1124, %v1128
  %v1131 = vadd.f32 %v1130, %v1097
  %v1132 = vadd.f32 %v1131, %v1103
  %v1133 = vadd.f32 %v1132, %v1109
  %v1134 = vadd.f32 %v1133, %v236
  %v1135 = vld [vmem:[#allocation2 + $0x8] sm:$0xff]
  %v1136 = vld [vmem:[#allocation2 + $0x18] sm:$0xff]
  %1138 = vrot.lane.b32.xlu0 %v1136, 127
  %v1139 = vpop.permute.xlu0 %1138
  %v1141 = vadd.f32 %v1135, %v1139
  %v1142 = vld [vmem:[#allocation2 + $0x28] sm:$0xff]
  %1144 = vrot.lane.b32.xlu0 %v1142, 126
  %v1145 = vpop.permute.xlu0 %1144
  %v1147 = vadd.f32 %v1141, %v1145
  %v1148 = vadd.f32 %v1147, %v1116
  %v1149 = vadd.f32 %v1148, %v1122
  %v1150 = vadd.f32 %v1149, %v1128
  %v1151 = vadd.f32 %v1150, %v1097
  %v1152 = vadd.f32 %v1151, %v1103
  %v1153 = vadd.f32 %v1152, %v1109
  %v1154 = vadd.f32 %v1153, %v236
  %v1155 = vmul.f32 %v1093, 0.0
  %1157 = vrot.lane.b32.xlu0 %v1155, 112
  %v1158 = vpop.permute.xlu0 %1157
  %v1160 = vadd.f32 %v1093, %v1158
  %1161 = vst.msk [vmem:[#allocation3] sm:$0xff] %vm306, %v1160
  %v1162 = vmul.f32 %v1093, 0.75
  %v1163 = vmul.f32 %v1093, 0.25
  %1165 = vrot.lane.b32.xlu0 %v1163, 112
  %v1166 = vpop.permute.xlu0 %1165
  %v1168 = vadd.f32 %v1162, %v1166
  %1169 = vst.msk [vmem:[#allocation3 + $0x8] sm:$0xff] %vm306, %v1168
  %1171 = vrot.lane.b32.xlu0 %v1162, 112
  %v1172 = vpop.permute.xlu0 %1171
  %v1174 = vadd.f32 %v1163, %v1172
  %1175 = vst.msk [vmem:[#allocation3 + $0x10] sm:$0xff] %vm306, %v1174
  %1177 = vrot.lane.b32.xlu0 %v1168, 112
  %v1178 = vpop.permute.xlu0 %1177
  %1180 = vst.msk [vmem:[#allocation3 + $0x18] sm:$0xff] %vm306, %v1178
  %1182 = vrot.lane.b32.xlu0 %v1174, 112
  %v1183 = vpop.permute.xlu0 %1182
  %1185 = vst.msk [vmem:[#allocation3 + $0x20] sm:$0xff] %vm306, %v1183
  %1186 = vrot.lane.b32.xlu0 %v1168, 96
  %v1187 = vpop.permute.xlu0 %1186
  %1189 = vst.msk [vmem:[#allocation3 + $0x28] sm:$0xff] %vm306, %v1187
  %1190 = vrot.lane.b32.xlu0 %v1174, 96
  %v1191 = vpop.permute.xlu0 %1190
  %1193 = vst.msk [vmem:[#allocation3 + $0x30] sm:$0xff] %vm306, %v1191
  %1194 = vrot.lane.b32.xlu0 %v1168, 80
  %v1195 = vpop.permute.xlu0 %1194
  %1197 = vst.msk [vmem:[#allocation3 + $0x38] sm:$0xff] %vm306, %v1195
  %1198 = vrot.lane.b32.xlu0 %v1174, 80
  %v1199 = vpop.permute.xlu0 %1198
  %1201 = vst.msk [vmem:[#allocation3 + $0x40] sm:$0xff] %vm306, %v1199
  %1202 = vrot.lane.b32.xlu0 %v1168, 64
  %v1203 = vpop.permute.xlu0 %1202
  %1205 = vst.msk [vmem:[#allocation3 + $0x48] sm:$0xff] %vm306, %v1203
  %1206 = vrot.lane.b32.xlu0 %v1174, 64
  %v1207 = vpop.permute.xlu0 %1206
  %1209 = vst.msk [vmem:[#allocation3 + $0x50] sm:$0xff] %vm306, %v1207
  %v1210 = vmul.f32 %v1112, 0.25
  %1212 = vrot.lane.b32.xlu0 %v1210, 112
  %v1213 = vpop.permute.xlu0 %1212
  %v1215 = vadd.f32 %v1162, %v1213
  %1217 = vrot.lane.b32.xlu0 %v1215, 48
  %v1218 = vpop.permute.xlu0 %1217
  %1220 = vst.msk [vmem:[#allocation3 + $0x58] sm:$0xff] %vm306, %v1218
  %v1221 = vmul.f32 %v1112, 0.75
  %1223 = vrot.lane.b32.xlu0 %v1221, 112
  %v1224 = vpop.permute.xlu0 %1223
  %v1226 = vadd.f32 %v1163, %v1224
  %1228 = vrot.lane.b32.xlu0 %v1226, 48
  %v1229 = vpop.permute.xlu0 %1228
  %1231 = vst.msk [vmem:[#allocation3 + $0x60] sm:$0xff] %vm306, %v1229
  %v1232 = vmul.f32 %v1134, 0.25
  %1234 = vrot.lane.b32.xlu0 %v1232, 112
  %v1235 = vpop.permute.xlu0 %1234
  %v1237 = vadd.f32 %v1221, %v1235
  %1239 = vrot.lane.b32.xlu0 %v1237, 32
  %v1240 = vpop.permute.xlu0 %1239
  %1242 = vst.msk [vmem:[#allocation3 + $0x68] sm:$0xff] %vm306, %v1240
  %v1243 = vmul.f32 %v1134, 0.75
  %1245 = vrot.lane.b32.xlu0 %v1243, 112
  %v1246 = vpop.permute.xlu0 %1245
  %v1248 = vadd.f32 %v1210, %v1246
  %1250 = vrot.lane.b32.xlu0 %v1248, 32
  %v1251 = vpop.permute.xlu0 %1250
  %1253 = vst.msk [vmem:[#allocation3 + $0x70] sm:$0xff] %vm306, %v1251
  %v1254 = vmul.f32 %v1154, 0.25
  %1256 = vrot.lane.b32.xlu0 %v1254, 112
  %v1257 = vpop.permute.xlu0 %1256
  %v1259 = vadd.f32 %v1243, %v1257
  %1261 = vrot.lane.b32.xlu0 %v1259, 16
  %v1262 = vpop.permute.xlu0 %1261
  %1264 = vst.msk [vmem:[#allocation3 + $0x78] sm:$0xff] %vm306, %v1262
  %v1265 = vmul.f32 %v1154, 0.75
  %1267 = vrot.lane.b32.xlu0 %v1265, 112
  %v1268 = vpop.permute.xlu0 %1267
  %v1270 = vadd.f32 %v1232, %v1268
  %1272 = vrot.lane.b32.xlu0 %v1270, 16
  %v1273 = vpop.permute.xlu0 %1272
  %1275 = vst.msk [vmem:[#allocation3 + $0x80] sm:$0xff] %vm306, %v1273
  %v1276 = vadd.f32 %v1265, %v1257
  %1277 = vst.msk [vmem:[#allocation3 + $0x88] sm:$0xff] %vm306, %v1276
  %v1278 = vadd.f32 %v1254, %v1268
  %1279 = vst.msk [vmem:[#allocation3 + $0x90] sm:$0xff] %vm306, %v1278
  %1281 = vrot.lane.b32.xlu0 %v1276, 112
  %v1282 = vpop.permute.xlu0 %1281
  %1284 = vst.msk [vmem:[#allocation3 + $0x98] sm:$0xff] %vm306, %v1282
  %1286 = vrot.lane.b32.xlu0 %v1278, 112
  %v1287 = vpop.permute.xlu0 %1286
  %1289 = vst.msk [vmem:[#allocation3 + $0xa0] sm:$0xff] %vm306, %v1287
  %1290 = vrot.lane.b32.xlu0 %v1276, 96
  %v1291 = vpop.permute.xlu0 %1290
  %1293 = vst.msk [vmem:[#allocation3 + $0xa8] sm:$0xff] %vm306, %v1291
  %1294 = vrot.lane.b32.xlu0 %v1278, 96
  %v1295 = vpop.permute.xlu0 %1294
  %1297 = vst.msk [vmem:[#allocation3 + $0xb0] sm:$0xff] %vm306, %v1295
  %1298 = vrot.lane.b32.xlu0 %v1276, 80
  %v1299 = vpop.permute.xlu0 %1298
  %1301 = vst.msk [vmem:[#allocation3 + $0xb8] sm:$0xff] %vm306, %v1299
  %1302 = vrot.lane.b32.xlu0 %v1278, 80
  %v1303 = vpop.permute.xlu0 %1302
  %1305 = vst.msk [vmem:[#allocation3 + $0xc0] sm:$0xff] %vm306, %v1303
  %1306 = vrot.lane.b32.xlu0 %v1276, 64
  %v1307 = vpop.permute.xlu0 %1306
  %1309 = vst.msk [vmem:[#allocation3 + $0xc8] sm:$0xff] %vm306, %v1307
  %1310 = vrot.lane.b32.xlu0 %v1278, 64
  %v1311 = vpop.permute.xlu0 %1310
  %1313 = vst.msk [vmem:[#allocation3 + $0xd0] sm:$0xff] %vm306, %v1311
  %v1314 = vadd.f32 %v1265, %v1254
  %1316 = vrot.lane.b32.xlu0 %v1314, 48
  %v1317 = vpop.permute.xlu0 %1316
  %1319 = vst.msk [vmem:[#allocation3 + $0xd8] sm:$0xff] %vm306, %v1317
  %v1320 = vld [vmem:[#allocation3] sm:$0xff]
  %v1321 = vld [vmem:[#allocation3 + $0x8] sm:$0xff]
  %v1322 = vld [vmem:[#allocation3 + $0x10] sm:$0xff]
  %v1323 = vld [vmem:[#allocation3 + $0x18] sm:$0xff]
  %v1324 = vld [vmem:[#allocation3 + $0x20] sm:$0xff]
  %v1325 = vld [vmem:[#allocation3 + $0x28] sm:$0xff]
  %v1326 = vld [vmem:[#allocation3 + $0x30] sm:$0xff]
  %v1327 = vld [vmem:[#allocation3 + $0x38] sm:$0xff]
  %v1328 = vld [vmem:[#allocation3 + $0x40] sm:$0xff]
  %v1329 = vld [vmem:[#allocation3 + $0x48] sm:$0xff]
  %v1330 = vld [vmem:[#allocation3 + $0x50] sm:$0xff]
  %v1331 = vld [vmem:[#allocation3 + $0x58] sm:$0xff]
  %v1332 = vld [vmem:[#allocation3 + $0x60] sm:$0xff]
  %v1333 = vld [vmem:[#allocation3 + $0x68] sm:$0xff]
  %v1334 = vld [vmem:[#allocation3 + $0x70] sm:$0xff]
  %v1335 = vld [vmem:[#allocation3 + $0x78] sm:$0xff]
  %v1336 = vld [vmem:[#allocation3 + $0x80] sm:$0xff]
  %v1337 = vld [vmem:[#allocation3 + $0x88] sm:$0xff]
  %v1338 = vld [vmem:[#allocation3 + $0x90] sm:$0xff]
  %v1339 = vld [vmem:[#allocation3 + $0x98] sm:$0xff]
  %v1340 = vld [vmem:[#allocation3 + $0xa0] sm:$0xff]
  %v1341 = vld [vmem:[#allocation3 + $0xa8] sm:$0xff]
  %v1342 = vld [vmem:[#allocation3 + $0xb0] sm:$0xff]
  %v1343 = vld [vmem:[#allocation3 + $0xb8] sm:$0xff]
  %v1344 = vld [vmem:[#allocation3 + $0xc0] sm:$0xff]
  %v1345 = vld [vmem:[#allocation3 + $0xc8] sm:$0xff]
  %v1346 = vld [vmem:[#allocation3 + $0xd0] sm:$0xff]
  %v1347 = vld [vmem:[#allocation3 + $0xd8] sm:$0xff]
  %v1349 = vsel %vm306, %v1320, 0
  %v1352 = vsel %vm306, %v1321, 0
  %v1355 = vsel %vm306, %v1322, 0
  %v1358 = vsel %vm306, %v1323, 0
  %v1361 = vsel %vm306, %v1324, 0
  %v1364 = vsel %vm306, %v1325, 0
  %v1367 = vsel %vm306, %v1326, 0
  %v1370 = vsel %vm306, %v1327, 0
  %v1373 = vsel %vm306, %v1328, 0
  %v1376 = vsel %vm306, %v1329, 0
  %v1379 = vsel %vm306, %v1330, 0
  %v1382 = vsel %vm306, %v1331, 0
  %v1385 = vsel %vm306, %v1332, 0
  %v1388 = vsel %vm306, %v1333, 0
  %v1391 = vsel %vm306, %v1334, 0
  %v1394 = vsel %vm306, %v1335, 0
  %v1397 = vsel %vm306, %v1336, 0
  %v1400 = vsel %vm306, %v1337, 0
  %v1403 = vsel %vm306, %v1338, 0
  %v1406 = vsel %vm306, %v1339, 0
  %v1409 = vsel %vm306, %v1340, 0
  %v1412 = vsel %vm306, %v1341, 0
  %v1415 = vsel %vm306, %v1342, 0
  %v1418 = vsel %vm306, %v1343, 0
  %v1421 = vsel %vm306, %v1344, 0
  %v1424 = vsel %vm306, %v1345, 0
  %v1427 = vsel %vm306, %v1346, 0
  %v1430 = vsel %vm306, %v1347, 0
  %1432 = vmatpush.msra.mxu0 0.0
  %1433 = vmatpush.msra.mxu0 0.0
  %1434 = vmatpush.msra.mxu0 0.0
  %1435 = vmatpush.msra.mxu0 0.0
  %1436 = vmatpush.msra.mxu0 0.0
  %1437 = vmatpush.msra.mxu0 0.0
  %1438 = vmatpush.msra.mxu0 0.0
  %1439 = vmatpush.msra.mxu0 0.0
  %1440 = vmatpush.msra.mxu0 0.0
  %1441 = vmatpush.msra.mxu0 0.0
  %1442 = vmatpush.msra.mxu0 0.0
  %1443 = vmatpush.msra.mxu0 0.0
  %1444 = vmatpush.msra.mxu0 0.0
  %1445 = vmatpush.msra.mxu0 0.0
  %1446 = vmatpush.msra.mxu0 %v580
  %1447 = vmatpush.msra.mxu0 %v38
  %1448 = vmatmul.f32.gmra.mxu0 %v1349
  %v1449 = vpop.f32.mrf.mxu0
  %v1450 = vadd.f32 0.0, %v1449
  %1451 = vmatmul.f32.gmra.mxu0 %v1352
  %v1452 = vpop.f32.mrf.mxu0
  %v1453 = vadd.f32 0.0, %v1452
  %1454 = vmatmul.f32.gmra.mxu0 %v1355
  %v1455 = vpop.f32.mrf.mxu0
  %v1456 = vadd.f32 0.0, %v1455
  %1457 = vmatmul.f32.gmra.mxu0 %v1358
  %v1458 = vpop.f32.mrf.mxu0
  %v1459 = vadd.f32 0.0, %v1458
  %1460 = vmatmul.f32.gmra.mxu0 %v1361
  %v1461 = vpop.f32.mrf.mxu0
  %v1462 = vadd.f32 0.0, %v1461
  %1463 = vmatmul.f32.gmra.mxu0 %v1364
  %v1464 = vpop.f32.mrf.mxu0
  %v1465 = vadd.f32 0.0, %v1464
  %1466 = vmatmul.f32.gmra.mxu0 %v1367
  %v1467 = vpop.f32.mrf.mxu0
  %v1468 = vadd.f32 0.0, %v1467
  %1469 = vmatmul.f32.gmra.mxu0 %v1370
  %v1470 = vpop.f32.mrf.mxu0
  %v1471 = vadd.f32 0.0, %v1470
  %1472 = vmatmul.f32.gmra.mxu0 %v1373
  %v1473 = vpop.f32.mrf.mxu0
  %v1474 = vadd.f32 0.0, %v1473
  %1475 = vmatmul.f32.gmra.mxu0 %v1376
  %v1476 = vpop.f32.mrf.mxu0
  %v1477 = vadd.f32 0.0, %v1476
  %1478 = vmatmul.f32.gmra.mxu0 %v1379
  %v1479 = vpop.f32.mrf.mxu0
  %v1480 = vadd.f32 0.0, %v1479
  %1481 = vmatmul.f32.gmra.mxu0 %v1382
  %v1482 = vpop.f32.mrf.mxu0
  %v1483 = vadd.f32 0.0, %v1482
  %1484 = vmatmul.f32.gmra.mxu0 %v1385
  %v1485 = vpop.f32.mrf.mxu0
  %v1486 = vadd.f32 0.0, %v1485
  %1487 = vmatmul.f32.gmra.mxu0 %v1388
  %v1488 = vpop.f32.mrf.mxu0
  %v1489 = vadd.f32 0.0, %v1488
  %1490 = vmatmul.f32.gmra.mxu0 %v1391
  %v1491 = vpop.f32.mrf.mxu0
  %v1492 = vadd.f32 0.0, %v1491
  %1493 = vmatmul.f32.gmra.mxu0 %v1394
  %v1494 = vpop.f32.mrf.mxu0
  %v1495 = vadd.f32 0.0, %v1494
  %1496 = vmatmul.f32.gmra.mxu0 %v1397
  %v1497 = vpop.f32.mrf.mxu0
  %v1498 = vadd.f32 0.0, %v1497
  %1499 = vmatmul.f32.gmra.mxu0 %v1400
  %v1500 = vpop.f32.mrf.mxu0
  %v1501 = vadd.f32 0.0, %v1500
  %1502 = vmatmul.f32.gmra.mxu0 %v1403
  %v1503 = vpop.f32.mrf.mxu0
  %v1504 = vadd.f32 0.0, %v1503
  %1505 = vmatmul.f32.gmra.mxu0 %v1406
  %v1506 = vpop.f32.mrf.mxu0
  %v1507 = vadd.f32 0.0, %v1506
  %1508 = vmatmul.f32.gmra.mxu0 %v1409
  %v1509 = vpop.f32.mrf.mxu0
  %v1510 = vadd.f32 0.0, %v1509
  %1511 = vmatmul.f32.gmra.mxu0 %v1412
  %v1512 = vpop.f32.mrf.mxu0
  %v1513 = vadd.f32 0.0, %v1512
  %1514 = vmatmul.f32.gmra.mxu0 %v1415
  %v1515 = vpop.f32.mrf.mxu0
  %v1516 = vadd.f32 0.0, %v1515
  %1517 = vmatmul.f32.gmra.mxu0 %v1418
  %v1518 = vpop.f32.mrf.mxu0
  %v1519 = vadd.f32 0.0, %v1518
  %1520 = vmatmul.f32.gmra.mxu0 %v1421
  %v1521 = vpop.f32.mrf.mxu0
  %v1522 = vadd.f32 0.0, %v1521
  %1523 = vmatmul.f32.gmra.mxu0 %v1424
  %v1524 = vpop.f32.mrf.mxu0
  %v1525 = vadd.f32 0.0, %v1524
  %1526 = vmatmul.f32.gmra.mxu0 %v1427
  %v1527 = vpop.f32.mrf.mxu0
  %v1528 = vadd.f32 0.0, %v1527
  %1529 = vmatmul.f32.gmra.mxu0 %v1430
  %v1530 = vpop.f32.mrf.mxu0
  %v1531 = vadd.f32 0.0, %v1530
  %1532 = vdwg.mxu0
  %1533 = vst.msk [vmem:[#allocation4] sm:$0xff] %vm683, %v1450
  %1535 = vrot.lane.b32.xlu0 %v1453, 28
  %v1536 = vpop.permute.xlu0 %1535
  %1538 = vst.msk [vmem:[#allocation4] sm:$0xff] %vm689, %v1536
  %1540 = vrot.lane.b32.xlu0 %v1456, 56
  %v1541 = vpop.permute.xlu0 %1540
  %1543 = vst.msk [vmem:[#allocation4] sm:$0xff] %vm695, %v1541
  %1545 = vrot.lane.b32.xlu0 %v1459, 84
  %v1546 = vpop.permute.xlu0 %1545
  %1548 = vst.msk [vmem:[#allocation4] sm:$0xff] %vm701, %v1546
  %1550 = vrot.lane.b32.xlu0 %v1462, 112
  %v1551 = vpop.permute.xlu0 %1550
  %1553 = vst.msk [vmem:[#allocation4] sm:$0xff] %vm707, %v1551
  %1554 = vst.msk [vmem:[#allocation4 + $0x8] sm:$0xff] %vm709, %v1551
  %1556 = vrot.lane.b32.xlu0 %v1465, 12
  %v1557 = vpop.permute.xlu0 %1556
  %1559 = vst.msk [vmem:[#allocation4 + $0x8] sm:$0xff] %vm715, %v1557
  %1561 = vrot.lane.b32.xlu0 %v1468, 40
  %v1562 = vpop.permute.xlu0 %1561
  %1564 = vst.msk [vmem:[#allocation4 + $0x8] sm:$0xff] %vm721, %v1562
  %1566 = vrot.lane.b32.xlu0 %v1471, 68
  %v1567 = vpop.permute.xlu0 %1566
  %1569 = vst.msk [vmem:[#allocation4 + $0x8] sm:$0xff] %vm727, %v1567
  %1571 = vrot.lane.b32.xlu0 %v1474, 96
  %v1572 = vpop.permute.xlu0 %1571
  %1574 = vst.msk [vmem:[#allocation4 + $0x8] sm:$0xff] %vm733, %v1572
  %1576 = vrot.lane.b32.xlu0 %v1477, 124
  %v1577 = vpop.permute.xlu0 %1576
  %1579 = vst.msk [vmem:[#allocation4 + $0x8] sm:$0xff] %vm739, %v1577
  %1580 = vst.msk [vmem:[#allocation4 + $0x10] sm:$0xff] %vm741, %v1577
  %1582 = vrot.lane.b32.xlu0 %v1480, 24
  %v1583 = vpop.permute.xlu0 %1582
  %1585 = vst.msk [vmem:[#allocation4 + $0x10] sm:$0xff] %vm747, %v1583
  %1587 = vrot.lane.b32.xlu0 %v1483, 52
  %v1588 = vpop.permute.xlu0 %1587
  %1590 = vst.msk [vmem:[#allocation4 + $0x10] sm:$0xff] %vm753, %v1588
  %1592 = vrot.lane.b32.xlu0 %v1486, 80
  %v1593 = vpop.permute.xlu0 %1592
  %1595 = vst.msk [vmem:[#allocation4 + $0x10] sm:$0xff] %vm759, %v1593
  %1597 = vrot.lane.b32.xlu0 %v1489, 108
  %v1598 = vpop.permute.xlu0 %1597
  %1600 = vst.msk [vmem:[#allocation4 + $0x10] sm:$0xff] %vm765, %v1598
  %1601 = vst.msk [vmem:[#allocation4 + $0x18] sm:$0xff] %vm767, %v1598
  %1603 = vrot.lane.b32.xlu0 %v1492, 8
  %v1604 = vpop.permute.xlu0 %1603
  %1606 = vst.msk [vmem:[#allocation4 + $0x18] sm:$0xff] %vm773, %v1604
  %1608 = vrot.lane.b32.xlu0 %v1495, 36
  %v1609 = vpop.permute.xlu0 %1608
  %1611 = vst.msk [vmem:[#allocation4 + $0x18] sm:$0xff] %vm779, %v1609
  %1613 = vrot.lane.b32.xlu0 %v1498, 64
  %v1614 = vpop.permute.xlu0 %1613
  %1616 = vst.msk [vmem:[#allocation4 + $0x18] sm:$0xff] %vm785, %v1614
  %1618 = vrot.lane.b32.xlu0 %v1501, 92
  %v1619 = vpop.permute.xlu0 %1618
  %1621 = vst.msk [vmem:[#allocation4 + $0x18] sm:$0xff] %vm791, %v1619
  %1623 = vrot.lane.b32.xlu0 %v1504, 120
  %v1624 = vpop.permute.xlu0 %1623
  %1626 = vst.msk [vmem:[#allocation4 + $0x18] sm:$0xff] %vm797, %v1624
  %1627 = vst.msk [vmem:[#allocation4 + $0x20] sm:$0xff] %vm799, %v1624
  %1629 = vrot.lane.b32.xlu0 %v1507, 20
  %v1630 = vpop.permute.xlu0 %1629
  %1632 = vst.msk [vmem:[#allocation4 + $0x20] sm:$0xff] %vm805, %v1630
  %1634 = vrot.lane.b32.xlu0 %v1510, 48
  %v1635 = vpop.permute.xlu0 %1634
  %1637 = vst.msk [vmem:[#allocation4 + $0x20] sm:$0xff] %vm811, %v1635
  %1639 = vrot.lane.b32.xlu0 %v1513, 76
  %v1640 = vpop.permute.xlu0 %1639
  %1642 = vst.msk [vmem:[#allocation4 + $0x20] sm:$0xff] %vm817, %v1640
  %1644 = vrot.lane.b32.xlu0 %v1516, 104
  %v1645 = vpop.permute.xlu0 %1644
  %1647 = vst.msk [vmem:[#allocation4 + $0x20] sm:$0xff] %vm823, %v1645
  %1648 = vst.msk [vmem:[#allocation4 + $0x28] sm:$0xff] %vm45, %v1645
  %1650 = vrot.lane.b32.xlu0 %v1519, 4
  %v1651 = vpop.permute.xlu0 %1650
  %1653 = vst.msk [vmem:[#allocation4 + $0x28] sm:$0xff] %vm830, %v1651
  %1655 = vrot.lane.b32.xlu0 %v1522, 32
  %v1656 = vpop.permute.xlu0 %1655
  %1658 = vst.msk [vmem:[#allocation4 + $0x28] sm:$0xff] %vm836, %v1656
  %1660 = vrot.lane.b32.xlu0 %v1525, 60
  %v1661 = vpop.permute.xlu0 %1660
  %1663 = vst.msk [vmem:[#allocation4 + $0x28] sm:$0xff] %vm842, %v1661
  %1665 = vrot.lane.b32.xlu0 %v1528, 88
  %v1666 = vpop.permute.xlu0 %1665
  %1668 = vst.msk [vmem:[#allocation4 + $0x28] sm:$0xff] %vm848, %v1666
  %1670 = vrot.lane.b32.xlu0 %v1531, 116
  %v1671 = vpop.permute.xlu0 %1670
  %1673 = vst.msk [vmem:[#allocation4 + $0x28] sm:$0xff] %vm854, %v1671
  %1674 = vst.msk [vmem:[#allocation4 + $0x30] sm:$0xff] %vm856, %v1671
  %s1675 = scalar_lea.vmem %s2, 56
  %v1676 = vld [vmem:[%s1675] sm:$0xff]
  %v1677 = vld [vmem:[%s1675 + $0x8] sm:$0xff]
  %v1678 = vld [vmem:[%s1675 + $0x10] sm:$0xff]
  %v1679 = vld [vmem:[%s1675 + $0x18] sm:$0xff]
  %v1680 = vld [vmem:[%s1675 + $0x20] sm:$0xff]
  %v1681 = vld [vmem:[%s1675 + $0x28] sm:$0xff]
  %v1682 = vld [vmem:[%s1675 + $0x30] sm:$0xff]
  %v1683 = vmul.f32 %v865, %v1676
  %v1684 = vmul.f32 %v865, %v1677
  %v1685 = vmul.f32 %v865, %v1678
  %v1686 = vmul.f32 %v865, %v1679
  %v1687 = vmul.f32 %v865, %v1680
  %v1688 = vmul.f32 %v865, %v1681
  %v1689 = vmul.f32 %v865, %v1682
  %v1690 = vld [vmem:[#allocation4] sm:$0xff]
  %v1691 = vld [vmem:[#allocation4 + $0x8] sm:$0xff]
  %v1692 = vld [vmem:[#allocation4 + $0x10] sm:$0xff]
  %v1693 = vld [vmem:[#allocation4 + $0x18] sm:$0xff]
  %v1694 = vld [vmem:[#allocation4 + $0x20] sm:$0xff]
  %v1695 = vld [vmem:[#allocation4 + $0x28] sm:$0xff]
  %v1696 = vld [vmem:[#allocation4 + $0x30] sm:$0xff]
  %v1697 = vadd.f32 %v1683, %v1690
  %v1698 = vadd.f32 %v1684, %v1691
  %v1699 = vadd.f32 %v1685, %v1692
  %v1700 = vadd.f32 %v1686, %v1693
  %v1701 = vadd.f32 %v1687, %v1694
  %v1702 = vadd.f32 %v1688, %v1695
  %v1703 = vadd.f32 %v1689, %v1696
  %v1704 = vmax.f32 %v1697, 0.0
  %v1705 = vmax.f32 %v1698, 0.0
  %v1706 = vmax.f32 %v1699, 0.0
  %v1707 = vmax.f32 %v1700, 0.0
  %v1708 = vmax.f32 %v1701, 0.0
  %v1709 = vmax.f32 %v1702, 0.0
  %v1710 = vmax.f32 %v1703, 0.0
  %s1711 = scalar_lea.vmem %s6, 56
  %1712 = vst [vmem:[%s1711] sm:$0xff] %v1704
  %1713 = vst [vmem:[%s1711 + $0x8] sm:$0xff] %v1705
  %1714 = vst [vmem:[%s1711 + $0x10] sm:$0xff] %v1706
  %1715 = vst [vmem:[%s1711 + $0x18] sm:$0xff] %v1707
  %1716 = vst [vmem:[%s1711 + $0x20] sm:$0xff] %v1708
  %1717 = vst [vmem:[%s1711 + $0x28] sm:$0xff] %v1709
  %1718 = vst.msk [vmem:[%s1711 + $0x30] sm:$0xff] %vm856, %v1710
  %v1719 = vadd.f32 %v1704, %v1705
  %v1720 = vadd.f32 %v1719, %v1706
  %v1721 = vadd.f32 %v1720, %v1707
  %v1722 = vadd.f32 %v1721, %v1708
  %v1723 = vadd.f32 %v1722, %v1709
  %v1724 = vsel %vm856, %v1710, 0.0
  %v1725 = vadd.f32 %v1723, %v1724
  %1726 = vadd.xlane.f32.xlu0 %v1725
  %v1727 = vpop.xlane.xlu0 %1726
  %v1728 = vadd.f32 %v910, %v1727
  %v1729 = vmul.f32 %v1704, %v1704
  %v1730 = vmul.f32 %v1705, %v1705
  %v1731 = vmul.f32 %v1706, %v1706
  %v1732 = vmul.f32 %v1707, %v1707
  %v1733 = vmul.f32 %v1708, %v1708
  %v1734 = vmul.f32 %v1709, %v1709
  %v1735 = vmul.f32 %v1710, %v1710
  %v1736 = vadd.f32 %v1729, %v1730
  %v1737 = vadd.f32 %v1736, %v1731
  %v1738 = vadd.f32 %v1737, %v1732
  %v1739 = vadd.f32 %v1738, %v1733
  %v1740 = vadd.f32 %v1739, %v1734
  %v1741 = vsel %vm856, %v1735, 0.0
  %v1742 = vadd.f32 %v1740, %v1741
  %1743 = vadd.xlane.f32.xlu0 %v1742
  %v1744 = vpop.xlane.xlu0 %1743
  %v1745 = vadd.f32 %v927, %v1744
  %vm1746 = vcmask 7168
  %1747 = vst.msk [vmem:[%s7] sm:$0xff] %vm1746, %v1728
  %1748 = vst.msk [vmem:[%s8] sm:$0xff] %vm1746, %v1745
  // Predicated region
  $region26: #{c_rb_forward.2} parent=0 // pred_check
    _
  $region27: #{c_rb_forward.2} parent=0 // pred_check_branch
    %1750 = sbr.rel (0) target = $region29
  $region28: #{c_rb_forward.2} parent=0 // pred_region
    _
  $region29: #{c_rb_forward.2} parent=0 // pred_fallthru
    _
  // Predicated region
  $region30: #{c_rb_forward.2} parent=0 // pred_check
    _
  $region31: #{c_rb_forward.2} parent=0 // pred_check_branch
    %1752 = sbr.rel (0) target = $region33
  $region32: #{c_rb_forward.2} parent=0 // pred_region
    _
  $region33: #{c_rb_forward.2} parent=0 // pred_fallthru
    _
  // Predicated region
  $region34: #{c_rb_forward.2} parent=0 // pred_check
    _
  $region35: #{c_rb_forward.2} parent=0 // pred_check_branch
    %1754 = sbr.rel (0) target = $region37
  $region36: #{c_rb_forward.2} parent=0 // pred_region
    _
  $region37: #{c_rb_forward.2} parent=0 // pred_fallthru
    _
  // Predicated region
  $region38: #{c_rb_forward.2} parent=0 // pred_check
    _
  $region39: #{c_rb_forward.2} parent=0 // pred_check_branch
    %1756 = sbr.rel (0) target = $region41
  $region40: #{c_rb_forward.2} parent=0 // pred_region
    _
  $region41: #{c_rb_forward.2} parent=0 // pred_fallthru
    _
  // Predicated region
  $region42: #{c_rb_forward.2} parent=0 // pred_check
    _
  $region43: #{c_rb_forward.2} parent=0 // pred_check_branch
    %1758 = sbr.rel (0) target = $region45
  $region44: #{c_rb_forward.2} parent=0 // pred_region
    _
  $region45: #{c_rb_forward.2} parent=0 // pred_fallthru
    _
  // Predicated region
  $region46: #{c_rb_forward.2} parent=0 // pred_check
    _
  $region47: #{c_rb_forward.2} parent=0 // pred_check_branch
    %1760 = sbr.rel (0) target = $region49
  $region48: #{c_rb_forward.2} parent=0 // pred_region
    _
  $region49: #{c_rb_forward.2} parent=0 // pred_fallthru
    _

</llo_original>
